<compile_context>
chip_gen: v7x
topology: tpu7x:2x2x1
jax: 0.10.0
libtpu: 0.0.40
codegen_flags: <defaults>
</compile_context>

<pallas_src>
import functools

import jax
import jax.numpy as jnp
from jax import lax
from jax.experimental import pallas as pl
from jax.experimental.pallas import tpu as pltpu

LN_EPS = 1e-5        # nn.LayerNorm default eps
L2_EPS = 1e-12       # F.normalize default eps
INV_SQRT2 = 0.7071067811865476


def _layernorm(x, w, b):
    mu = jnp.mean(x, axis=-1, keepdims=True)
    xc = x - mu
    var = jnp.mean(xc * xc, axis=-1, keepdims=True)
    return xc * lax.rsqrt(var + LN_EPS) * w + b


def _l2_normalize(x):
    # x / max(||x||, eps)  ==  x * rsqrt(max(||x||^2, eps^2))  (rsqrt -> EUP slot)
    ss = jnp.sum(x * x, axis=-1, keepdims=True)
    return x * lax.rsqrt(jnp.maximum(ss, L2_EPS * L2_EPS))


def _erf(x):
    # Abramowitz & Stegun 7.1.26 polynomial (max abs err ~1.5e-7); exp-only, lowers on
    # every TPU generation.
    a1, a2, a3, a4, a5 = (0.254829592, -0.284496736, 1.421413741,
                          -1.453152027, 1.061405429)
    p = 0.3275911
    ax = jnp.abs(x)
    t = 1.0 / (1.0 + p * ax)
    poly = ((((a5 * t + a4) * t + a3) * t + a2) * t + a1) * t
    r = 1.0 - poly * jnp.exp(-ax * ax)
    return jnp.where(x < 0, -r, r)


def _gelu_exact(x):
    return 0.5 * x * (1.0 + _erf(x * INV_SQRT2))


def _transformer_kernel(x_ref, small_ref, wq_ref, wkv_ref, wo_ref,
                        ff_w1_ref, ff_w2_ref, o_ref,
                        *, batch, seq, heads, head_dim, dim, attn_scale):
    layer = pl.program_id(1)
    f32 = jnp.float32
    inner = heads * head_dim
    rows = batch * seq

    # Layer 0: load the activations into the resident output block (residual state).
    @pl.when(layer == 0)
    def _():
        o_ref[...] = x_ref[...]

    x = o_ref[0]                                    # (B*S, D) running residual, f32

    # Packed small per-layer params: one (16, 2D) block.
    p = small_ref[0]
    ln_in_w, ln_in_b = p[0:1, 0:dim], p[1:2, 0:dim]
    ln_out_w, ln_out_b = p[2:3, 0:dim], p[3:4, 0:dim]
    ff1_w, ff1_b = p[4:5, 0:dim], p[5:6, 0:dim]
    ff2_w, ff2_b = p[6:7, :], p[7:8, :]             # width 2D
    q_scale = p[8:9, 0:head_dim]
    k_scale = p[9:10, 0:head_dim]

    # ---------------- SelfAttention ----------------
    xn = _layernorm(x, ln_in_w, ln_in_b)

    # bf16-streamed weights, cast up once in-kernel.
    wq = wq_ref[0].astype(f32)                      # (D, inner)
    wkv = wkv_ref[0].astype(f32)                    # (D, 2*inner)
    wo = wo_ref[0].astype(f32)                      # (inner, D)

    q = jnp.dot(xn, wq, preferred_element_type=f32)     # (B*S, inner)
    kv = jnp.dot(xn, wkv, preferred_element_type=f32)   # (B*S, 2*inner)

    q3 = q.reshape(batch, seq, inner)
    kv3 = kv.reshape(batch, seq, 2 * inner)

    attn = jnp.zeros((rows, dim), f32)
    for h in range(heads):                          # static unroll, heads is small
        lo = h * head_dim
        qh = _l2_normalize(q3[:, :, lo:lo + head_dim]) * q_scale
        kh = _l2_normalize(kv3[:, :, lo:lo + head_dim]) * k_scale
        vh = kv3[:, :, inner + lo:inner + lo + head_dim]
        s = jnp.einsum('bid,bkd->bik', qh, kh,
                       preferred_element_type=f32) * attn_scale      # (B, S, S)
        m = jnp.max(s, axis=-1, keepdims=True)
        e = jnp.exp(s - m)
        pn = e * pl.reciprocal(jnp.sum(e, axis=-1, keepdims=True), approx=False)
        pv = jnp.einsum('bik,bkd->bid', pn, vh,
                        preferred_element_type=f32)                  # (B, S, hd)
        # Fused output projection: accumulate this head's contribution directly.
        attn = attn + jnp.dot(pv.reshape(rows, head_dim),
                              wo[lo:lo + head_dim, :],
                              preferred_element_type=f32)
    attn = _layernorm(attn, ln_out_w, ln_out_b)
    x = x + attn                                    # residual

    # ---------------- FeedForward ----------------
    y = _layernorm(x, ff1_w, ff1_b)
    y = jnp.dot(y, ff_w1_ref[0].astype(f32), preferred_element_type=f32)   # (B*S, 2D)
    y = _gelu_exact(y)
    y = _layernorm(y, ff2_w, ff2_b)
    y = jnp.dot(y, ff_w2_ref[0].astype(f32), preferred_element_type=f32)   # (B*S, D)
    x = x + y                                       # residual

    o_ref[0] = x


def transformer_forward(x, params, *, heads, head_dim, attn_scale=8.0, num_splits=1):
    """x: (B, dim, H, W) f32 -> (B, dim, H, W) f32, matching Transformer.forward.

    num_splits: leading 'parallel' grid extent (set to 2 on v7x so both TensorCores
    work on independent batch halves; keep 1 on single-TC v5e/v6e so weights are
    fetched exactly once).
    """
    small, wq, wkv, wo, ff_w1, ff_w2 = params
    B, D, H, W = x.shape
    S = H * W
    depth = wq.shape[0]
    inner = heads * head_dim
    assert B % num_splits == 0
    rows = (B // num_splits) * S

    # b c h w -> (splits, rows, c): seq*batch on sublanes, feature dim on lanes.
    xs = jnp.transpose(x.reshape(B, D, S), (0, 2, 1)).reshape(num_splits, rows, D)

    kernel = functools.partial(_transformer_kernel, batch=B // num_splits, seq=S,
                               heads=heads, head_dim=head_dim, dim=D,
                               attn_scale=attn_scale)

    per_layer = lambda s, l: (l, 0, 0)
    per_split = lambda s, l: (s, 0, 0)

    out = pl.pallas_call(
        kernel,
        out_shape=jax.ShapeDtypeStruct((num_splits, rows, D), jnp.float32),
        grid_spec=pltpu.PrefetchScalarGridSpec(
            num_scalar_prefetch=0,
            grid=(num_splits, depth),                       # depth innermost
            in_specs=[
                pl.BlockSpec((1, rows, D), per_split),      # activations (once / split)
                pl.BlockSpec((1, 16, 2 * D), per_layer),    # packed LN / scale params
                pl.BlockSpec((1, D, inner), per_layer),     # to_q      (bf16)
                pl.BlockSpec((1, D, 2 * inner), per_layer), # to_kv     (bf16)
                pl.BlockSpec((1, inner, D), per_layer),     # to_out[0] (bf16)
                pl.BlockSpec((1, D, 2 * D), per_layer),     # ff Linear1 (bf16)
                pl.BlockSpec((1, 2 * D, D), per_layer),     # ff Linear2 (bf16)
            ],
            out_specs=pl.BlockSpec((1, rows, D), per_split),  # resident across depth
        ),
        compiler_params=pltpu.CompilerParams(
            dimension_semantics=("parallel", "arbitrary"),
            vmem_limit_bytes=64 * 1024 * 1024),
    )(xs, small, wq, wkv, wo, ff_w1, ff_w2)

    out = out.reshape(B, S, D)
    return jnp.transpose(out, (0, 2, 1)).reshape(B, D, H, W)   # b (h w) c -> b c h w


def make_params(key, dim, depth, heads, head_dim):
    """Big matmul weights stored bf16 (streamed weights); small params packed into one
    (depth, 16, 2*dim) f32 block:
      rows 0-1 attn-input LN (w,b) | 2-3 attn-output LN | 4-5 FF LN1 | 6-7 FF LN2 (2D)
      rows 8-9 q_scale / k_scale (head_dim) | rows 10-15 zero padding."""
    assert head_dim <= 2 * dim
    inner = heads * head_dim
    ks = jax.random.split(key, 12)

    def ln(k, d):
        kw, kb = jax.random.split(k)
        w = 1.0 + 0.1 * jax.random.normal(kw, (depth, d), jnp.float32)
        b = 0.1 * jax.random.normal(kb, (depth, d), jnp.float32)
        return w, b

    def lin(k, din, dout):
        w = jax.random.normal(k, (depth, din, dout), jnp.float32) / jnp.sqrt(din)
        return w.astype(jnp.bfloat16)               # bf16 storage / streaming

    ln_in_w, ln_in_b = ln(ks[0], dim)
    ln_out_w, ln_out_b = ln(ks[1], dim)
    ff1_w, ff1_b = ln(ks[2], dim)
    ff2_w, ff2_b = ln(ks[3], 2 * dim)
    q_scale = 1.0 + 0.1 * jax.random.normal(ks[4], (depth, head_dim), jnp.float32)
    k_scale = 1.0 + 0.1 * jax.random.normal(ks[5], (depth, head_dim), jnp.float32)

    W2 = 2 * dim
    pad = lambda a: jnp.pad(a, ((0, 0), (0, W2 - a.shape[-1])))
    rows = [pad(ln_in_w), pad(ln_in_b), pad(ln_out_w), pad(ln_out_b),
            pad(ff1_w), pad(ff1_b), ff2_w, ff2_b, pad(q_scale), pad(k_scale)]
    rows += [jnp.zeros((depth, W2), jnp.float32)] * 6
    small = jnp.stack(rows, axis=1)                 # (depth, 16, 2*dim)

    wq = lin(ks[6], dim, inner)
    wkv = lin(ks[7], dim, 2 * inner)
    wo = lin(ks[8], inner, dim)
    ff_w1 = lin(ks[9], dim, 2 * dim)
    ff_w2 = lin(ks[10], 2 * dim, dim)
    return (small, wq, wkv, wo, ff_w1, ff_w2)


def ref_forward(x, params, *, heads, head_dim, attn_scale=8.0):
    """Pure-JAX reference mirroring the PyTorch Transformer.forward exactly
    (uses the same bf16-stored weights, upcast to f32)."""
    small, wq, wkv, wo, ff_w1, ff_w2 = params
    B, D, H, W = x.shape
    S = H * W
    inner = heads * head_dim
    f32 = jnp.float32
    wq, wkv, wo = wq.astype(f32), wkv.astype(f32), wo.astype(f32)
    ff_w1, ff_w2 = ff_w1.astype(f32), ff_w2.astype(f32)

    ln_in_w, ln_in_b = small[:, 0, :D], small[:, 1, :D]
    ln_out_w, ln_out_b = small[:, 2, :D], small[:, 3, :D]
    ff1_w, ff1_b = small[:, 4, :D], small[:, 5, :D]
    ff2_w, ff2_b = small[:, 6, :], small[:, 7, :]
    q_scale, k_scale = small[:, 8, :head_dim], small[:, 9, :head_dim]

    xs = jnp.transpose(x.reshape(B, D, S), (0, 2, 1))          # (B, S, D)

    def layernorm(v, w, b):
        mu = jnp.mean(v, -1, keepdims=True)
        var = jnp.mean((v - mu) ** 2, -1, keepdims=True)
        return (v - mu) / jnp.sqrt(var + LN_EPS) * w + b

    def split_heads(t):
        return jnp.transpose(t.reshape(B, S, heads, head_dim), (0, 2, 1, 3))

    def l2n(t):
        n = jnp.sqrt(jnp.sum(t * t, axis=-1, keepdims=True))
        return t / jnp.maximum(n, L2_EPS)

    for l in range(wq.shape[0]):
        # SelfAttention
        xn = layernorm(xs, ln_in_w[l], ln_in_b[l])
        q = jnp.einsum('bsd,de->bse', xn, wq[l])
        kv = jnp.einsum('bsd,de->bse', xn, wkv[l])
        k, v = kv[..., :inner], kv[..., inner:]
        qh = l2n(split_heads(q)) * q_scale[l]
        kh = l2n(split_heads(k)) * k_scale[l]
        vh = split_heads(v)
        s = jnp.einsum('bhid,bhkd->bhik', qh, kh) * attn_scale
        p = jax.nn.softmax(s, axis=-1)
        o = jnp.einsum('bhik,bhkd->bhid', p, vh)
        o = jnp.transpose(o, (0, 2, 1, 3)).reshape(B, S, inner)
        o = jnp.einsum('bse,ed->bsd', o, wo[l])
        o = layernorm(o, ln_out_w[l], ln_out_b[l])
        xs = xs + o
        # FeedForward
        y = layernorm(xs, ff1_w[l], ff1_b[l])
        y = jnp.einsum('bsd,de->bse', y, ff_w1[l])
        y = jax.nn.gelu(y, approximate=False)                  # exact erf GELU
        y = layernorm(y, ff2_w[l], ff2_b[l])
        y = jnp.einsum('bse,ed->bsd', y, ff_w2[l])
        xs = xs + y

    return jnp.transpose(xs, (0, 2, 1)).reshape(B, D, H, W)


if __name__ == "__main__":
    B, dim, depth, heads, head_dim, H, W = 2, 128, 2, 2, 128, 8, 8

    key = jax.random.PRNGKey(0)
    kx, kp = jax.random.split(key)
    x = jax.random.normal(kx, (B, dim, H, W), jnp.float32)
    params = make_params(kp, dim, depth, heads, head_dim)

    out = transformer_forward(x, params, heads=heads, head_dim=head_dim)
    out = jax.block_until_ready(out)

    with jax.default_matmul_precision("float32"):
        ref = ref_forward(x, params, heads=heads, head_dim=head_dim)
        ref = jax.block_until_ready(ref)

    assert out.shape == (B, dim, H, W)
    err = jnp.max(jnp.abs(out - ref))
    assert jnp.allclose(out, ref, rtol=1e-4, atol=1e-4), f"max abs err {err}"

    # Also exercise the v7x-oriented 2-way parallel split path (correct, just
    # sequential on single-TC chips).
    out2 = jax.block_until_ready(
        transformer_forward(x, params, heads=heads, head_dim=head_dim, num_splits=2))
    err2 = jnp.max(jnp.abs(out2 - ref))
    assert jnp.allclose(out2, ref, rtol=1e-4, atol=1e-4), f"max abs err {err2}"

    print("KERNEL_OK")
</pallas_src>

<mosaic_0001>
module attributes {stable_mosaic.version = 11 : i64} {
  func.func @_transformer_kernel(%arg0: i32, %arg1: i32, %arg2: memref<1x128x128xf32, #tpu.memory_space<vmem>>, %arg3: memref<1x16x256xf32, #tpu.memory_space<vmem>>, %arg4: memref<1x128x256xbf16, #tpu.memory_space<vmem>>, %arg5: memref<1x128x512xbf16, #tpu.memory_space<vmem>>, %arg6: memref<1x256x128xbf16, #tpu.memory_space<vmem>>, %arg7: memref<1x128x256xbf16, #tpu.memory_space<vmem>>, %arg8: memref<1x256x128xbf16, #tpu.memory_space<vmem>>, %arg9: memref<1x128x128xf32, #tpu.memory_space<vmem>>) attributes {dimension_semantics = [#tpu.dimension_semantics<parallel>, #tpu.dimension_semantics<arbitrary>], iteration_bounds = array<i64: 1, 2>, scalar_prefetch = 0 : i64, scratch_operands = 0 : i64, tpu.core_type = #tpu.core_type<tc>, window_params = [{transform_indices = @transform_0, window_bounds = array<i64: 1, 128, 128>}, {transform_indices = @transform_1, window_bounds = array<i64: 1, 16, 256>}, {transform_indices = @transform_2, window_bounds = array<i64: 1, 128, 256>}, {transform_indices = @transform_3, window_bounds = array<i64: 1, 128, 512>}, {transform_indices = @transform_4, window_bounds = array<i64: 1, 256, 128>}, {transform_indices = @transform_5, window_bounds = array<i64: 1, 128, 256>}, {transform_indices = @transform_6, window_bounds = array<i64: 1, 256, 128>}, {transform_indices = @transform_7, window_bounds = array<i64: 1, 128, 128>}]} {
    %c0_i32 = arith.constant 0 : i32
    %0 = arith.cmpi eq, %arg1, %c0_i32 : i32
    %1 = arith.extui %0 : i1 to i32
    %c0_i32_0 = arith.constant 0 : i32
    %2 = arith.cmpi ne, %1, %c0_i32_0 : i32
    scf.if %2 {
      %c0_83 = arith.constant 0 : index
      %c0_84 = arith.constant 0 : index
      %c0_85 = arith.constant 0 : index
      %250 = vector.load %arg2[%c0_83, %c0_84, %c0_85] : memref<1x128x128xf32, #tpu.memory_space<vmem>>, vector<1x128x128xf32>
      %c0_86 = arith.constant 0 : index
      %c0_87 = arith.constant 0 : index
      %c0_88 = arith.constant 0 : index
      %251 = vector.load %arg9[%c0_86, %c0_87, %c0_88] : memref<1x128x128xf32, #tpu.memory_space<vmem>>, vector<1x128x128xf32>
      tpu.vector_store %arg9[%c0_86, %c0_87, %c0_88], %250 {strides = array<i32>} : memref<1x128x128xf32, #tpu.memory_space<vmem>>, vector<1x128x128xf32>,
    } else {
    }
    %c0 = arith.constant 0 : index
    %c0_1 = arith.constant 0 : index
    %c0_2 = arith.constant 0 : index
    %3 = vector.load %arg9[%c0, %c0_1, %c0_2] : memref<1x128x128xf32, #tpu.memory_space<vmem>>, vector<1x128x128xf32>
    %4 = vector.shape_cast %3 : vector<1x128x128xf32> to vector<128x128xf32>
    %c0_3 = arith.constant 0 : index
    %c0_4 = arith.constant 0 : index
    %c0_5 = arith.constant 0 : index
    %5 = vector.load %arg3[%c0_3, %c0_4, %c0_5] : memref<1x16x256xf32, #tpu.memory_space<vmem>>, vector<1x16x256xf32>
    %6 = vector.shape_cast %5 : vector<1x16x256xf32> to vector<16x256xf32>
    %7 = vector.extract_strided_slice %6 {offsets = [0, 0], sizes = [1, 128], strides = [1, 1]} : vector<16x256xf32> to vector<1x128xf32>
    %8 = vector.extract_strided_slice %6 {offsets = [1, 0], sizes = [1, 128], strides = [1, 1]} : vector<16x256xf32> to vector<1x128xf32>
    %9 = vector.extract_strided_slice %6 {offsets = [2, 0], sizes = [1, 128], strides = [1, 1]} : vector<16x256xf32> to vector<1x128xf32>
    %10 = vector.extract_strided_slice %6 {offsets = [3, 0], sizes = [1, 128], strides = [1, 1]} : vector<16x256xf32> to vector<1x128xf32>
    %11 = vector.extract_strided_slice %6 {offsets = [4, 0], sizes = [1, 128], strides = [1, 1]} : vector<16x256xf32> to vector<1x128xf32>
    %12 = vector.extract_strided_slice %6 {offsets = [5, 0], sizes = [1, 128], strides = [1, 1]} : vector<16x256xf32> to vector<1x128xf32>
    %13 = vector.extract_strided_slice %6 {offsets = [6, 0], sizes = [1, 256], strides = [1, 1]} : vector<16x256xf32> to vector<1x256xf32>
    %14 = vector.extract_strided_slice %6 {offsets = [7, 0], sizes = [1, 256], strides = [1, 1]} : vector<16x256xf32> to vector<1x256xf32>
    %15 = vector.extract_strided_slice %6 {offsets = [8, 0], sizes = [1, 128], strides = [1, 1]} : vector<16x256xf32> to vector<1x128xf32>
    %16 = vector.extract_strided_slice %6 {offsets = [9, 0], sizes = [1, 128], strides = [1, 1]} : vector<16x256xf32> to vector<1x128xf32>
    %cst = arith.constant dense<0.000000e+00> : vector<128xf32>
    %17 = vector.multi_reduction <add>, %4, %cst [1] : vector<128x128xf32> to vector<128xf32>
    %18 = vector.shape_cast %17 : vector<128xf32> to vector<128x1xf32>
    %cst_6 = arith.constant 1.280000e+02 : f32
    %19 = vector.broadcast %cst_6 : f32 to vector<128x1xf32>
    %20 = arith.divf %18, %19 : vector<128x1xf32>
    %21 = vector.broadcast %20 : vector<128x1xf32> to vector<128x128xf32>
    %22 = arith.subf %4, %21 : vector<128x128xf32>
    %23 = arith.mulf %22, %22 : vector<128x128xf32>
    %cst_7 = arith.constant dense<0.000000e+00> : vector<128xf32>
    %24 = vector.multi_reduction <add>, %23, %cst_7 [1] : vector<128x128xf32> to vector<128xf32>
    %25 = vector.shape_cast %24 : vector<128xf32> to vector<128x1xf32>
    %cst_8 = arith.constant 1.280000e+02 : f32
    %26 = vector.broadcast %cst_8 : f32 to vector<128x1xf32>
    %27 = arith.divf %25, %26 : vector<128x1xf32>
    %cst_9 = arith.constant 9.99999974E-6 : f32
    %28 = vector.broadcast %cst_9 : f32 to vector<128x1xf32>
    %29 = arith.addf %27, %28 : vector<128x1xf32>
    %30 = math.rsqrt %29 : vector<128x1xf32>
    %31 = vector.broadcast %30 : vector<128x1xf32> to vector<128x128xf32>
    %32 = arith.mulf %22, %31 : vector<128x128xf32>
    %33 = vector.broadcast %7 : vector<1x128xf32> to vector<128x128xf32>
    %34 = arith.mulf %32, %33 : vector<128x128xf32>
    %35 = vector.broadcast %8 : vector<1x128xf32> to vector<128x128xf32>
    %36 = arith.addf %34, %35 : vector<128x128xf32>
    %c0_10 = arith.constant 0 : index
    %c0_11 = arith.constant 0 : index
    %c0_12 = arith.constant 0 : index
    %37 = vector.load %arg4[%c0_10, %c0_11, %c0_12] : memref<1x128x256xbf16, #tpu.memory_space<vmem>>, vector<1x128x256xbf16>
    %38 = vector.shape_cast %37 : vector<1x128x256xbf16> to vector<128x256xbf16>
    %39 = arith.extf %38 : vector<128x256xbf16> to vector<128x256xf32>
    %c0_13 = arith.constant 0 : index
    %c0_14 = arith.constant 0 : index
    %c0_15 = arith.constant 0 : index
    %40 = vector.load %arg5[%c0_13, %c0_14, %c0_15] : memref<1x128x512xbf16, #tpu.memory_space<vmem>>, vector<1x128x512xbf16>
    %41 = vector.shape_cast %40 : vector<1x128x512xbf16> to vector<128x512xbf16>
    %42 = arith.extf %41 : vector<128x512xbf16> to vector<128x512xf32>
    %c0_16 = arith.constant 0 : index
    %c0_17 = arith.constant 0 : index
    %c0_18 = arith.constant 0 : index
    %43 = vector.load %arg6[%c0_16, %c0_17, %c0_18] : memref<1x256x128xbf16, #tpu.memory_space<vmem>>, vector<1x256x128xbf16>
    %44 = vector.shape_cast %43 : vector<1x256x128xbf16> to vector<256x128xbf16>
    %45 = arith.extf %44 : vector<256x128xbf16> to vector<256x128xf32>
    %cst_19 = arith.constant dense<0.000000e+00> : vector<128x256xf32>
    %46 = tpu.matmul %36, %39, %cst_19 {dimension_numbers = #tpu.dot_dimension_numbers<[1], [0], [0], [1], [0, 0, 1, 1], [], []>} : vector<128x128xf32>, vector<128x256xf32>, vector<128x256xf32> -> vector<128x256xf32>
    %cst_20 = arith.constant dense<0.000000e+00> : vector<128x512xf32>
    %47 = tpu.matmul %36, %42, %cst_20 {dimension_numbers = #tpu.dot_dimension_numbers<[1], [0], [0], [1], [0, 0, 1, 1], [], []>} : vector<128x128xf32>, vector<128x512xf32>, vector<128x512xf32> -> vector<128x512xf32>
    %48 = vector.shape_cast %46 : vector<128x256xf32> to vector<2x64x256xf32>
    %49 = vector.shape_cast %47 : vector<128x512xf32> to vector<2x64x512xf32>
    %cst_21 = arith.constant 0.000000e+00 : f32
    %50 = vector.broadcast %cst_21 : f32 to vector<128x128xf32>
    %51 = vector.extract_strided_slice %48 {offsets = [0, 0, 0], sizes = [2, 64, 128], strides = [1, 1, 1]} : vector<2x64x256xf32> to vector<2x64x128xf32>
    %52 = arith.mulf %51, %51 : vector<2x64x128xf32>
    %cst_22 = arith.constant dense<0.000000e+00> : vector<2x64xf32>
    %53 = vector.multi_reduction <add>, %52, %cst_22 [2] : vector<2x64x128xf32> to vector<2x64xf32>
    %54 = vector.shape_cast %53 : vector<2x64xf32> to vector<2x64x1xf32>
    %cst_23 = arith.constant 1.000000e-24 : f32
    %55 = vector.broadcast %cst_23 : f32 to vector<2x64x1xf32>
    %56 = arith.maximumf %54, %55 : vector<2x64x1xf32>
    %57 = math.rsqrt %56 : vector<2x64x1xf32>
    %58 = vector.broadcast %57 : vector<2x64x1xf32> to vector<2x64x128xf32>
    %59 = arith.mulf %51, %58 : vector<2x64x128xf32>
    %60 = vector.shape_cast %15 : vector<1x128xf32> to vector<1x1x128xf32>
    %61 = vector.broadcast %60 : vector<1x1x128xf32> to vector<2x64x128xf32>
    %62 = arith.mulf %59, %61 : vector<2x64x128xf32>
    %63 = vector.extract_strided_slice %49 {offsets = [0, 0, 0], sizes = [2, 64, 128], strides = [1, 1, 1]} : vector<2x64x512xf32> to vector<2x64x128xf32>
    %64 = arith.mulf %63, %63 : vector<2x64x128xf32>
    %cst_24 = arith.constant dense<0.000000e+00> : vector<2x64xf32>
    %65 = vector.multi_reduction <add>, %64, %cst_24 [2] : vector<2x64x128xf32> to vector<2x64xf32>
    %66 = vector.shape_cast %65 : vector<2x64xf32> to vector<2x64x1xf32>
    %cst_25 = arith.constant 1.000000e-24 : f32
    %67 = vector.broadcast %cst_25 : f32 to vector<2x64x1xf32>
    %68 = arith.maximumf %66, %67 : vector<2x64x1xf32>
    %69 = math.rsqrt %68 : vector<2x64x1xf32>
    %70 = vector.broadcast %69 : vector<2x64x1xf32> to vector<2x64x128xf32>
    %71 = arith.mulf %63, %70 : vector<2x64x128xf32>
    %72 = vector.shape_cast %16 : vector<1x128xf32> to vector<1x1x128xf32>
    %73 = vector.broadcast %72 : vector<1x1x128xf32> to vector<2x64x128xf32>
    %74 = arith.mulf %71, %73 : vector<2x64x128xf32>
    %75 = vector.extract_strided_slice %49 {offsets = [0, 0, 256], sizes = [2, 64, 128], strides = [1, 1, 1]} : vector<2x64x512xf32> to vector<2x64x128xf32>
    "tpu.trace_start"() <{level = 10 : i32, message = "bid,bkd->bik"}> : () -> ()
    %cst_26 = arith.constant dense<0.000000e+00> : vector<2x64x64xf32>
    %76 = tpu.matmul %62, %74, %cst_26 {dimension_numbers = #tpu.dot_dimension_numbers<[2], [2], [1], [1], [0, 0, 0, 1, 1, 1], [0], [0]>} : vector<2x64x128xf32>, vector<2x64x128xf32>, vector<2x64x64xf32> -> vector<2x64x64xf32>
    "tpu.trace_stop"() : () -> ()
    %cst_27 = arith.constant 8.000000e+00 : f32
    %77 = vector.broadcast %cst_27 : f32 to vector<2x64x64xf32>
    %78 = arith.mulf %76, %77 : vector<2x64x64xf32>
    %cst_28 = arith.constant dense<0xFF800000> : vector<2x64xf32>
    %79 = vector.multi_reduction <maximumf>, %78, %cst_28 [2] : vector<2x64x64xf32> to vector<2x64xf32>
    %80 = vector.shape_cast %79 : vector<2x64xf32> to vector<2x64x1xf32>
    %81 = vector.broadcast %80 : vector<2x64x1xf32> to vector<2x64x64xf32>
    %82 = arith.subf %78, %81 : vector<2x64x64xf32>
    %83 = math.exp %82 : vector<2x64x64xf32>
    %cst_29 = arith.constant dense<0.000000e+00> : vector<2x64xf32>
    %84 = vector.multi_reduction <add>, %83, %cst_29 [2] : vector<2x64x64xf32> to vector<2x64xf32>
    %85 = vector.shape_cast %84 : vector<2x64xf32> to vector<2x64x1xf32>
    %86 = tpu.reciprocal %85 : vector<2x64x1xf32> -> vector<2x64x1xf32>
    %87 = vector.broadcast %86 : vector<2x64x1xf32> to vector<2x64x64xf32>
    %88 = arith.mulf %83, %87 : vector<2x64x64xf32>
    "tpu.trace_start"() <{level = 10 : i32, message = "bik,bkd->bid"}> : () -> ()
    %cst_30 = arith.constant dense<0.000000e+00> : vector<2x64x128xf32>
    %89 = tpu.matmul %88, %75, %cst_30 {dimension_numbers = #tpu.dot_dimension_numbers<[2], [1], [1], [2], [0, 0, 0, 1, 1, 2], [0], [0]>} : vector<2x64x64xf32>, vector<2x64x128xf32>, vector<2x64x128xf32> -> vector<2x64x128xf32>
    "tpu.trace_stop"() : () -> ()
    %90 = vector.shape_cast %89 : vector<2x64x128xf32> to vector<128x128xf32>
    %91 = vector.extract_strided_slice %45 {offsets = [0, 0], sizes = [128, 128], strides = [1, 1]} : vector<256x128xf32> to vector<128x128xf32>
    %cst_31 = arith.constant dense<0.000000e+00> : vector<128x128xf32>
    %92 = tpu.matmul %90, %91, %cst_31 {dimension_numbers = #tpu.dot_dimension_numbers<[1], [0], [0], [1], [0, 0, 1, 1], [], []>} : vector<128x128xf32>, vector<128x128xf32>, vector<128x128xf32> -> vector<128x128xf32>
    %93 = arith.addf %50, %92 : vector<128x128xf32>
    %94 = vector.extract_strided_slice %48 {offsets = [0, 0, 128], sizes = [2, 64, 128], strides = [1, 1, 1]} : vector<2x64x256xf32> to vector<2x64x128xf32>
    %95 = arith.mulf %94, %94 : vector<2x64x128xf32>
    %cst_32 = arith.constant dense<0.000000e+00> : vector<2x64xf32>
    %96 = vector.multi_reduction <add>, %95, %cst_32 [2] : vector<2x64x128xf32> to vector<2x64xf32>
    %97 = vector.shape_cast %96 : vector<2x64xf32> to vector<2x64x1xf32>
    %cst_33 = arith.constant 1.000000e-24 : f32
    %98 = vector.broadcast %cst_33 : f32 to vector<2x64x1xf32>
    %99 = arith.maximumf %97, %98 : vector<2x64x1xf32>
    %100 = math.rsqrt %99 : vector<2x64x1xf32>
    %101 = vector.broadcast %100 : vector<2x64x1xf32> to vector<2x64x128xf32>
    %102 = arith.mulf %94, %101 : vector<2x64x128xf32>
    %103 = vector.shape_cast %15 : vector<1x128xf32> to vector<1x1x128xf32>
    %104 = vector.broadcast %103 : vector<1x1x128xf32> to vector<2x64x128xf32>
    %105 = arith.mulf %102, %104 : vector<2x64x128xf32>
    %106 = vector.extract_strided_slice %49 {offsets = [0, 0, 128], sizes = [2, 64, 128], strides = [1, 1, 1]} : vector<2x64x512xf32> to vector<2x64x128xf32>
    %107 = arith.mulf %106, %106 : vector<2x64x128xf32>
    %cst_34 = arith.constant dense<0.000000e+00> : vector<2x64xf32>
    %108 = vector.multi_reduction <add>, %107, %cst_34 [2] : vector<2x64x128xf32> to vector<2x64xf32>
    %109 = vector.shape_cast %108 : vector<2x64xf32> to vector<2x64x1xf32>
    %cst_35 = arith.constant 1.000000e-24 : f32
    %110 = vector.broadcast %cst_35 : f32 to vector<2x64x1xf32>
    %111 = arith.maximumf %109, %110 : vector<2x64x1xf32>
    %112 = math.rsqrt %111 : vector<2x64x1xf32>
    %113 = vector.broadcast %112 : vector<2x64x1xf32> to vector<2x64x128xf32>
    %114 = arith.mulf %106, %113 : vector<2x64x128xf32>
    %115 = vector.shape_cast %16 : vector<1x128xf32> to vector<1x1x128xf32>
    %116 = vector.broadcast %115 : vector<1x1x128xf32> to vector<2x64x128xf32>
    %117 = arith.mulf %114, %116 : vector<2x64x128xf32>
    %118 = vector.extract_strided_slice %49 {offsets = [0, 0, 384], sizes = [2, 64, 128], strides = [1, 1, 1]} : vector<2x64x512xf32> to vector<2x64x128xf32>
    "tpu.trace_start"() <{level = 10 : i32, message = "bid,bkd->bik"}> : () -> ()
    %cst_36 = arith.constant dense<0.000000e+00> : vector<2x64x64xf32>
    %119 = tpu.matmul %105, %117, %cst_36 {dimension_numbers = #tpu.dot_dimension_numbers<[2], [2], [1], [1], [0, 0, 0, 1, 1, 1], [0], [0]>} : vector<2x64x128xf32>, vector<2x64x128xf32>, vector<2x64x64xf32> -> vector<2x64x64xf32>
    "tpu.trace_stop"() : () -> ()
    %cst_37 = arith.constant 8.000000e+00 : f32
    %120 = vector.broadcast %cst_37 : f32 to vector<2x64x64xf32>
    %121 = arith.mulf %119, %120 : vector<2x64x64xf32>
    %cst_38 = arith.constant dense<0xFF800000> : vector<2x64xf32>
    %122 = vector.multi_reduction <maximumf>, %121, %cst_38 [2] : vector<2x64x64xf32> to vector<2x64xf32>
    %123 = vector.shape_cast %122 : vector<2x64xf32> to vector<2x64x1xf32>
    %124 = vector.broadcast %123 : vector<2x64x1xf32> to vector<2x64x64xf32>
    %125 = arith.subf %121, %124 : vector<2x64x64xf32>
    %126 = math.exp %125 : vector<2x64x64xf32>
    %cst_39 = arith.constant dense<0.000000e+00> : vector<2x64xf32>
    %127 = vector.multi_reduction <add>, %126, %cst_39 [2] : vector<2x64x64xf32> to vector<2x64xf32>
    %128 = vector.shape_cast %127 : vector<2x64xf32> to vector<2x64x1xf32>
    %129 = tpu.reciprocal %128 : vector<2x64x1xf32> -> vector<2x64x1xf32>
    %130 = vector.broadcast %129 : vector<2x64x1xf32> to vector<2x64x64xf32>
    %131 = arith.mulf %126, %130 : vector<2x64x64xf32>
    "tpu.trace_start"() <{level = 10 : i32, message = "bik,bkd->bid"}> : () -> ()
    %cst_40 = arith.constant dense<0.000000e+00> : vector<2x64x128xf32>
    %132 = tpu.matmul %131, %118, %cst_40 {dimension_numbers = #tpu.dot_dimension_numbers<[2], [1], [1], [2], [0, 0, 0, 1, 1, 2], [0], [0]>} : vector<2x64x64xf32>, vector<2x64x128xf32>, vector<2x64x128xf32> -> vector<2x64x128xf32>
    "tpu.trace_stop"() : () -> ()
    %133 = vector.shape_cast %132 : vector<2x64x128xf32> to vector<128x128xf32>
    %134 = vector.extract_strided_slice %45 {offsets = [128, 0], sizes = [128, 128], strides = [1, 1]} : vector<256x128xf32> to vector<128x128xf32>
    %cst_41 = arith.constant dense<0.000000e+00> : vector<128x128xf32>
    %135 = tpu.matmul %133, %134, %cst_41 {dimension_numbers = #tpu.dot_dimension_numbers<[1], [0], [0], [1], [0, 0, 1, 1], [], []>} : vector<128x128xf32>, vector<128x128xf32>, vector<128x128xf32> -> vector<128x128xf32>
    %136 = arith.addf %93, %135 : vector<128x128xf32>
    %cst_42 = arith.constant dense<0.000000e+00> : vector<128xf32>
    %137 = vector.multi_reduction <add>, %136, %cst_42 [1] : vector<128x128xf32> to vector<128xf32>
    %138 = vector.shape_cast %137 : vector<128xf32> to vector<128x1xf32>
    %cst_43 = arith.constant 1.280000e+02 : f32
    %139 = vector.broadcast %cst_43 : f32 to vector<128x1xf32>
    %140 = arith.divf %138, %139 : vector<128x1xf32>
    %141 = vector.broadcast %140 : vector<128x1xf32> to vector<128x128xf32>
    %142 = arith.subf %136, %141 : vector<128x128xf32>
    %143 = arith.mulf %142, %142 : vector<128x128xf32>
    %cst_44 = arith.constant dense<0.000000e+00> : vector<128xf32>
    %144 = vector.multi_reduction <add>, %143, %cst_44 [1] : vector<128x128xf32> to vector<128xf32>
    %145 = vector.shape_cast %144 : vector<128xf32> to vector<128x1xf32>
    %cst_45 = arith.constant 1.280000e+02 : f32
    %146 = vector.broadcast %cst_45 : f32 to vector<128x1xf32>
    %147 = arith.divf %145, %146 : vector<128x1xf32>
    %cst_46 = arith.constant 9.99999974E-6 : f32
    %148 = vector.broadcast %cst_46 : f32 to vector<128x1xf32>
    %149 = arith.addf %147, %148 : vector<128x1xf32>
    %150 = math.rsqrt %149 : vector<128x1xf32>
    %151 = vector.broadcast %150 : vector<128x1xf32> to vector<128x128xf32>
    %152 = arith.mulf %142, %151 : vector<128x128xf32>
    %153 = vector.broadcast %9 : vector<1x128xf32> to vector<128x128xf32>
    %154 = arith.mulf %152, %153 : vector<128x128xf32>
    %155 = vector.broadcast %10 : vector<1x128xf32> to vector<128x128xf32>
    %156 = arith.addf %154, %155 : vector<128x128xf32>
    %157 = arith.addf %4, %156 : vector<128x128xf32>
    %cst_47 = arith.constant dense<0.000000e+00> : vector<128xf32>
    %158 = vector.multi_reduction <add>, %157, %cst_47 [1] : vector<128x128xf32> to vector<128xf32>
    %159 = vector.shape_cast %158 : vector<128xf32> to vector<128x1xf32>
    %cst_48 = arith.constant 1.280000e+02 : f32
    %160 = vector.broadcast %cst_48 : f32 to vector<128x1xf32>
    %161 = arith.divf %159, %160 : vector<128x1xf32>
    %162 = vector.broadcast %161 : vector<128x1xf32> to vector<128x128xf32>
    %163 = arith.subf %157, %162 : vector<128x128xf32>
    %164 = arith.mulf %163, %163 : vector<128x128xf32>
    %cst_49 = arith.constant dense<0.000000e+00> : vector<128xf32>
    %165 = vector.multi_reduction <add>, %164, %cst_49 [1] : vector<128x128xf32> to vector<128xf32>
    %166 = vector.shape_cast %165 : vector<128xf32> to vector<128x1xf32>
    %cst_50 = arith.constant 1.280000e+02 : f32
    %167 = vector.broadcast %cst_50 : f32 to vector<128x1xf32>
    %168 = arith.divf %166, %167 : vector<128x1xf32>
    %cst_51 = arith.constant 9.99999974E-6 : f32
    %169 = vector.broadcast %cst_51 : f32 to vector<128x1xf32>
    %170 = arith.addf %168, %169 : vector<128x1xf32>
    %171 = math.rsqrt %170 : vector<128x1xf32>
    %172 = vector.broadcast %171 : vector<128x1xf32> to vector<128x128xf32>
    %173 = arith.mulf %163, %172 : vector<128x128xf32>
    %174 = vector.broadcast %11 : vector<1x128xf32> to vector<128x128xf32>
    %175 = arith.mulf %173, %174 : vector<128x128xf32>
    %176 = vector.broadcast %12 : vector<1x128xf32> to vector<128x128xf32>
    %177 = arith.addf %175, %176 : vector<128x128xf32>
    %c0_52 = arith.constant 0 : index
    %c0_53 = arith.constant 0 : index
    %c0_54 = arith.constant 0 : index
    %178 = vector.load %arg7[%c0_52, %c0_53, %c0_54] : memref<1x128x256xbf16, #tpu.memory_space<vmem>>, vector<1x128x256xbf16>
    %179 = vector.shape_cast %178 : vector<1x128x256xbf16> to vector<128x256xbf16>
    %180 = arith.extf %179 : vector<128x256xbf16> to vector<128x256xf32>
    %cst_55 = arith.constant dense<0.000000e+00> : vector<128x256xf32>
    %181 = tpu.matmul %177, %180, %cst_55 {dimension_numbers = #tpu.dot_dimension_numbers<[1], [0], [0], [1], [0, 0, 1, 1], [], []>} : vector<128x128xf32>, vector<128x256xf32>, vector<128x256xf32> -> vector<128x256xf32>
    %cst_56 = arith.constant 5.000000e-01 : f32
    %182 = vector.broadcast %cst_56 : f32 to vector<128x256xf32>
    %183 = arith.mulf %182, %181 : vector<128x256xf32>
    %cst_57 = arith.constant 0.707106769 : f32
    %184 = vector.broadcast %cst_57 : f32 to vector<128x256xf32>
    %185 = arith.mulf %181, %184 : vector<128x256xf32>
    %186 = math.absf %185 : vector<128x256xf32>
    %cst_58 = arith.constant 0.327591091 : f32
    %187 = vector.broadcast %cst_58 : f32 to vector<128x256xf32>
    %188 = arith.mulf %187, %186 : vector<128x256xf32>
    %cst_59 = arith.constant 1.000000e+00 : f32
    %189 = vector.broadcast %cst_59 : f32 to vector<128x256xf32>
    %190 = arith.addf %189, %188 : vector<128x256xf32>
    %cst_60 = arith.constant 1.000000e+00 : f32
    %191 = vector.broadcast %cst_60 : f32 to vector<128x256xf32>
    %192 = arith.divf %191, %190 : vector<128x256xf32>
    %cst_61 = arith.constant 1.06140542 : f32
    %193 = vector.broadcast %cst_61 : f32 to vector<128x256xf32>
    %194 = arith.mulf %193, %192 : vector<128x256xf32>
    %cst_62 = arith.constant -1.45315206 : f32
    %195 = vector.broadcast %cst_62 : f32 to vector<128x256xf32>
    %196 = arith.addf %194, %195 : vector<128x256xf32>
    %197 = arith.mulf %196, %192 : vector<128x256xf32>
    %cst_63 = arith.constant 1.42141378 : f32
    %198 = vector.broadcast %cst_63 : f32 to vector<128x256xf32>
    %199 = arith.addf %197, %198 : vector<128x256xf32>
    %200 = arith.mulf %199, %192 : vector<128x256xf32>
    %cst_64 = arith.constant -0.284496725 : f32
    %201 = vector.broadcast %cst_64 : f32 to vector<128x256xf32>
    %202 = arith.addf %200, %201 : vector<128x256xf32>
    %203 = arith.mulf %202, %192 : vector<128x256xf32>
    %cst_65 = arith.constant 0.254829586 : f32
    %204 = vector.broadcast %cst_65 : f32 to vector<128x256xf32>
    %205 = arith.addf %203, %204 : vector<128x256xf32>
    %206 = arith.mulf %205, %192 : vector<128x256xf32>
    %cst_66 = arith.constant 0.000000e+00 : f32
    %207 = vector.broadcast %cst_66 : f32 to vector<128x256xf32>
    %208 = arith.subf %207, %186 : vector<128x256xf32>
    %209 = arith.mulf %208, %186 : vector<128x256xf32>
    %210 = math.exp %209 : vector<128x256xf32>
    %211 = arith.mulf %206, %210 : vector<128x256xf32>
    %cst_67 = arith.constant 1.000000e+00 : f32
    %212 = vector.broadcast %cst_67 : f32 to vector<128x256xf32>
    %213 = arith.subf %212, %211 : vector<128x256xf32>
    %cst_68 = arith.constant 0.000000e+00 : f32
    %214 = vector.broadcast %cst_68 : f32 to vector<128x256xf32>
    %215 = arith.cmpf olt, %185, %214 : vector<128x256xf32>
    %cst_69 = arith.constant 0.000000e+00 : f32
    %216 = vector.broadcast %cst_69 : f32 to vector<128x256xf32>
    %217 = arith.subf %216, %213 : vector<128x256xf32>
    %218 = arith.select %215, %217, %213 : vector<128x256xi1>, vector<128x256xf32>
    %cst_70 = arith.constant 1.000000e+00 : f32
    %219 = vector.broadcast %cst_70 : f32 to vector<128x256xf32>
    %220 = arith.addf %219, %218 : vector<128x256xf32>
    %221 = arith.mulf %183, %220 : vector<128x256xf32>
    %cst_71 = arith.constant dense<0.000000e+00> : vector<128xf32>
    %222 = vector.multi_reduction <add>, %221, %cst_71 [1] : vector<128x256xf32> to vector<128xf32>
    %223 = vector.shape_cast %222 : vector<128xf32> to vector<128x1xf32>
    %cst_72 = arith.constant 2.560000e+02 : f32
    %224 = vector.broadcast %cst_72 : f32 to vector<128x1xf32>
    %225 = arith.divf %223, %224 : vector<128x1xf32>
    %226 = vector.broadcast %225 : vector<128x1xf32> to vector<128x256xf32>
    %227 = arith.subf %221, %226 : vector<128x256xf32>
    %228 = arith.mulf %227, %227 : vector<128x256xf32>
    %cst_73 = arith.constant dense<0.000000e+00> : vector<128xf32>
    %229 = vector.multi_reduction <add>, %228, %cst_73 [1] : vector<128x256xf32> to vector<128xf32>
    %230 = vector.shape_cast %229 : vector<128xf32> to vector<128x1xf32>
    %cst_74 = arith.constant 2.560000e+02 : f32
    %231 = vector.broadcast %cst_74 : f32 to vector<128x1xf32>
    %232 = arith.divf %230, %231 : vector<128x1xf32>
    %cst_75 = arith.constant 9.99999974E-6 : f32
    %233 = vector.broadcast %cst_75 : f32 to vector<128x1xf32>
    %234 = arith.addf %232, %233 : vector<128x1xf32>
    %235 = math.rsqrt %234 : vector<128x1xf32>
    %236 = vector.broadcast %235 : vector<128x1xf32> to vector<128x256xf32>
    %237 = arith.mulf %227, %236 : vector<128x256xf32>
    %238 = vector.broadcast %13 : vector<1x256xf32> to vector<128x256xf32>
    %239 = arith.mulf %237, %238 : vector<128x256xf32>
    %240 = vector.broadcast %14 : vector<1x256xf32> to vector<128x256xf32>
    %241 = arith.addf %239, %240 : vector<128x256xf32>
    %c0_76 = arith.constant 0 : index
    %c0_77 = arith.constant 0 : index
    %c0_78 = arith.constant 0 : index
    %242 = vector.load %arg8[%c0_76, %c0_77, %c0_78] : memref<1x256x128xbf16, #tpu.memory_space<vmem>>, vector<1x256x128xbf16>
    %243 = vector.shape_cast %242 : vector<1x256x128xbf16> to vector<256x128xbf16>
    %244 = arith.extf %243 : vector<256x128xbf16> to vector<256x128xf32>
    %cst_79 = arith.constant dense<0.000000e+00> : vector<128x128xf32>
    %245 = tpu.matmul %241, %244, %cst_79 {dimension_numbers = #tpu.dot_dimension_numbers<[1], [0], [0], [1], [0, 0, 1, 1], [], []>} : vector<128x256xf32>, vector<256x128xf32>, vector<128x128xf32> -> vector<128x128xf32>
    %246 = arith.addf %157, %245 : vector<128x128xf32>
    %c0_80 = arith.constant 0 : index
    %c0_81 = arith.constant 0 : index
    %c0_82 = arith.constant 0 : index
    %247 = vector.load %arg9[%c0_80, %c0_81, %c0_82] : memref<1x128x128xf32, #tpu.memory_space<vmem>>, vector<1x128x128xf32>
    %248 = vector.shape_cast %247 : vector<1x128x128xf32> to vector<128x128xf32>
    %249 = vector.shape_cast %246 : vector<128x128xf32> to vector<1x128x128xf32>
    tpu.vector_store %arg9[%c0_80, %c0_81, %c0_82], %249 {strides = array<i32>} : memref<1x128x128xf32, #tpu.memory_space<vmem>>, vector<1x128x128xf32>,
    return
  }
  func.func @transform_0(%arg0: i32, %arg1: i32) -> (i32, i32, i32) {
    %c0_i32 = arith.constant 0 : i32
    %c0_i32_0 = arith.constant 0 : i32
    %c0_i32_1 = arith.constant 0 : i32
    return %arg0, %c0_i32, %c0_i32_0 : i32, i32, i32
  }
  func.func @transform_1(%arg0: i32, %arg1: i32) -> (i32, i32, i32) {
    %c0_i32 = arith.constant 0 : i32
    %c0_i32_0 = arith.constant 0 : i32
    %c0_i32_1 = arith.constant 0 : i32
    return %arg1, %c0_i32, %c0_i32_0 : i32, i32, i32
  }
  func.func @transform_2(%arg0: i32, %arg1: i32) -> (i32, i32, i32) {
    %c0_i32 = arith.constant 0 : i32
    %c0_i32_0 = arith.constant 0 : i32
    %c0_i32_1 = arith.constant 0 : i32
    return %arg1, %c0_i32, %c0_i32_0 : i32, i32, i32
  }
  func.func @transform_3(%arg0: i32, %arg1: i32) -> (i32, i32, i32) {
    %c0_i32 = arith.constant 0 : i32
    %c0_i32_0 = arith.constant 0 : i32
    %c0_i32_1 = arith.constant 0 : i32
    return %arg1, %c0_i32, %c0_i32_0 : i32, i32, i32
  }
  func.func @transform_4(%arg0: i32, %arg1: i32) -> (i32, i32, i32) {
    %c0_i32 = arith.constant 0 : i32
    %c0_i32_0 = arith.constant 0 : i32
    %c0_i32_1 = arith.constant 0 : i32
    return %arg1, %c0_i32, %c0_i32_0 : i32, i32, i32
  }
  func.func @transform_5(%arg0: i32, %arg1: i32) -> (i32, i32, i32) {
    %c0_i32 = arith.constant 0 : i32
    %c0_i32_0 = arith.constant 0 : i32
    %c0_i32_1 = arith.constant 0 : i32
    return %arg1, %c0_i32, %c0_i32_0 : i32, i32, i32
  }
  func.func @transform_6(%arg0: i32, %arg1: i32) -> (i32, i32, i32) {
    %c0_i32 = arith.constant 0 : i32
    %c0_i32_0 = arith.constant 0 : i32
    %c0_i32_1 = arith.constant 0 : i32
    return %arg1, %c0_i32, %c0_i32_0 : i32, i32, i32
  }
  func.func @transform_7(%arg0: i32, %arg1: i32) -> (i32, i32, i32) {
    %c0_i32 = arith.constant 0 : i32
    %c0_i32_0 = arith.constant 0 : i32
    %c0_i32_1 = arith.constant 0 : i32
    return %arg0, %c0_i32, %c0_i32_0 : i32, i32, i32
  }
}

</mosaic_0001>

<llo_original>
// kernel: tpu_custom_call.1
$region0: #{tpu_custom_call.1}
  #allocation0 [shape = 'u32[]', space=smem, size = 0x4, offset = 0x4, fixed_abs, tag = 'smem constant byte address 0x4 - core index']
  #allocation1 [shape = 'u32[144,128]{1,0:T(1,128)}', space=vmem, size = 0x12000, scoped, tag = 'internal scratch']
  %s0 = inlined_call_operand.hbm [shape: f32[1,128,128], index: 0, kind: input, shape index: {}]
  %s1 = inlined_call_operand.hbm [shape: f32[2,16,256], index: 1, kind: input, shape index: {}]
  %s2 = inlined_call_operand.hbm [shape: bf16[2,128,256], index: 2, kind: input, shape index: {}]
  %s3 = inlined_call_operand.hbm [shape: bf16[2,128,512], index: 3, kind: input, shape index: {}]
  %s4 = inlined_call_operand.hbm [shape: bf16[2,256,128], index: 4, kind: input, shape index: {}]
  %s5 = inlined_call_operand.hbm [shape: bf16[2,128,256], index: 5, kind: input, shape index: {}]
  %s6 = inlined_call_operand.hbm [shape: bf16[2,256,128], index: 6, kind: input, shape index: {}]
  %s7 = inlined_call_operand.hbm [shape: f32[1,128,128], index: 7, kind: output, shape index: {}]
  %s8 = sld [smem:[#allocation0]]
  $region93: #{tpu_custom_call.1} parent=0
    _
  %s10 = ssub.s32 1, %s8
  %s11 = scalar_select 0, %s10, %s8
  $region1: #{tpu_custom_call.1} parent=0
    #allocation2 [shape = 'u8[65536]{0}', space=vmem, size = 0x10000, scoped, tag = 'input window, operand 0, single buffered']
    #allocation3 [shape = 's32[2]{0}', space=sflag, size = 0x8, scoped, tag = 'scoped memory for tpu_custom_call.1']
    #allocation4 [shape = 's32[2]{0}', space=sflag, size = 0x8, scoped, tag = 'scoped memory for tpu_custom_call.1']
    #allocation5 [shape = 'u8[32768]{0}', space=vmem, size = 0x8000, scoped, tag = 'input window, operand 1']
    #allocation6 [shape = 's32[2]{0}', space=sflag, size = 0x8, scoped, tag = 'scoped memory for tpu_custom_call.1']
    #allocation7 [shape = 'u8[131072]{0}', space=vmem, size = 0x20000, scoped, tag = 'input window, operand 2']
    #allocation8 [shape = 'u8[262144]{0}', space=vmem, size = 0x40000, scoped, tag = 'input window, operand 3']
    #allocation9 [shape = 's32[2]{0}', space=sflag, size = 0x8, scoped, tag = 'scoped memory for tpu_custom_call.1']
    #allocation10 [shape = 'u8[131072]{0}', space=vmem, size = 0x20000, scoped, tag = 'input window, operand 4']
    #allocation11 [shape = 'u8[131072]{0}', space=vmem, size = 0x20000, scoped, tag = 'input window, operand 5']
    #allocation12 [shape = 's32[2]{0}', space=sflag, size = 0x8, scoped, tag = 'scoped memory for tpu_custom_call.1']
    #allocation13 [shape = 'u8[131072]{0}', space=vmem, size = 0x20000, scoped, tag = 'input window, operand 6']
    #allocation14 [shape = 'u8[65536]{0}', space=vmem, size = 0x10000, scoped, tag = 'output window, operand 0, single buffered']
    %12 = vsyncpa [#allocation3], 0
    %13 = vsyncpa [#allocation6], 0
    %s14 = scalar_lea.sflag [#allocation6], 1
    %15 = vsyncpa %s14, 0
    %16 = vsyncpa [#allocation9], 0
    %s17 = scalar_lea.sflag [#allocation9], 1
    %18 = vsyncpa %s17, 0
    %19 = vsyncpa [#allocation12], 0
    %s20 = scalar_lea.sflag [#allocation12], 1
    %21 = vsyncpa %s20, 0
    %22 = vsyncpa [#allocation4], 0
    loop: start=0, step=1, limit=4
    $region2: #{tpu_custom_call.1} parent=1 // loop_pre_header
      _
    $region3: #{tpu_custom_call.1} parent=1 // loop_header
      %s24 = sphi 0, %s28
      %p25 = scmp.ge.s32.totalorder %s24, 4
      %s31 = sphi 0, %s43
      %s32 = sphi 0, %s39
      %s33 = sphi 0, %s31
      %s34 = sphi 0, %s32
      %s35 = sphi 0, %s33
      %s36 = sphi 0, %s34
      %s46 = sphi 0, %s48
      %s49 = sphi 0, %s46
      %s50 = sphi 0, %s49
      %s66 = sphi 0, %s50
      %s72 = sphi 0, %s74
      %s75 = sphi 0, %s72
      %s76 = sphi 0, %s75
      %s92 = sphi 0, %s76
      %s98 = sphi 0, %s100
      %s101 = sphi 0, %s98
      %s102 = sphi 0, %s101
      %s118 = sphi 0, %s102
      %s124 = sphi 0, %s126
      %s127 = sphi 0, %s124
      %s128 = sphi 0, %s127
      %s144 = sphi 0, %s128
      %s150 = sphi 0, %s152
      %s153 = sphi 0, %s150
      %s154 = sphi 0, %s153
      %s170 = sphi 0, %s154
      %s176 = sphi 0, %s178
      %s179 = sphi 0, %s176
      %s180 = sphi 0, %s179
      %s196 = sphi 0, %s180
      %s202 = sphi 0, %s204
      %s205 = sphi 0, %s202
      %s206 = sphi 0, %s205
      %s222 = sphi 0, %s206
      %s228 = sphi 0, %s230
      %s231 = sphi 0, %s228
      %s232 = sphi 0, %s231
      %s248 = sphi 0, %s232
    $region4: #{tpu_custom_call.1} parent=1 // loop_header_branch
      %27 = sbr.rel (%p25) target = $region8
    $region5: #{tpu_custom_call.1} parent=1 // loop_body
      %s29 = ssub.s32 %s24, 1
      %s30 = ssub.s32 %s24, 2
      %s37 = sadd.s32 1, %s32
      %p38 = scmp.ge.s32.totalorder %s37, 2
      %s39 = scalar_select %p38, 0, %s37
      %s40 = sadd.s32 1, %s31
      %s41 = scalar_select %p38, %s40, %s31
      %p42 = scmp.ge.s32.totalorder %s41, 1
      %s43 = scalar_select %p42, 0, %s41
      %s44 = ssub.s32 %s31, %s43
      %p45 = scmp.eq.s32.totalorder %s44, 0
      %s47 = sadd.s32 %s46, 1
      %s48 = scalar_select %p45, %s46, %s47
      %p51 = pneg %p45
      %p52 = scmp.eq.s32.totalorder %s24, 1
      %p53 = por %p51, %p52
      %p54 = scmp.ne.s32.totalorder %s46, %s49
      %p55 = scmp.eq.s32.totalorder %s24, 0
      %p56 = por %p54, %p55
      %p57 = scmp.ne.s32.totalorder %s46, %s49
      %p58 = scmp.eq.s32.totalorder %s29, 1
      %p59 = por %p57, %p58
      %p60 = scmp.ne.s32.totalorder %s49, %s50
      %p61 = scmp.eq.s32.totalorder %s29, 0
      %p62 = por %p60, %p61
      %p63 = scmp.ne.s32.totalorder %s49, %s50
      %p64 = scmp.eq.s32.totalorder %s30, 1
      %p65 = por %p63, %p64
      %p67 = scmp.ne.s32.totalorder %s50, %s66
      %p68 = scmp.eq.s32.totalorder %s30, 0
      %p69 = por %p67, %p68
      %s70 = ssub.s32 %s32, %s39
      %p71 = scmp.eq.s32.totalorder %s70, 0
      %s73 = sadd.s32 %s72, 1
      %s74 = scalar_select %p71, %s72, %s73
      %p77 = pneg %p71
      %p78 = scmp.eq.s32.totalorder %s24, 1
      %p79 = por %p77, %p78
      %p80 = scmp.ne.s32.totalorder %s72, %s75
      %p81 = scmp.eq.s32.totalorder %s24, 0
      %p82 = por %p80, %p81
      %p83 = scmp.ne.s32.totalorder %s72, %s75
      %p84 = scmp.eq.s32.totalorder %s29, 1
      %p85 = por %p83, %p84
      %p86 = scmp.ne.s32.totalorder %s75, %s76
      %p87 = scmp.eq.s32.totalorder %s29, 0
      %p88 = por %p86, %p87
      %p89 = scmp.ne.s32.totalorder %s75, %s76
      %p90 = scmp.eq.s32.totalorder %s30, 1
      %p91 = por %p89, %p90
      %p93 = scmp.ne.s32.totalorder %s76, %s92
      %p94 = scmp.eq.s32.totalorder %s30, 0
      %p95 = por %p93, %p94
      %s96 = ssub.s32 %s32, %s39
      %p97 = scmp.eq.s32.totalorder %s96, 0
      %s99 = sadd.s32 %s98, 1
      %s100 = scalar_select %p97, %s98, %s99
      %p103 = pneg %p97
      %p104 = scmp.eq.s32.totalorder %s24, 1
      %p105 = por %p103, %p104
      %p106 = scmp.ne.s32.totalorder %s98, %s101
      %p107 = scmp.eq.s32.totalorder %s24, 0
      %p108 = por %p106, %p107
      %p109 = scmp.ne.s32.totalorder %s98, %s101
      %p110 = scmp.eq.s32.totalorder %s29, 1
      %p111 = por %p109, %p110
      %p112 = scmp.ne.s32.totalorder %s101, %s102
      %p113 = scmp.eq.s32.totalorder %s29, 0
      %p114 = por %p112, %p113
      %p115 = scmp.ne.s32.totalorder %s101, %s102
      %p116 = scmp.eq.s32.totalorder %s30, 1
      %p117 = por %p115, %p116
      %p119 = scmp.ne.s32.totalorder %s102, %s118
      %p120 = scmp.eq.s32.totalorder %s30, 0
      %p121 = por %p119, %p120
      %s122 = ssub.s32 %s32, %s39
      %p123 = scmp.eq.s32.totalorder %s122, 0
      %s125 = sadd.s32 %s124, 1
      %s126 = scalar_select %p123, %s124, %s125
      %p129 = pneg %p123
      %p130 = scmp.eq.s32.totalorder %s24, 1
      %p131 = por %p129, %p130
      %p132 = scmp.ne.s32.totalorder %s124, %s127
      %p133 = scmp.eq.s32.totalorder %s24, 0
      %p134 = por %p132, %p133
      %p135 = scmp.ne.s32.totalorder %s124, %s127
      %p136 = scmp.eq.s32.totalorder %s29, 1
      %p137 = por %p135, %p136
      %p138 = scmp.ne.s32.totalorder %s127, %s128
      %p139 = scmp.eq.s32.totalorder %s29, 0
      %p140 = por %p138, %p139
      %p141 = scmp.ne.s32.totalorder %s127, %s128
      %p142 = scmp.eq.s32.totalorder %s30, 1
      %p143 = por %p141, %p142
      %p145 = scmp.ne.s32.totalorder %s128, %s144
      %p146 = scmp.eq.s32.totalorder %s30, 0
      %p147 = por %p145, %p146
      %s148 = ssub.s32 %s32, %s39
      %p149 = scmp.eq.s32.totalorder %s148, 0
      %s151 = sadd.s32 %s150, 1
      %s152 = scalar_select %p149, %s150, %s151
      %p155 = pneg %p149
      %p156 = scmp.eq.s32.totalorder %s24, 1
      %p157 = por %p155, %p156
      %p158 = scmp.ne.s32.totalorder %s150, %s153
      %p159 = scmp.eq.s32.totalorder %s24, 0
      %p160 = por %p158, %p159
      %p161 = scmp.ne.s32.totalorder %s150, %s153
      %p162 = scmp.eq.s32.totalorder %s29, 1
      %p163 = por %p161, %p162
      %p164 = scmp.ne.s32.totalorder %s153, %s154
      %p165 = scmp.eq.s32.totalorder %s29, 0
      %p166 = por %p164, %p165
      %p167 = scmp.ne.s32.totalorder %s153, %s154
      %p168 = scmp.eq.s32.totalorder %s30, 1
      %p169 = por %p167, %p168
      %p171 = scmp.ne.s32.totalorder %s154, %s170
      %p172 = scmp.eq.s32.totalorder %s30, 0
      %p173 = por %p171, %p172
      %s174 = ssub.s32 %s32, %s39
      %p175 = scmp.eq.s32.totalorder %s174, 0
      %s177 = sadd.s32 %s176, 1
      %s178 = scalar_select %p175, %s176, %s177
      %p181 = pneg %p175
      %p182 = scmp.eq.s32.totalorder %s24, 1
      %p183 = por %p181, %p182
      %p184 = scmp.ne.s32.totalorder %s176, %s179
      %p185 = scmp.eq.s32.totalorder %s24, 0
      %p186 = por %p184, %p185
      %p187 = scmp.ne.s32.totalorder %s176, %s179
      %p188 = scmp.eq.s32.totalorder %s29, 1
      %p189 = por %p187, %p188
      %p190 = scmp.ne.s32.totalorder %s179, %s180
      %p191 = scmp.eq.s32.totalorder %s29, 0
      %p192 = por %p190, %p191
      %p193 = scmp.ne.s32.totalorder %s179, %s180
      %p194 = scmp.eq.s32.totalorder %s30, 1
      %p195 = por %p193, %p194
      %p197 = scmp.ne.s32.totalorder %s180, %s196
      %p198 = scmp.eq.s32.totalorder %s30, 0
      %p199 = por %p197, %p198
      %s200 = ssub.s32 %s32, %s39
      %p201 = scmp.eq.s32.totalorder %s200, 0
      %s203 = sadd.s32 %s202, 1
      %s204 = scalar_select %p201, %s202, %s203
      %p207 = pneg %p201
      %p208 = scmp.eq.s32.totalorder %s24, 1
      %p209 = por %p207, %p208
      %p210 = scmp.ne.s32.totalorder %s202, %s205
      %p211 = scmp.eq.s32.totalorder %s24, 0
      %p212 = por %p210, %p211
      %p213 = scmp.ne.s32.totalorder %s202, %s205
      %p214 = scmp.eq.s32.totalorder %s29, 1
      %p215 = por %p213, %p214
      %p216 = scmp.ne.s32.totalorder %s205, %s206
      %p217 = scmp.eq.s32.totalorder %s29, 0
      %p218 = por %p216, %p217
      %p219 = scmp.ne.s32.totalorder %s205, %s206
      %p220 = scmp.eq.s32.totalorder %s30, 1
      %p221 = por %p219, %p220
      %p223 = scmp.ne.s32.totalorder %s206, %s222
      %p224 = scmp.eq.s32.totalorder %s30, 0
      %p225 = por %p223, %p224
      %s226 = ssub.s32 %s31, %s43
      %p227 = scmp.eq.s32.totalorder %s226, 0
      %s229 = sadd.s32 %s228, 1
      %s230 = scalar_select %p227, %s228, %s229
      %p233 = pneg %p227
      %p234 = scmp.eq.s32.totalorder %s24, 1
      %p235 = por %p233, %p234
      %p236 = scmp.ne.s32.totalorder %s228, %s231
      %p237 = scmp.eq.s32.totalorder %s24, 0
      %p238 = por %p236, %p237
      %p239 = scmp.ne.s32.totalorder %s228, %s231
      %p240 = scmp.eq.s32.totalorder %s29, 1
      %p241 = por %p239, %p240
      %p242 = scmp.ne.s32.totalorder %s231, %s232
      %p243 = scmp.eq.s32.totalorder %s29, 0
      %p244 = por %p242, %p243
      %p245 = scmp.ne.s32.totalorder %s231, %s232
      %p246 = scmp.eq.s32.totalorder %s30, 1
      %p247 = por %p245, %p246
      %p249 = scmp.ne.s32.totalorder %s232, %s248
      %p250 = scmp.eq.s32.totalorder %s30, 0
      %p251 = por %p249, %p250
      %p252 = scmp.le.s32.totalorder 1, %s24
      %p253 = scmp.lt.s32.totalorder %s24, 3
      %p254 = pnand %p252, %p253
      %p255 = pneg %p254
      // Predicated region
      $region9: #{tpu_custom_call.1} parent=5 // pred_check
        _
      $region10: #{tpu_custom_call.1} parent=5 // pred_check_branch
        %257 = sbr.rel (%p254) target = $region12
      $region11: #{tpu_custom_call.1} parent=5 // pred_region
        %s258 = ssub.s32 %s24, 1
        // Predicated region
        $region13: #{tpu_custom_call.1} parent=11 // pred_check
          %p259 = pneg %p62
        $region14: #{tpu_custom_call.1} parent=11 // pred_check_branch
          %261 = sbr.rel (%p259) target = $region16
        $region15: #{tpu_custom_call.1} parent=11 // pred_region
          %s263 = ssub.s32 2048, 2048
          %264 = vsyncadd [#allocation3], %s263
          %s265 = smul.addr %s33, 16
          %s266 = smul.addr %s265, 128
          %s267 = scalar_lea.hbm %s0, %s266
          %s268 = sshll.u32 [#allocation2], 4
          %s269 = int_to_ptr.vmem [resolvable:$true] %s268
          %274 = dma.hbm_to_vmem [thread:$0]  %s267, 2048, %s269, [#allocation3], 128, 128, 8
        $region16: #{tpu_custom_call.1} parent=11 // pred_fallthru
          _
      $region12: #{tpu_custom_call.1} parent=5 // pred_fallthru
        _
      %p275 = scmp.lt.s32.totalorder %s24, 2
      // Predicated region
      $region17: #{tpu_custom_call.1} parent=5 // pred_check
        %p276 = pneg %p275
      $region18: #{tpu_custom_call.1} parent=5 // pred_check_branch
        %278 = sbr.rel (%p276) target = $region20
      $region19: #{tpu_custom_call.1} parent=5 // pred_region
        // Predicated region
        $region21: #{tpu_custom_call.1} parent=19 // pred_check
          %p279 = pneg %p82
        $region22: #{tpu_custom_call.1} parent=19 // pred_check_branch
          %281 = sbr.rel (%p279) target = $region24
        $region23: #{tpu_custom_call.1} parent=19 // pred_region
          %s282 = sand.u32 %s24, 1
          %s283 = scalar_lea.sflag [#allocation6], %s282
          %s284 = sand.u32 %s72, 1
          %s285 = smul.addr %s284, 32
          %s286 = scalar_lea.vmem [#allocation5], %s285
          %s288 = ssub.s32 512, 512
          %289 = vsyncadd %s283, %s288
          %s290 = smul.addr %s32, 4
          %s291 = smul.addr %s290, 128
          %s292 = scalar_lea.hbm %s1, %s291
          %s293 = sshll.u32 %s286, 4
          %s294 = int_to_ptr.vmem [resolvable:$true] %s293
          %299 = dma.hbm_to_vmem [thread:$0]  %s292, 512, %s294, %s283, 256, 256, 16
        $region24: #{tpu_custom_call.1} parent=19 // pred_fallthru
          _
        // Predicated region
        $region25: #{tpu_custom_call.1} parent=19 // pred_check
          %p300 = pneg %p108
        $region26: #{tpu_custom_call.1} parent=19 // pred_check_branch
          %302 = sbr.rel (%p300) target = $region28
        $region27: #{tpu_custom_call.1} parent=19 // pred_region
          %s303 = sand.u32 %s24, 1
          %s304 = scalar_lea.sflag [#allocation6], %s303
          %s305 = sand.u32 %s98, 1
          %s306 = smul.addr %s305, 128
          %s307 = scalar_lea.vmem [#allocation7], %s306
          %s309 = ssub.s32 2048, 2048
          %310 = vsyncadd %s304, %s309
          %s311 = smul.addr %s32, 32
          %s312 = smul.addr %s311, 64
          %s313 = scalar_lea.hbm %s2, %s312
          %s314 = sshll.u32 %s307, 4
          %s315 = int_to_ptr.vmem [resolvable:$true] %s314
          %320 = dma.hbm_to_vmem [thread:$0]  %s313, 2048, %s315, %s304, 128, 128, 8
        $region28: #{tpu_custom_call.1} parent=19 // pred_fallthru
          _
        // Predicated region
        $region29: #{tpu_custom_call.1} parent=19 // pred_check
          %p321 = pneg %p134
        $region30: #{tpu_custom_call.1} parent=19 // pred_check_branch
          %323 = sbr.rel (%p321) target = $region32
        $region31: #{tpu_custom_call.1} parent=19 // pred_region
          %s324 = sand.u32 %s24, 1
          %s325 = scalar_lea.sflag [#allocation9], %s324
          %s326 = sand.u32 %s124, 1
          %s327 = smul.addr %s326, 256
          %s328 = scalar_lea.vmem [#allocation8], %s327
          %s330 = ssub.s32 4096, 4096
          %331 = vsyncadd %s325, %s330
          %s332 = smul.addr %s32, 64
          %s333 = smul.addr %s332, 64
          %s334 = scalar_lea.hbm %s3, %s333
          %s335 = sshll.u32 %s328, 4
          %s336 = int_to_ptr.vmem [resolvable:$true] %s335
          %341 = dma.hbm_to_vmem [thread:$0]  %s334, 4096, %s336, %s325, 256, 256, 16
        $region32: #{tpu_custom_call.1} parent=19 // pred_fallthru
          _
        // Predicated region
        $region33: #{tpu_custom_call.1} parent=19 // pred_check
          %p342 = pneg %p160
        $region34: #{tpu_custom_call.1} parent=19 // pred_check_branch
          %344 = sbr.rel (%p342) target = $region36
        $region35: #{tpu_custom_call.1} parent=19 // pred_region
          %s345 = sand.u32 %s24, 1
          %s346 = scalar_lea.sflag [#allocation9], %s345
          %s347 = sand.u32 %s150, 1
          %s348 = smul.addr %s347, 128
          %s349 = scalar_lea.vmem [#allocation10], %s348
          %s351 = ssub.s32 2048, 2048
          %352 = vsyncadd %s346, %s351
          %s353 = smul.addr %s32, 32
          %s354 = smul.addr %s353, 64
          %s355 = scalar_lea.hbm %s4, %s354
          %s356 = sshll.u32 %s349, 4
          %s357 = int_to_ptr.vmem [resolvable:$true] %s356
          %362 = dma.hbm_to_vmem [thread:$0]  %s355, 2048, %s357, %s346, 64, 64, 4
        $region36: #{tpu_custom_call.1} parent=19 // pred_fallthru
          _
        // Predicated region
        $region37: #{tpu_custom_call.1} parent=19 // pred_check
          %p363 = pneg %p186
        $region38: #{tpu_custom_call.1} parent=19 // pred_check_branch
          %365 = sbr.rel (%p363) target = $region40
        $region39: #{tpu_custom_call.1} parent=19 // pred_region
          %s366 = sand.u32 %s24, 1
          %s367 = scalar_lea.sflag [#allocation12], %s366
          %s368 = sand.u32 %s176, 1
          %s369 = smul.addr %s368, 128
          %s370 = scalar_lea.vmem [#allocation11], %s369
          %s372 = ssub.s32 2048, 2048
          %373 = vsyncadd %s367, %s372
          %s374 = smul.addr %s32, 32
          %s375 = smul.addr %s374, 64
          %s376 = scalar_lea.hbm %s5, %s375
          %s377 = sshll.u32 %s370, 4
          %s378 = int_to_ptr.vmem [resolvable:$true] %s377
          %383 = dma.hbm_to_vmem [thread:$0]  %s376, 2048, %s378, %s367, 128, 128, 8
        $region40: #{tpu_custom_call.1} parent=19 // pred_fallthru
          _
        // Predicated region
        $region41: #{tpu_custom_call.1} parent=19 // pred_check
          %p384 = pneg %p212
        $region42: #{tpu_custom_call.1} parent=19 // pred_check_branch
          %386 = sbr.rel (%p384) target = $region44
        $region43: #{tpu_custom_call.1} parent=19 // pred_region
          %s387 = sand.u32 %s24, 1
          %s388 = scalar_lea.sflag [#allocation12], %s387
          %s389 = sand.u32 %s202, 1
          %s390 = smul.addr %s389, 128
          %s391 = scalar_lea.vmem [#allocation13], %s390
          %s393 = ssub.s32 2048, 2048
          %394 = vsyncadd %s388, %s393
          %s395 = smul.addr %s32, 32
          %s396 = smul.addr %s395, 64
          %s397 = scalar_lea.hbm %s6, %s396
          %s398 = sshll.u32 %s391, 4
          %s399 = int_to_ptr.vmem [resolvable:$true] %s398
          %404 = dma.hbm_to_vmem [thread:$0]  %s397, 2048, %s399, %s388, 64, 64, 4
        $region44: #{tpu_custom_call.1} parent=19 // pred_fallthru
          _
      $region20: #{tpu_custom_call.1} parent=5 // pred_fallthru
        _
      %p405 = scmp.le.s32.totalorder 1, %s24
      %p406 = scmp.lt.s32.totalorder %s24, 3
      %p407 = pnand %p405, %p406
      %p408 = pneg %p407
      // Predicated region
      $region45: #{tpu_custom_call.1} parent=5 // pred_check
        _
      $region46: #{tpu_custom_call.1} parent=5 // pred_check_branch
        %410 = sbr.rel (%p407) target = $region48
      $region47: #{tpu_custom_call.1} parent=5 // pred_region
        %s411 = ssub.s32 %s24, 1
        // Predicated region
        $region49: #{tpu_custom_call.1} parent=47 // pred_check
          %p412 = pneg %p62
        $region50: #{tpu_custom_call.1} parent=47 // pred_check_branch
          %414 = sbr.rel (%p412) target = $region52
        $region51: #{tpu_custom_call.1} parent=47 // pred_region
          %415 = dma.done [#allocation3], 2048
        $region52: #{tpu_custom_call.1} parent=47 // pred_fallthru
          _
        %s416 = sand.u32 %s29, 1
        %s417 = scalar_lea.sflag [#allocation6], %s416
        %s418 = sand.u32 %s75, 1
        %s419 = smul.addr %s418, 32
        %s420 = scalar_lea.vmem [#allocation5], %s419
        // Predicated region
        $region53: #{tpu_custom_call.1} parent=47 // pred_check
          %p421 = pneg %p88
        $region54: #{tpu_custom_call.1} parent=47 // pred_check_branch
          %423 = sbr.rel (%p421) target = $region56
        $region55: #{tpu_custom_call.1} parent=47 // pred_region
          %424 = dma.done %s417, 512
        $region56: #{tpu_custom_call.1} parent=47 // pred_fallthru
          _
        %s425 = sand.u32 %s29, 1
        %s426 = scalar_lea.sflag [#allocation6], %s425
        %s427 = sand.u32 %s101, 1
        %s428 = smul.addr %s427, 128
        %s429 = scalar_lea.vmem [#allocation7], %s428
        // Predicated region
        $region57: #{tpu_custom_call.1} parent=47 // pred_check
          %p430 = pneg %p114
        $region58: #{tpu_custom_call.1} parent=47 // pred_check_branch
          %432 = sbr.rel (%p430) target = $region60
        $region59: #{tpu_custom_call.1} parent=47 // pred_region
          %433 = dma.done %s426, 2048
        $region60: #{tpu_custom_call.1} parent=47 // pred_fallthru
          _
        %s434 = sand.u32 %s29, 1
        %s435 = scalar_lea.sflag [#allocation9], %s434
        %s436 = sand.u32 %s127, 1
        %s437 = smul.addr %s436, 256
        %s438 = scalar_lea.vmem [#allocation8], %s437
        // Predicated region
        $region61: #{tpu_custom_call.1} parent=47 // pred_check
          %p439 = pneg %p140
        $region62: #{tpu_custom_call.1} parent=47 // pred_check_branch
          %441 = sbr.rel (%p439) target = $region64
        $region63: #{tpu_custom_call.1} parent=47 // pred_region
          %442 = dma.done %s435, 4096
        $region64: #{tpu_custom_call.1} parent=47 // pred_fallthru
          _
        %s443 = sand.u32 %s29, 1
        %s444 = scalar_lea.sflag [#allocation9], %s443
        %s445 = sand.u32 %s153, 1
        %s446 = smul.addr %s445, 128
        %s447 = scalar_lea.vmem [#allocation10], %s446
        // Predicated region
        $region65: #{tpu_custom_call.1} parent=47 // pred_check
          %p448 = pneg %p166
        $region66: #{tpu_custom_call.1} parent=47 // pred_check_branch
          %450 = sbr.rel (%p448) target = $region68
        $region67: #{tpu_custom_call.1} parent=47 // pred_region
          %451 = dma.done %s444, 2048
        $region68: #{tpu_custom_call.1} parent=47 // pred_fallthru
          _
        %s452 = sand.u32 %s29, 1
        %s453 = scalar_lea.sflag [#allocation12], %s452
        %s454 = sand.u32 %s179, 1
        %s455 = smul.addr %s454, 128
        %s456 = scalar_lea.vmem [#allocation11], %s455
        // Predicated region
        $region69: #{tpu_custom_call.1} parent=47 // pred_check
          %p457 = pneg %p192
        $region70: #{tpu_custom_call.1} parent=47 // pred_check_branch
          %459 = sbr.rel (%p457) target = $region72
        $region71: #{tpu_custom_call.1} parent=47 // pred_region
          %460 = dma.done %s453, 2048
        $region72: #{tpu_custom_call.1} parent=47 // pred_fallthru
          _
        %s461 = sand.u32 %s29, 1
        %s462 = scalar_lea.sflag [#allocation12], %s461
        %s463 = sand.u32 %s205, 1
        %s464 = smul.addr %s463, 128
        %s465 = scalar_lea.vmem [#allocation13], %s464
        // Predicated region
        $region73: #{tpu_custom_call.1} parent=47 // pred_check
          %p466 = pneg %p218
        $region74: #{tpu_custom_call.1} parent=47 // pred_check_branch
          %468 = sbr.rel (%p466) target = $region76
        $region75: #{tpu_custom_call.1} parent=47 // pred_region
          %469 = dma.done %s462, 2048
        $region76: #{tpu_custom_call.1} parent=47 // pred_fallthru
          _
        %p470 = pneg %p62
        %p471 = pneg %p59
        %s472 = sand.u32 %s29, 1
        %s473 = scalar_lea.sflag [#allocation6], %s472
        %s474 = sand.u32 %s75, 1
        %s475 = smul.addr %s474, 32
        %s476 = scalar_lea.vmem [#allocation5], %s475
        %p477 = pneg %p88
        %p478 = pneg %p85
        %s479 = sand.u32 %s29, 1
        %s480 = scalar_lea.sflag [#allocation6], %s479
        %s481 = sand.u32 %s101, 1
        %s482 = smul.addr %s481, 128
        %s483 = scalar_lea.vmem [#allocation7], %s482
        %p484 = pneg %p114
        %p485 = pneg %p111
        %s486 = sand.u32 %s29, 1
        %s487 = scalar_lea.sflag [#allocation9], %s486
        %s488 = sand.u32 %s127, 1
        %s489 = smul.addr %s488, 256
        %s490 = scalar_lea.vmem [#allocation8], %s489
        %p491 = pneg %p140
        %p492 = pneg %p137
        %s493 = sand.u32 %s29, 1
        %s494 = scalar_lea.sflag [#allocation9], %s493
        %s495 = sand.u32 %s153, 1
        %s496 = smul.addr %s495, 128
        %s497 = scalar_lea.vmem [#allocation10], %s496
        %p498 = pneg %p166
        %p499 = pneg %p163
        %s500 = sand.u32 %s29, 1
        %s501 = scalar_lea.sflag [#allocation12], %s500
        %s502 = sand.u32 %s179, 1
        %s503 = smul.addr %s502, 128
        %s504 = scalar_lea.vmem [#allocation11], %s503
        %p505 = pneg %p192
        %p506 = pneg %p189
        %s507 = sand.u32 %s29, 1
        %s508 = scalar_lea.sflag [#allocation12], %s507
        %s509 = sand.u32 %s205, 1
        %s510 = smul.addr %s509, 128
        %s511 = scalar_lea.vmem [#allocation13], %s510
        %p512 = pneg %p218
        %p513 = pneg %p215
        %p514 = pneg %p244
        %p515 = pneg %p241
        %p516 = scmp.eq.s32.totalorder %s34, 0
        // Predicated region
        $region77: #{tpu_custom_call.1} parent=47 // pred_check
          %p517 = pneg %p516
        $region78: #{tpu_custom_call.1} parent=47 // pred_check_branch
          %519 = sbr.rel (%p517) target = $region80
        $region79: #{tpu_custom_call.1} parent=47 // pred_region
          %v520 = vld [vmem:[#allocation2] sm:$0xff]
          %v521 = vld [vmem:[#allocation2 + $0x8] sm:$0xff]
          %v522 = vld [vmem:[#allocation2 + $0x10] sm:$0xff]
          %v523 = vld [vmem:[#allocation2 + $0x18] sm:$0xff]
          %v524 = vld [vmem:[#allocation2 + $0x20] sm:$0xff]
          %v525 = vld [vmem:[#allocation2 + $0x28] sm:$0xff]
          %v526 = vld [vmem:[#allocation2 + $0x30] sm:$0xff]
          %v527 = vld [vmem:[#allocation2 + $0x38] sm:$0xff]
          %v528 = vld [vmem:[#allocation2 + $0x40] sm:$0xff]
          %v529 = vld [vmem:[#allocation2 + $0x48] sm:$0xff]
          %v530 = vld [vmem:[#allocation2 + $0x50] sm:$0xff]
          %v531 = vld [vmem:[#allocation2 + $0x58] sm:$0xff]
          %v532 = vld [vmem:[#allocation2 + $0x60] sm:$0xff]
          %v533 = vld [vmem:[#allocation2 + $0x68] sm:$0xff]
          %v534 = vld [vmem:[#allocation2 + $0x70] sm:$0xff]
          %v535 = vld [vmem:[#allocation2 + $0x78] sm:$0xff]
          %536 = vst [vmem:[#allocation14] sm:$0xff] %v520
          %537 = vst [vmem:[#allocation14 + $0x8] sm:$0xff] %v521
          %538 = vst [vmem:[#allocation14 + $0x10] sm:$0xff] %v522
          %539 = vst [vmem:[#allocation14 + $0x18] sm:$0xff] %v523
          %540 = vst [vmem:[#allocation14 + $0x20] sm:$0xff] %v524
          %541 = vst [vmem:[#allocation14 + $0x28] sm:$0xff] %v525
          %542 = vst [vmem:[#allocation14 + $0x30] sm:$0xff] %v526
          %543 = vst [vmem:[#allocation14 + $0x38] sm:$0xff] %v527
          %544 = vst [vmem:[#allocation14 + $0x40] sm:$0xff] %v528
          %545 = vst [vmem:[#allocation14 + $0x48] sm:$0xff] %v529
          %546 = vst [vmem:[#allocation14 + $0x50] sm:$0xff] %v530
          %547 = vst [vmem:[#allocation14 + $0x58] sm:$0xff] %v531
          %548 = vst [vmem:[#allocation14 + $0x60] sm:$0xff] %v532
          %549 = vst [vmem:[#allocation14 + $0x68] sm:$0xff] %v533
          %550 = vst [vmem:[#allocation14 + $0x70] sm:$0xff] %v534
          %551 = vst [vmem:[#allocation14 + $0x78] sm:$0xff] %v535
        $region80: #{tpu_custom_call.1} parent=47 // pred_fallthru
          _
        %v552 = vld [vmem:[#allocation14] sm:$0xff]
        %v553 = vld [vmem:[#allocation14 + $0x8] sm:$0xff]
        %v554 = vld [vmem:[#allocation14 + $0x10] sm:$0xff]
        %v555 = vld [vmem:[#allocation14 + $0x18] sm:$0xff]
        %v556 = vld [vmem:[#allocation14 + $0x20] sm:$0xff]
        %v557 = vld [vmem:[#allocation14 + $0x28] sm:$0xff]
        %v558 = vld [vmem:[#allocation14 + $0x30] sm:$0xff]
        %v559 = vld [vmem:[#allocation14 + $0x38] sm:$0xff]
        %v560 = vld [vmem:[#allocation14 + $0x40] sm:$0xff]
        %v561 = vld [vmem:[#allocation14 + $0x48] sm:$0xff]
        %v562 = vld [vmem:[#allocation14 + $0x50] sm:$0xff]
        %v563 = vld [vmem:[#allocation14 + $0x58] sm:$0xff]
        %v564 = vld [vmem:[#allocation14 + $0x60] sm:$0xff]
        %v565 = vld [vmem:[#allocation14 + $0x68] sm:$0xff]
        %v566 = vld [vmem:[#allocation14 + $0x70] sm:$0xff]
        %v567 = vld [vmem:[#allocation14 + $0x78] sm:$0xff]
        %v568 = vld [vmem:[%s420] sm:$0xff]
        %v569 = vld [vmem:[%s420 + $0x8] sm:$0xff]
        %v570 = vld [vmem:[%s420 + $0x10] sm:$0xff]
        %571 = vadd.xlane.f32.xlu0 %v552
        %v572 = vpop.xlane.xlu0 %571
        %573 = vadd.xlane.f32.xlu0 %v553
        %v574 = vpop.xlane.xlu0 %573
        %575 = vadd.xlane.f32.xlu0 %v554
        %v576 = vpop.xlane.xlu0 %575
        %577 = vadd.xlane.f32.xlu0 %v555
        %v578 = vpop.xlane.xlu0 %577
        %579 = vadd.xlane.f32.xlu0 %v556
        %v580 = vpop.xlane.xlu0 %579
        %581 = vadd.xlane.f32.xlu0 %v557
        %v582 = vpop.xlane.xlu0 %581
        %583 = vadd.xlane.f32.xlu0 %v558
        %v584 = vpop.xlane.xlu0 %583
        %585 = vadd.xlane.f32.xlu0 %v559
        %v586 = vpop.xlane.xlu0 %585
        %587 = vadd.xlane.f32.xlu0 %v560
        %v588 = vpop.xlane.xlu0 %587
        %589 = vadd.xlane.f32.xlu0 %v561
        %v590 = vpop.xlane.xlu0 %589
        %591 = vadd.xlane.f32.xlu0 %v562
        %v592 = vpop.xlane.xlu0 %591
        %593 = vadd.xlane.f32.xlu0 %v563
        %v594 = vpop.xlane.xlu0 %593
        %595 = vadd.xlane.f32.xlu0 %v564
        %v596 = vpop.xlane.xlu0 %595
        %597 = vadd.xlane.f32.xlu0 %v565
        %v598 = vpop.xlane.xlu0 %597
        %599 = vadd.xlane.f32.xlu0 %v566
        %v600 = vpop.xlane.xlu0 %599
        %601 = vadd.xlane.f32.xlu0 %v567
        %v602 = vpop.xlane.xlu0 %601
        %v603 = vrcp.pop 128.0
        %v604 = vmul.f32 %v572, %v603
        %v605 = vmul.f32 %v574, %v603
        %v606 = vmul.f32 %v576, %v603
        %v607 = vmul.f32 %v578, %v603
        %v608 = vmul.f32 %v580, %v603
        %v609 = vmul.f32 %v582, %v603
        %v610 = vmul.f32 %v584, %v603
        %v611 = vmul.f32 %v586, %v603
        %v612 = vmul.f32 %v588, %v603
        %v613 = vmul.f32 %v590, %v603
        %v614 = vmul.f32 %v592, %v603
        %v615 = vmul.f32 %v594, %v603
        %v616 = vmul.f32 %v596, %v603
        %v617 = vmul.f32 %v598, %v603
        %v618 = vmul.f32 %v600, %v603
        %v619 = vmul.f32 %v602, %v603
        %v620 = vsub.f32 %v552, %v604
        %v621 = vsub.f32 %v553, %v605
        %v622 = vsub.f32 %v554, %v606
        %v623 = vsub.f32 %v555, %v607
        %v624 = vsub.f32 %v556, %v608
        %v625 = vsub.f32 %v557, %v609
        %v626 = vsub.f32 %v558, %v610
        %v627 = vsub.f32 %v559, %v611
        %v628 = vsub.f32 %v560, %v612
        %v629 = vsub.f32 %v561, %v613
        %v630 = vsub.f32 %v562, %v614
        %v631 = vsub.f32 %v563, %v615
        %v632 = vsub.f32 %v564, %v616
        %v633 = vsub.f32 %v565, %v617
        %v634 = vsub.f32 %v566, %v618
        %v635 = vsub.f32 %v567, %v619
        %v636 = vmul.f32 %v620, %v620
        %v637 = vmul.f32 %v621, %v621
        %v638 = vmul.f32 %v622, %v622
        %v639 = vmul.f32 %v623, %v623
        %v640 = vmul.f32 %v624, %v624
        %v641 = vmul.f32 %v625, %v625
        %v642 = vmul.f32 %v626, %v626
        %v643 = vmul.f32 %v627, %v627
        %v644 = vmul.f32 %v628, %v628
        %v645 = vmul.f32 %v629, %v629
        %v646 = vmul.f32 %v630, %v630
        %v647 = vmul.f32 %v631, %v631
        %v648 = vmul.f32 %v632, %v632
        %v649 = vmul.f32 %v633, %v633
        %v650 = vmul.f32 %v634, %v634
        %v651 = vmul.f32 %v635, %v635
        %652 = vadd.xlane.f32.xlu0 %v636
        %v653 = vpop.xlane.xlu0 %652
        %654 = vadd.xlane.f32.xlu0 %v637
        %v655 = vpop.xlane.xlu0 %654
        %656 = vadd.xlane.f32.xlu0 %v638
        %v657 = vpop.xlane.xlu0 %656
        %658 = vadd.xlane.f32.xlu0 %v639
        %v659 = vpop.xlane.xlu0 %658
        %660 = vadd.xlane.f32.xlu0 %v640
        %v661 = vpop.xlane.xlu0 %660
        %662 = vadd.xlane.f32.xlu0 %v641
        %v663 = vpop.xlane.xlu0 %662
        %664 = vadd.xlane.f32.xlu0 %v642
        %v665 = vpop.xlane.xlu0 %664
        %666 = vadd.xlane.f32.xlu0 %v643
        %v667 = vpop.xlane.xlu0 %666
        %668 = vadd.xlane.f32.xlu0 %v644
        %v669 = vpop.xlane.xlu0 %668
        %670 = vadd.xlane.f32.xlu0 %v645
        %v671 = vpop.xlane.xlu0 %670
        %672 = vadd.xlane.f32.xlu0 %v646
        %v673 = vpop.xlane.xlu0 %672
        %674 = vadd.xlane.f32.xlu0 %v647
        %v675 = vpop.xlane.xlu0 %674
        %676 = vadd.xlane.f32.xlu0 %v648
        %v677 = vpop.xlane.xlu0 %676
        %678 = vadd.xlane.f32.xlu0 %v649
        %v679 = vpop.xlane.xlu0 %678
        %680 = vadd.xlane.f32.xlu0 %v650
        %v681 = vpop.xlane.xlu0 %680
        %682 = vadd.xlane.f32.xlu0 %v651
        %v683 = vpop.xlane.xlu0 %682
        %v684 = vmul.f32 %v653, %v603
        %v685 = vmul.f32 %v655, %v603
        %v686 = vmul.f32 %v657, %v603
        %v687 = vmul.f32 %v659, %v603
        %v688 = vmul.f32 %v661, %v603
        %v689 = vmul.f32 %v663, %v603
        %v690 = vmul.f32 %v665, %v603
        %v691 = vmul.f32 %v667, %v603
        %v692 = vmul.f32 %v669, %v603
        %v693 = vmul.f32 %v671, %v603
        %v694 = vmul.f32 %v673, %v603
        %v695 = vmul.f32 %v675, %v603
        %v696 = vmul.f32 %v677, %v603
        %v697 = vmul.f32 %v679, %v603
        %v698 = vmul.f32 %v681, %v603
        %v699 = vmul.f32 %v683, %v603
        %v700 = vadd.f32 %v684, 1e-05
        %v701 = vadd.f32 %v685, 1e-05
        %v702 = vadd.f32 %v686, 1e-05
        %v703 = vadd.f32 %v687, 1e-05
        %v704 = vadd.f32 %v688, 1e-05
        %v705 = vadd.f32 %v689, 1e-05
        %v706 = vadd.f32 %v690, 1e-05
        %v707 = vadd.f32 %v691, 1e-05
        %v708 = vadd.f32 %v692, 1e-05
        %v709 = vadd.f32 %v693, 1e-05
        %v710 = vadd.f32 %v694, 1e-05
        %v711 = vadd.f32 %v695, 1e-05
        %v712 = vadd.f32 %v696, 1e-05
        %v713 = vadd.f32 %v697, 1e-05
        %v714 = vadd.f32 %v698, 1e-05
        %v715 = vadd.f32 %v699, 1e-05
        %v716 = vrsqrt.pop %v700
        %v717 = vrsqrt.pop %v701
        %v718 = vrsqrt.pop %v702
        %v719 = vrsqrt.pop %v703
        %v720 = vrsqrt.pop %v704
        %v721 = vrsqrt.pop %v705
        %v722 = vrsqrt.pop %v706
        %v723 = vrsqrt.pop %v707
        %v724 = vrsqrt.pop %v708
        %v725 = vrsqrt.pop %v709
        %v726 = vrsqrt.pop %v710
        %v727 = vrsqrt.pop %v711
        %v728 = vrsqrt.pop %v712
        %v729 = vrsqrt.pop %v713
        %v730 = vrsqrt.pop %v714
        %v731 = vrsqrt.pop %v715
        %v732 = vmul.f32 %v620, %v716
        %v733 = vmul.f32 %v621, %v717
        %v734 = vmul.f32 %v622, %v718
        %v735 = vmul.f32 %v623, %v719
        %v736 = vmul.f32 %v624, %v720
        %v737 = vmul.f32 %v625, %v721
        %v738 = vmul.f32 %v626, %v722
        %v739 = vmul.f32 %v627, %v723
        %v740 = vmul.f32 %v628, %v724
        %v741 = vmul.f32 %v629, %v725
        %v742 = vmul.f32 %v630, %v726
        %v743 = vmul.f32 %v631, %v727
        %v744 = vmul.f32 %v632, %v728
        %v745 = vmul.f32 %v633, %v729
        %v746 = vmul.f32 %v634, %v730
        %v747 = vmul.f32 %v635, %v731
        %v748 = vlaneseq
        %v749 = vshrl.u32 %v748, 7
        %v750 = vsub.s32 0, %v749
        %v751 = vrot.slane %v568, %v750
        %v752 = vmul.f32 %v732, %v751
        %v753 = vmul.f32 %v733, %v751
        %v754 = vmul.f32 %v734, %v751
        %v755 = vmul.f32 %v735, %v751
        %v756 = vmul.f32 %v736, %v751
        %v757 = vmul.f32 %v737, %v751
        %v758 = vmul.f32 %v738, %v751
        %v759 = vmul.f32 %v739, %v751
        %v760 = vmul.f32 %v740, %v751
        %v761 = vmul.f32 %v741, %v751
        %v762 = vmul.f32 %v742, %v751
        %v763 = vmul.f32 %v743, %v751
        %v764 = vmul.f32 %v744, %v751
        %v765 = vmul.f32 %v745, %v751
        %v766 = vmul.f32 %v746, %v751
        %v767 = vmul.f32 %v747, %v751
        %v768 = vlaneseq
        %v769 = vshrl.u32 %v768, 7
        %v770 = vsub.s32 1, %v769
        %v771 = vrot.slane %v568, %v770
        %v772 = vadd.f32 %v752, %v771
        %v773 = vadd.f32 %v753, %v771
        %v774 = vadd.f32 %v754, %v771
        %v775 = vadd.f32 %v755, %v771
        %v776 = vadd.f32 %v756, %v771
        %v777 = vadd.f32 %v757, %v771
        %v778 = vadd.f32 %v758, %v771
        %v779 = vadd.f32 %v759, %v771
        %v780 = vadd.f32 %v760, %v771
        %v781 = vadd.f32 %v761, %v771
        %v782 = vadd.f32 %v762, %v771
        %v783 = vadd.f32 %v763, %v771
        %v784 = vadd.f32 %v764, %v771
        %v785 = vadd.f32 %v765, %v771
        %v786 = vadd.f32 %v766, %v771
        %v787 = vadd.f32 %v767, %v771
        %v788 = vld [vmem:[%s429] sm:$0xff]
        %v789 = vld [vmem:[%s429 + $0x8] sm:$0xff]
        %v790 = vld [vmem:[%s429 + $0x10] sm:$0xff]
        %v791 = vld [vmem:[%s429 + $0x18] sm:$0xff]
        %v792 = vld [vmem:[%s429 + $0x20] sm:$0xff]
        %v793 = vld [vmem:[%s429 + $0x28] sm:$0xff]
        %v794 = vld [vmem:[%s429 + $0x30] sm:$0xff]
        %v795 = vld [vmem:[%s429 + $0x38] sm:$0xff]
        %v796 = vld [vmem:[%s429 + $0x40] sm:$0xff]
        %v797 = vld [vmem:[%s429 + $0x48] sm:$0xff]
        %v798 = vld [vmem:[%s429 + $0x50] sm:$0xff]
        %v799 = vld [vmem:[%s429 + $0x58] sm:$0xff]
        %v800 = vld [vmem:[%s429 + $0x60] sm:$0xff]
        %v801 = vld [vmem:[%s429 + $0x68] sm:$0xff]
        %v802 = vld [vmem:[%s429 + $0x70] sm:$0xff]
        %v803 = vld [vmem:[%s429 + $0x78] sm:$0xff]
        %v804 = vunpack.c.l.bf16 %v788
        %v805 = vunpack.c.h.bf16 %v788
        %v806 = vunpack.c.l.bf16 %v789
        %v807 = vunpack.c.h.bf16 %v789
        %v808 = vunpack.c.l.bf16 %v790
        %v809 = vunpack.c.h.bf16 %v790
        %v810 = vunpack.c.l.bf16 %v791
        %v811 = vunpack.c.h.bf16 %v791
        %v812 = vunpack.c.l.bf16 %v792
        %v813 = vunpack.c.h.bf16 %v792
        %v814 = vunpack.c.l.bf16 %v793
        %v815 = vunpack.c.h.bf16 %v793
        %v816 = vunpack.c.l.bf16 %v794
        %v817 = vunpack.c.h.bf16 %v794
        %v818 = vunpack.c.l.bf16 %v795
        %v819 = vunpack.c.h.bf16 %v795
        %v820 = vunpack.c.l.bf16 %v796
        %v821 = vunpack.c.h.bf16 %v796
        %v822 = vunpack.c.l.bf16 %v797
        %v823 = vunpack.c.h.bf16 %v797
        %v824 = vunpack.c.l.bf16 %v798
        %v825 = vunpack.c.h.bf16 %v798
        %v826 = vunpack.c.l.bf16 %v799
        %v827 = vunpack.c.h.bf16 %v799
        %v828 = vunpack.c.l.bf16 %v800
        %v829 = vunpack.c.h.bf16 %v800
        %v830 = vunpack.c.l.bf16 %v801
        %v831 = vunpack.c.h.bf16 %v801
        %v832 = vunpack.c.l.bf16 %v802
        %v833 = vunpack.c.h.bf16 %v802
        %v834 = vunpack.c.l.bf16 %v803
        %v835 = vunpack.c.h.bf16 %v803
        %v836 = vld [vmem:[%s438] sm:$0xff]
        %v837 = vld [vmem:[%s438 + $0x8] sm:$0xff]
        %v838 = vld [vmem:[%s438 + $0x10] sm:$0xff]
        %v839 = vld [vmem:[%s438 + $0x18] sm:$0xff]
        %v840 = vld [vmem:[%s438 + $0x20] sm:$0xff]
        %v841 = vld [vmem:[%s438 + $0x28] sm:$0xff]
        %v842 = vld [vmem:[%s438 + $0x30] sm:$0xff]
        %v843 = vld [vmem:[%s438 + $0x38] sm:$0xff]
        %v844 = vld [vmem:[%s438 + $0x40] sm:$0xff]
        %v845 = vld [vmem:[%s438 + $0x48] sm:$0xff]
        %v846 = vld [vmem:[%s438 + $0x50] sm:$0xff]
        %v847 = vld [vmem:[%s438 + $0x58] sm:$0xff]
        %v848 = vld [vmem:[%s438 + $0x60] sm:$0xff]
        %v849 = vld [vmem:[%s438 + $0x68] sm:$0xff]
        %v850 = vld [vmem:[%s438 + $0x70] sm:$0xff]
        %v851 = vld [vmem:[%s438 + $0x78] sm:$0xff]
        %v852 = vld [vmem:[%s438 + $0x80] sm:$0xff]
        %v853 = vld [vmem:[%s438 + $0x88] sm:$0xff]
        %v854 = vld [vmem:[%s438 + $0x90] sm:$0xff]
        %v855 = vld [vmem:[%s438 + $0x98] sm:$0xff]
        %v856 = vld [vmem:[%s438 + $0xa0] sm:$0xff]
        %v857 = vld [vmem:[%s438 + $0xa8] sm:$0xff]
        %v858 = vld [vmem:[%s438 + $0xb0] sm:$0xff]
        %v859 = vld [vmem:[%s438 + $0xb8] sm:$0xff]
        %v860 = vld [vmem:[%s438 + $0xc0] sm:$0xff]
        %v861 = vld [vmem:[%s438 + $0xc8] sm:$0xff]
        %v862 = vld [vmem:[%s438 + $0xd0] sm:$0xff]
        %v863 = vld [vmem:[%s438 + $0xd8] sm:$0xff]
        %v864 = vld [vmem:[%s438 + $0xe0] sm:$0xff]
        %v865 = vld [vmem:[%s438 + $0xe8] sm:$0xff]
        %v866 = vld [vmem:[%s438 + $0xf0] sm:$0xff]
        %v867 = vld [vmem:[%s438 + $0xf8] sm:$0xff]
        %v868 = vunpack.c.l.bf16 %v836
        %v869 = vunpack.c.h.bf16 %v836
        %v870 = vunpack.c.l.bf16 %v837
        %v871 = vunpack.c.h.bf16 %v837
        %v872 = vunpack.c.l.bf16 %v838
        %v873 = vunpack.c.h.bf16 %v838
        %v874 = vunpack.c.l.bf16 %v839
        %v875 = vunpack.c.h.bf16 %v839
        %v876 = vunpack.c.l.bf16 %v840
        %v877 = vunpack.c.h.bf16 %v840
        %v878 = vunpack.c.l.bf16 %v841
        %v879 = vunpack.c.h.bf16 %v841
        %v880 = vunpack.c.l.bf16 %v842
        %v881 = vunpack.c.h.bf16 %v842
        %v882 = vunpack.c.l.bf16 %v843
        %v883 = vunpack.c.h.bf16 %v843
        %v884 = vunpack.c.l.bf16 %v844
        %v885 = vunpack.c.h.bf16 %v844
        %v886 = vunpack.c.l.bf16 %v845
        %v887 = vunpack.c.h.bf16 %v845
        %v888 = vunpack.c.l.bf16 %v846
        %v889 = vunpack.c.h.bf16 %v846
        %v890 = vunpack.c.l.bf16 %v847
        %v891 = vunpack.c.h.bf16 %v847
        %v892 = vunpack.c.l.bf16 %v848
        %v893 = vunpack.c.h.bf16 %v848
        %v894 = vunpack.c.l.bf16 %v849
        %v895 = vunpack.c.h.bf16 %v849
        %v896 = vunpack.c.l.bf16 %v850
        %v897 = vunpack.c.h.bf16 %v850
        %v898 = vunpack.c.l.bf16 %v851
        %v899 = vunpack.c.h.bf16 %v851
        %v900 = vunpack.c.l.bf16 %v852
        %v901 = vunpack.c.h.bf16 %v852
        %v902 = vunpack.c.l.bf16 %v853
        %v903 = vunpack.c.h.bf16 %v853
        %v904 = vunpack.c.l.bf16 %v854
        %v905 = vunpack.c.h.bf16 %v854
        %v906 = vunpack.c.l.bf16 %v855
        %v907 = vunpack.c.h.bf16 %v855
        %v908 = vunpack.c.l.bf16 %v856
        %v909 = vunpack.c.h.bf16 %v856
        %v910 = vunpack.c.l.bf16 %v857
        %v911 = vunpack.c.h.bf16 %v857
        %v912 = vunpack.c.l.bf16 %v858
        %v913 = vunpack.c.h.bf16 %v858
        %v914 = vunpack.c.l.bf16 %v859
        %v915 = vunpack.c.h.bf16 %v859
        %v916 = vunpack.c.l.bf16 %v860
        %v917 = vunpack.c.h.bf16 %v860
        %v918 = vunpack.c.l.bf16 %v861
        %v919 = vunpack.c.h.bf16 %v861
        %v920 = vunpack.c.l.bf16 %v862
        %v921 = vunpack.c.h.bf16 %v862
        %v922 = vunpack.c.l.bf16 %v863
        %v923 = vunpack.c.h.bf16 %v863
        %v924 = vunpack.c.l.bf16 %v864
        %v925 = vunpack.c.h.bf16 %v864
        %v926 = vunpack.c.l.bf16 %v865
        %v927 = vunpack.c.h.bf16 %v865
        %v928 = vunpack.c.l.bf16 %v866
        %v929 = vunpack.c.h.bf16 %v866
        %v930 = vunpack.c.l.bf16 %v867
        %v931 = vunpack.c.h.bf16 %v867
        %v932 = vld [vmem:[%s447] sm:$0xf]
        %v933 = vld [vmem:[%s447 + $0x4] sm:$0xf]
        %v934 = vld [vmem:[%s447 + $0x8] sm:$0xf]
        %v935 = vld [vmem:[%s447 + $0xc] sm:$0xf]
        %v936 = vld [vmem:[%s447 + $0x10] sm:$0xf]
        %v937 = vld [vmem:[%s447 + $0x14] sm:$0xf]
        %v938 = vld [vmem:[%s447 + $0x18] sm:$0xf]
        %v939 = vld [vmem:[%s447 + $0x1c] sm:$0xf]
        %v940 = vld [vmem:[%s447 + $0x20] sm:$0xf]
        %v941 = vld [vmem:[%s447 + $0x24] sm:$0xf]
        %v942 = vld [vmem:[%s447 + $0x28] sm:$0xf]
        %v943 = vld [vmem:[%s447 + $0x2c] sm:$0xf]
        %v944 = vld [vmem:[%s447 + $0x30] sm:$0xf]
        %v945 = vld [vmem:[%s447 + $0x34] sm:$0xf]
        %v946 = vld [vmem:[%s447 + $0x38] sm:$0xf]
        %v947 = vld [vmem:[%s447 + $0x3c] sm:$0xf]
        %v948 = vld [vmem:[%s447 + $0x40] sm:$0xf]
        %v949 = vld [vmem:[%s447 + $0x44] sm:$0xf]
        %v950 = vld [vmem:[%s447 + $0x48] sm:$0xf]
        %v951 = vld [vmem:[%s447 + $0x4c] sm:$0xf]
        %v952 = vld [vmem:[%s447 + $0x50] sm:$0xf]
        %v953 = vld [vmem:[%s447 + $0x54] sm:$0xf]
        %v954 = vld [vmem:[%s447 + $0x58] sm:$0xf]
        %v955 = vld [vmem:[%s447 + $0x5c] sm:$0xf]
        %v956 = vld [vmem:[%s447 + $0x60] sm:$0xf]
        %v957 = vld [vmem:[%s447 + $0x64] sm:$0xf]
        %v958 = vld [vmem:[%s447 + $0x68] sm:$0xf]
        %v959 = vld [vmem:[%s447 + $0x6c] sm:$0xf]
        %v960 = vld [vmem:[%s447 + $0x70] sm:$0xf]
        %v961 = vld [vmem:[%s447 + $0x74] sm:$0xf]
        %v962 = vld [vmem:[%s447 + $0x78] sm:$0xf]
        %v963 = vld [vmem:[%s447 + $0x7c] sm:$0xf]
        %v964 = vunpack.c.l.bf16 %v932
        %v965 = vunpack.c.l.bf16 %v933
        %v966 = vunpack.c.l.bf16 %v934
        %v967 = vunpack.c.l.bf16 %v935
        %v968 = vunpack.c.l.bf16 %v936
        %v969 = vunpack.c.l.bf16 %v937
        %v970 = vunpack.c.l.bf16 %v938
        %v971 = vunpack.c.l.bf16 %v939
        %v972 = vunpack.c.l.bf16 %v940
        %v973 = vunpack.c.l.bf16 %v941
        %v974 = vunpack.c.l.bf16 %v942
        %v975 = vunpack.c.l.bf16 %v943
        %v976 = vunpack.c.l.bf16 %v944
        %v977 = vunpack.c.l.bf16 %v945
        %v978 = vunpack.c.l.bf16 %v946
        %v979 = vunpack.c.l.bf16 %v947
        %v980 = vunpack.c.l.bf16 %v948
        %v981 = vunpack.c.l.bf16 %v949
        %v982 = vunpack.c.l.bf16 %v950
        %v983 = vunpack.c.l.bf16 %v951
        %v984 = vunpack.c.l.bf16 %v952
        %v985 = vunpack.c.l.bf16 %v953
        %v986 = vunpack.c.l.bf16 %v954
        %v987 = vunpack.c.l.bf16 %v955
        %v988 = vunpack.c.l.bf16 %v956
        %v989 = vunpack.c.l.bf16 %v957
        %v990 = vunpack.c.l.bf16 %v958
        %v991 = vunpack.c.l.bf16 %v959
        %v992 = vunpack.c.l.bf16 %v960
        %v993 = vunpack.c.l.bf16 %v961
        %v994 = vunpack.c.l.bf16 %v962
        %v995 = vunpack.c.l.bf16 %v963
        %996 = vmatprep.subr.mxu0 %v805
        %997 = vmatpush1.msra.mxu0 %v804
        %998 = vmatprep.subr.mxu0 %v807
        %999 = vmatpush1.msra.mxu0 %v806
        %1000 = vmatprep.subr.mxu0 %v809
        %1001 = vmatpush1.msra.mxu0 %v808
        %1002 = vmatprep.subr.mxu0 %v811
        %1003 = vmatpush1.msra.mxu0 %v810
        %1004 = vmatprep.subr.mxu0 %v813
        %1005 = vmatpush1.msra.mxu0 %v812
        %1006 = vmatprep.subr.mxu0 %v815
        %1007 = vmatpush1.msra.mxu0 %v814
        %1008 = vmatprep.subr.mxu0 %v817
        %1009 = vmatpush1.msra.mxu0 %v816
        %1010 = vmatprep.subr.mxu0 %v819
        %1011 = vmatpush1.msra.mxu0 %v818
        %1012 = vmatprep.subr.mxu0 %v821
        %1013 = vmatpush1.msra.mxu0 %v820
        %1014 = vmatprep.subr.mxu0 %v823
        %1015 = vmatpush1.msra.mxu0 %v822
        %1016 = vmatprep.subr.mxu0 %v825
        %1017 = vmatpush1.msra.mxu0 %v824
        %1018 = vmatprep.subr.mxu0 %v827
        %1019 = vmatpush1.msra.mxu0 %v826
        %1020 = vmatprep.subr.mxu0 %v829
        %1021 = vmatpush1.msra.mxu0 %v828
        %1022 = vmatprep.subr.mxu0 %v831
        %1023 = vmatpush1.msra.mxu0 %v830
        %1024 = vmatprep.subr.mxu0 %v833
        %1025 = vmatpush1.msra.mxu0 %v832
        %1026 = vmatprep.subr.mxu0 %v835
        %1027 = vmatpush1.msra.mxu0 %v834
        %1028 = vmatprep.subr.mxu0 0.0
        %1029 = vmatpush1.msra.mxu0 0.0
        %1030 = vmatprep.subr.mxu0 0.0
        %1031 = vmatpush1.msra.mxu0 0.0
        %1032 = vmatprep.subr.mxu0 0.0
        %1033 = vmatpush1.msra.mxu0 0.0
        %1034 = vmatprep.subr.mxu0 0.0
        %1035 = vmatpush1.msra.mxu0 0.0
        %1036 = vmatprep.subr.mxu0 0.0
        %1037 = vmatpush1.msra.mxu0 0.0
        %1038 = vmatprep.subr.mxu0 0.0
        %1039 = vmatpush1.msra.mxu0 0.0
        %1040 = vmatprep.subr.mxu0 0.0
        %1041 = vmatpush1.msra.mxu0 0.0
        %1042 = vmatprep.subr.mxu0 0.0
        %1043 = vmatpush1.msra.mxu0 0.0
        %1044 = vmatprep.subr.mxu0 0.0
        %1045 = vmatpush1.msra.mxu0 0.0
        %1046 = vmatprep.subr.mxu0 0.0
        %1047 = vmatpush1.msra.mxu0 0.0
        %1048 = vmatprep.subr.mxu0 0.0
        %1049 = vmatpush1.msra.mxu0 0.0
        %1050 = vmatprep.subr.mxu0 0.0
        %1051 = vmatpush1.msra.mxu0 0.0
        %1052 = vmatprep.subr.mxu0 0.0
        %1053 = vmatpush1.msra.mxu0 0.0
        %1054 = vmatprep.subr.mxu0 0.0
        %1055 = vmatpush1.msra.mxu0 0.0
        %1056 = vmatprep.subr.mxu0 0.0
        %1057 = vmatpush1.msra.mxu0 0.0
        %1058 = vmatprep.subr.mxu0 0.0
        %1059 = vmatpush1.msra.mxu0 0.0
        %1060 = vmatprep.mubr.f32.mxu0 0.0
        %1061 = vmatmul.mubr.f32.gmra.mrb[0].mxu0 %v772
        %v1062 = vpop.f32.mrb[0].mxu0
        %v1063 = vadd.f32 0.0, %v1062
        %v1064 = vpop.f32.mrb[0].mxu0
        %v1065 = vadd.f32 0.0, %v1064
        %1066 = vmatprep.mubr.f32.mxu0 0.0
        %1067 = vmatmul.mubr.f32.gmra.mrb[0].mxu0 %v773
        %v1068 = vpop.f32.mrb[0].mxu0
        %v1069 = vadd.f32 0.0, %v1068
        %v1070 = vpop.f32.mrb[0].mxu0
        %v1071 = vadd.f32 0.0, %v1070
        %1072 = vmatprep.mubr.f32.mxu0 0.0
        %1073 = vmatmul.mubr.f32.gmra.mrb[0].mxu0 %v774
        %v1074 = vpop.f32.mrb[0].mxu0
        %v1075 = vadd.f32 0.0, %v1074
        %v1076 = vpop.f32.mrb[0].mxu0
        %v1077 = vadd.f32 0.0, %v1076
        %1078 = vmatprep.mubr.f32.mxu0 0.0
        %1079 = vmatmul.mubr.f32.gmra.mrb[0].mxu0 %v775
        %v1080 = vpop.f32.mrb[0].mxu0
        %v1081 = vadd.f32 0.0, %v1080
        %v1082 = vpop.f32.mrb[0].mxu0
        %v1083 = vadd.f32 0.0, %v1082
        %1084 = vmatprep.mubr.f32.mxu0 0.0
        %1085 = vmatmul.mubr.f32.gmra.mrb[0].mxu0 %v776
        %v1086 = vpop.f32.mrb[0].mxu0
        %v1087 = vadd.f32 0.0, %v1086
        %v1088 = vpop.f32.mrb[0].mxu0
        %v1089 = vadd.f32 0.0, %v1088
        %1090 = vmatprep.mubr.f32.mxu0 0.0
        %1091 = vmatmul.mubr.f32.gmra.mrb[0].mxu0 %v777
        %v1092 = vpop.f32.mrb[0].mxu0
        %v1093 = vadd.f32 0.0, %v1092
        %v1094 = vpop.f32.mrb[0].mxu0
        %v1095 = vadd.f32 0.0, %v1094
        %1096 = vmatprep.mubr.f32.mxu0 0.0
        %1097 = vmatmul.mubr.f32.gmra.mrb[0].mxu0 %v778
        %v1098 = vpop.f32.mrb[0].mxu0
        %v1099 = vadd.f32 0.0, %v1098
        %v1100 = vpop.f32.mrb[0].mxu0
        %v1101 = vadd.f32 0.0, %v1100
        %1102 = vmatprep.mubr.f32.mxu0 0.0
        %1103 = vmatmul.mubr.f32.gmra.mrb[0].mxu0 %v779
        %v1104 = vpop.f32.mrb[0].mxu0
        %v1105 = vadd.f32 0.0, %v1104
        %v1106 = vpop.f32.mrb[0].mxu0
        %v1107 = vadd.f32 0.0, %v1106
        %1108 = vmatprep.mubr.f32.mxu0 0.0
        %1109 = vmatmul.mubr.f32.gmra.mrb[0].mxu0 %v780
        %v1110 = vpop.f32.mrb[0].mxu0
        %v1111 = vadd.f32 0.0, %v1110
        %v1112 = vpop.f32.mrb[0].mxu0
        %v1113 = vadd.f32 0.0, %v1112
        %1114 = vmatprep.mubr.f32.mxu0 0.0
        %1115 = vmatmul.mubr.f32.gmra.mrb[0].mxu0 %v781
        %v1116 = vpop.f32.mrb[0].mxu0
        %v1117 = vadd.f32 0.0, %v1116
        %v1118 = vpop.f32.mrb[0].mxu0
        %v1119 = vadd.f32 0.0, %v1118
        %1120 = vmatprep.mubr.f32.mxu0 0.0
        %1121 = vmatmul.mubr.f32.gmra.mrb[0].mxu0 %v782
        %v1122 = vpop.f32.mrb[0].mxu0
        %v1123 = vadd.f32 0.0, %v1122
        %v1124 = vpop.f32.mrb[0].mxu0
        %v1125 = vadd.f32 0.0, %v1124
        %1126 = vmatprep.mubr.f32.mxu0 0.0
        %1127 = vmatmul.mubr.f32.gmra.mrb[0].mxu0 %v783
        %v1128 = vpop.f32.mrb[0].mxu0
        %v1129 = vadd.f32 0.0, %v1128
        %v1130 = vpop.f32.mrb[0].mxu0
        %v1131 = vadd.f32 0.0, %v1130
        %1132 = vmatprep.mubr.f32.mxu0 0.0
        %1133 = vmatmul.mubr.f32.gmra.mrb[0].mxu0 %v784
        %v1134 = vpop.f32.mrb[0].mxu0
        %v1135 = vadd.f32 0.0, %v1134
        %v1136 = vpop.f32.mrb[0].mxu0
        %v1137 = vadd.f32 0.0, %v1136
        %1138 = vmatprep.mubr.f32.mxu0 0.0
        %1139 = vmatmul.mubr.f32.gmra.mrb[0].mxu0 %v785
        %v1140 = vpop.f32.mrb[0].mxu0
        %v1141 = vadd.f32 0.0, %v1140
        %v1142 = vpop.f32.mrb[0].mxu0
        %v1143 = vadd.f32 0.0, %v1142
        %1144 = vmatprep.mubr.f32.mxu0 0.0
        %1145 = vmatmul.mubr.f32.gmra.mrb[0].mxu0 %v786
        %v1146 = vpop.f32.mrb[0].mxu0
        %v1147 = vadd.f32 0.0, %v1146
        %v1148 = vpop.f32.mrb[0].mxu0
        %v1149 = vadd.f32 0.0, %v1148
        %1150 = vmatprep.mubr.f32.mxu0 0.0
        %1151 = vmatmul.mubr.f32.gmra.mrb[0].mxu0 %v787
        %v1152 = vpop.f32.mrb[0].mxu0
        %v1153 = vadd.f32 0.0, %v1152
        %v1154 = vpop.f32.mrb[0].mxu0
        %v1155 = vadd.f32 0.0, %v1154
        %1156 = vdwg.mxu0
        %1157 = vmatprep.subr.mxu0 %v869
        %1158 = vmatpush1.msra.mxu0 %v868
        %1159 = vmatprep.subr.mxu0 %v873
        %1160 = vmatpush1.msra.mxu0 %v872
        %1161 = vmatprep.subr.mxu0 %v877
        %1162 = vmatpush1.msra.mxu0 %v876
        %1163 = vmatprep.subr.mxu0 %v881
        %1164 = vmatpush1.msra.mxu0 %v880
        %1165 = vmatprep.subr.mxu0 %v885
        %1166 = vmatpush1.msra.mxu0 %v884
        %1167 = vmatprep.subr.mxu0 %v889
        %1168 = vmatpush1.msra.mxu0 %v888
        %1169 = vmatprep.subr.mxu0 %v893
        %1170 = vmatpush1.msra.mxu0 %v892
        %1171 = vmatprep.subr.mxu0 %v897
        %1172 = vmatpush1.msra.mxu0 %v896
        %1173 = vmatprep.subr.mxu0 %v901
        %1174 = vmatpush1.msra.mxu0 %v900
        %1175 = vmatprep.subr.mxu0 %v905
        %1176 = vmatpush1.msra.mxu0 %v904
        %1177 = vmatprep.subr.mxu0 %v909
        %1178 = vmatpush1.msra.mxu0 %v908
        %1179 = vmatprep.subr.mxu0 %v913
        %1180 = vmatpush1.msra.mxu0 %v912
        %1181 = vmatprep.subr.mxu0 %v917
        %1182 = vmatpush1.msra.mxu0 %v916
        %1183 = vmatprep.subr.mxu0 %v921
        %1184 = vmatpush1.msra.mxu0 %v920
        %1185 = vmatprep.subr.mxu0 %v925
        %1186 = vmatpush1.msra.mxu0 %v924
        %1187 = vmatprep.subr.mxu0 %v929
        %1188 = vmatpush1.msra.mxu0 %v928
        %1189 = vmatprep.subr.mxu0 0.0
        %1190 = vmatpush1.msra.mxu0 0.0
        %1191 = vmatprep.subr.mxu0 0.0
        %1192 = vmatpush1.msra.mxu0 0.0
        %1193 = vmatprep.subr.mxu0 0.0
        %1194 = vmatpush1.msra.mxu0 0.0
        %1195 = vmatprep.subr.mxu0 0.0
        %1196 = vmatpush1.msra.mxu0 0.0
        %1197 = vmatprep.subr.mxu0 0.0
        %1198 = vmatpush1.msra.mxu0 0.0
        %1199 = vmatprep.subr.mxu0 0.0
        %1200 = vmatpush1.msra.mxu0 0.0
        %1201 = vmatprep.subr.mxu0 0.0
        %1202 = vmatpush1.msra.mxu0 0.0
        %1203 = vmatprep.subr.mxu0 0.0
        %1204 = vmatpush1.msra.mxu0 0.0
        %1205 = vmatprep.subr.mxu0 0.0
        %1206 = vmatpush1.msra.mxu0 0.0
        %1207 = vmatprep.subr.mxu0 0.0
        %1208 = vmatpush1.msra.mxu0 0.0
        %1209 = vmatprep.subr.mxu0 0.0
        %1210 = vmatpush1.msra.mxu0 0.0
        %1211 = vmatprep.subr.mxu0 0.0
        %1212 = vmatpush1.msra.mxu0 0.0
        %1213 = vmatprep.subr.mxu0 0.0
        %1214 = vmatpush1.msra.mxu0 0.0
        %1215 = vmatprep.subr.mxu0 0.0
        %1216 = vmatpush1.msra.mxu0 0.0
        %1217 = vmatprep.subr.mxu0 0.0
        %1218 = vmatpush1.msra.mxu0 0.0
        %1219 = vmatprep.subr.mxu0 0.0
        %1220 = vmatpush1.msra.mxu0 0.0
        %1221 = vmatprep.mubr.f32.mxu0 0.0
        %1222 = vmatmul.mubr.f32.gmra.mrb[0].mxu0 %v772
        %v1223 = vpop.f32.mrb[0].mxu0
        %v1224 = vadd.f32 0.0, %v1223
        %v1225 = vpop.f32.mrb[0].mxu0
        %v1226 = vadd.f32 0.0, %v1225
        %1227 = vmatprep.mubr.f32.mxu0 0.0
        %1228 = vmatmul.mubr.f32.gmra.mrb[0].mxu0 %v773
        %v1229 = vpop.f32.mrb[0].mxu0
        %v1230 = vadd.f32 0.0, %v1229
        %v1231 = vpop.f32.mrb[0].mxu0
        %v1232 = vadd.f32 0.0, %v1231
        %1233 = vmatprep.mubr.f32.mxu0 0.0
        %1234 = vmatmul.mubr.f32.gmra.mrb[0].mxu0 %v774
        %v1235 = vpop.f32.mrb[0].mxu0
        %v1236 = vadd.f32 0.0, %v1235
        %v1237 = vpop.f32.mrb[0].mxu0
        %v1238 = vadd.f32 0.0, %v1237
        %1239 = vmatprep.mubr.f32.mxu0 0.0
        %1240 = vmatmul.mubr.f32.gmra.mrb[0].mxu0 %v775
        %v1241 = vpop.f32.mrb[0].mxu0
        %v1242 = vadd.f32 0.0, %v1241
        %v1243 = vpop.f32.mrb[0].mxu0
        %v1244 = vadd.f32 0.0, %v1243
        %1245 = vmatprep.mubr.f32.mxu0 0.0
        %1246 = vmatmul.mubr.f32.gmra.mrb[0].mxu0 %v776
        %v1247 = vpop.f32.mrb[0].mxu0
        %v1248 = vadd.f32 0.0, %v1247
        %v1249 = vpop.f32.mrb[0].mxu0
        %v1250 = vadd.f32 0.0, %v1249
        %1251 = vmatprep.mubr.f32.mxu0 0.0
        %1252 = vmatmul.mubr.f32.gmra.mrb[0].mxu0 %v777
        %v1253 = vpop.f32.mrb[0].mxu0
        %v1254 = vadd.f32 0.0, %v1253
        %v1255 = vpop.f32.mrb[0].mxu0
        %v1256 = vadd.f32 0.0, %v1255
        %1257 = vmatprep.mubr.f32.mxu0 0.0
        %1258 = vmatmul.mubr.f32.gmra.mrb[0].mxu0 %v778
        %v1259 = vpop.f32.mrb[0].mxu0
        %v1260 = vadd.f32 0.0, %v1259
        %v1261 = vpop.f32.mrb[0].mxu0
        %v1262 = vadd.f32 0.0, %v1261
        %1263 = vmatprep.mubr.f32.mxu0 0.0
        %1264 = vmatmul.mubr.f32.gmra.mrb[0].mxu0 %v779
        %v1265 = vpop.f32.mrb[0].mxu0
        %v1266 = vadd.f32 0.0, %v1265
        %v1267 = vpop.f32.mrb[0].mxu0
        %v1268 = vadd.f32 0.0, %v1267
        %1269 = vmatprep.mubr.f32.mxu0 0.0
        %1270 = vmatmul.mubr.f32.gmra.mrb[0].mxu0 %v780
        %v1271 = vpop.f32.mrb[0].mxu0
        %v1272 = vadd.f32 0.0, %v1271
        %v1273 = vpop.f32.mrb[0].mxu0
        %v1274 = vadd.f32 0.0, %v1273
        %1275 = vmatprep.mubr.f32.mxu0 0.0
        %1276 = vmatmul.mubr.f32.gmra.mrb[0].mxu0 %v781
        %v1277 = vpop.f32.mrb[0].mxu0
        %v1278 = vadd.f32 0.0, %v1277
        %v1279 = vpop.f32.mrb[0].mxu0
        %v1280 = vadd.f32 0.0, %v1279
        %1281 = vmatprep.mubr.f32.mxu0 0.0
        %1282 = vmatmul.mubr.f32.gmra.mrb[0].mxu0 %v782
        %v1283 = vpop.f32.mrb[0].mxu0
        %v1284 = vadd.f32 0.0, %v1283
        %v1285 = vpop.f32.mrb[0].mxu0
        %v1286 = vadd.f32 0.0, %v1285
        %1287 = vmatprep.mubr.f32.mxu0 0.0
        %1288 = vmatmul.mubr.f32.gmra.mrb[0].mxu0 %v783
        %v1289 = vpop.f32.mrb[0].mxu0
        %v1290 = vadd.f32 0.0, %v1289
        %v1291 = vpop.f32.mrb[0].mxu0
        %v1292 = vadd.f32 0.0, %v1291
        %1293 = vmatprep.mubr.f32.mxu0 0.0
        %1294 = vmatmul.mubr.f32.gmra.mrb[0].mxu0 %v784
        %v1295 = vpop.f32.mrb[0].mxu0
        %v1296 = vadd.f32 0.0, %v1295
        %v1297 = vpop.f32.mrb[0].mxu0
        %v1298 = vadd.f32 0.0, %v1297
        %1299 = vmatprep.mubr.f32.mxu0 0.0
        %1300 = vmatmul.mubr.f32.gmra.mrb[0].mxu0 %v785
        %v1301 = vpop.f32.mrb[0].mxu0
        %v1302 = vadd.f32 0.0, %v1301
        %v1303 = vpop.f32.mrb[0].mxu0
        %v1304 = vadd.f32 0.0, %v1303
        %1305 = vmatprep.mubr.f32.mxu0 0.0
        %1306 = vmatmul.mubr.f32.gmra.mrb[0].mxu0 %v786
        %v1307 = vpop.f32.mrb[0].mxu0
        %v1308 = vadd.f32 0.0, %v1307
        %v1309 = vpop.f32.mrb[0].mxu0
        %v1310 = vadd.f32 0.0, %v1309
        %1311 = vmatprep.mubr.f32.mxu0 0.0
        %1312 = vmatmul.mubr.f32.gmra.mrb[0].mxu0 %v787
        %v1313 = vpop.f32.mrb[0].mxu0
        %v1314 = vadd.f32 0.0, %v1313
        %v1315 = vpop.f32.mrb[0].mxu0
        %v1316 = vadd.f32 0.0, %v1315
        %1317 = vdwg.mxu0
        %1318 = vmatprep.subr.mxu0 %v871
        %1319 = vmatpush1.msra.mxu0 %v870
        %1320 = vmatprep.subr.mxu0 %v875
        %1321 = vmatpush1.msra.mxu0 %v874
        %1322 = vmatprep.subr.mxu0 %v879
        %1323 = vmatpush1.msra.mxu0 %v878
        %1324 = vmatprep.subr.mxu0 %v883
        %1325 = vmatpush1.msra.mxu0 %v882
        %1326 = vmatprep.subr.mxu0 %v887
        %1327 = vmatpush1.msra.mxu0 %v886
        %1328 = vmatprep.subr.mxu0 %v891
        %1329 = vmatpush1.msra.mxu0 %v890
        %1330 = vmatprep.subr.mxu0 %v895
        %1331 = vmatpush1.msra.mxu0 %v894
        %1332 = vmatprep.subr.mxu0 %v899
        %1333 = vmatpush1.msra.mxu0 %v898
        %1334 = vmatprep.subr.mxu0 %v903
        %1335 = vmatpush1.msra.mxu0 %v902
        %1336 = vmatprep.subr.mxu0 %v907
        %1337 = vmatpush1.msra.mxu0 %v906
        %1338 = vmatprep.subr.mxu0 %v911
        %1339 = vmatpush1.msra.mxu0 %v910
        %1340 = vmatprep.subr.mxu0 %v915
        %1341 = vmatpush1.msra.mxu0 %v914
        %1342 = vmatprep.subr.mxu0 %v919
        %1343 = vmatpush1.msra.mxu0 %v918
        %1344 = vmatprep.subr.mxu0 %v923
        %1345 = vmatpush1.msra.mxu0 %v922
        %1346 = vmatprep.subr.mxu0 %v927
        %1347 = vmatpush1.msra.mxu0 %v926
        %1348 = vmatprep.subr.mxu0 %v931
        %1349 = vmatpush1.msra.mxu0 %v930
        %1350 = vmatprep.subr.mxu0 0.0
        %1351 = vmatpush1.msra.mxu0 0.0
        %1352 = vmatprep.subr.mxu0 0.0
        %1353 = vmatpush1.msra.mxu0 0.0
        %1354 = vmatprep.subr.mxu0 0.0
        %1355 = vmatpush1.msra.mxu0 0.0
        %1356 = vmatprep.subr.mxu0 0.0
        %1357 = vmatpush1.msra.mxu0 0.0
        %1358 = vmatprep.subr.mxu0 0.0
        %1359 = vmatpush1.msra.mxu0 0.0
        %1360 = vmatprep.subr.mxu0 0.0
        %1361 = vmatpush1.msra.mxu0 0.0
        %1362 = vmatprep.subr.mxu0 0.0
        %1363 = vmatpush1.msra.mxu0 0.0
        %1364 = vmatprep.subr.mxu0 0.0
        %1365 = vmatpush1.msra.mxu0 0.0
        %1366 = vmatprep.subr.mxu0 0.0
        %1367 = vmatpush1.msra.mxu0 0.0
        %1368 = vmatprep.subr.mxu0 0.0
        %1369 = vmatpush1.msra.mxu0 0.0
        %1370 = vmatprep.subr.mxu0 0.0
        %1371 = vmatpush1.msra.mxu0 0.0
        %1372 = vmatprep.subr.mxu0 0.0
        %1373 = vmatpush1.msra.mxu0 0.0
        %1374 = vmatprep.subr.mxu0 0.0
        %1375 = vmatpush1.msra.mxu0 0.0
        %1376 = vmatprep.subr.mxu0 0.0
        %1377 = vmatpush1.msra.mxu0 0.0
        %1378 = vmatprep.subr.mxu0 0.0
        %1379 = vmatpush1.msra.mxu0 0.0
        %1380 = vmatprep.subr.mxu0 0.0
        %1381 = vmatpush1.msra.mxu0 0.0
        %1382 = vmatprep.mubr.f32.mxu0 0.0
        %1383 = vmatmul.mubr.f32.gmra.mrb[0].mxu0 %v772
        %v1384 = vpop.f32.mrb[0].mxu0
        %v1385 = vadd.f32 0.0, %v1384
        %v1386 = vpop.f32.mrb[0].mxu0
        %v1387 = vadd.f32 0.0, %v1386
        %1388 = vmatprep.mubr.f32.mxu0 0.0
        %1389 = vmatmul.mubr.f32.gmra.mrb[0].mxu0 %v773
        %v1390 = vpop.f32.mrb[0].mxu0
        %v1391 = vadd.f32 0.0, %v1390
        %v1392 = vpop.f32.mrb[0].mxu0
        %v1393 = vadd.f32 0.0, %v1392
        %1394 = vmatprep.mubr.f32.mxu0 0.0
        %1395 = vmatmul.mubr.f32.gmra.mrb[0].mxu0 %v774
        %v1396 = vpop.f32.mrb[0].mxu0
        %v1397 = vadd.f32 0.0, %v1396
        %v1398 = vpop.f32.mrb[0].mxu0
        %v1399 = vadd.f32 0.0, %v1398
        %1400 = vmatprep.mubr.f32.mxu0 0.0
        %1401 = vmatmul.mubr.f32.gmra.mrb[0].mxu0 %v775
        %v1402 = vpop.f32.mrb[0].mxu0
        %v1403 = vadd.f32 0.0, %v1402
        %v1404 = vpop.f32.mrb[0].mxu0
        %v1405 = vadd.f32 0.0, %v1404
        %1406 = vmatprep.mubr.f32.mxu0 0.0
        %1407 = vmatmul.mubr.f32.gmra.mrb[0].mxu0 %v776
        %v1408 = vpop.f32.mrb[0].mxu0
        %v1409 = vadd.f32 0.0, %v1408
        %v1410 = vpop.f32.mrb[0].mxu0
        %v1411 = vadd.f32 0.0, %v1410
        %1412 = vmatprep.mubr.f32.mxu0 0.0
        %1413 = vmatmul.mubr.f32.gmra.mrb[0].mxu0 %v777
        %v1414 = vpop.f32.mrb[0].mxu0
        %v1415 = vadd.f32 0.0, %v1414
        %v1416 = vpop.f32.mrb[0].mxu0
        %v1417 = vadd.f32 0.0, %v1416
        %1418 = vmatprep.mubr.f32.mxu0 0.0
        %1419 = vmatmul.mubr.f32.gmra.mrb[0].mxu0 %v778
        %v1420 = vpop.f32.mrb[0].mxu0
        %v1421 = vadd.f32 0.0, %v1420
        %v1422 = vpop.f32.mrb[0].mxu0
        %v1423 = vadd.f32 0.0, %v1422
        %1424 = vmatprep.mubr.f32.mxu0 0.0
        %1425 = vmatmul.mubr.f32.gmra.mrb[0].mxu0 %v779
        %v1426 = vpop.f32.mrb[0].mxu0
        %v1427 = vadd.f32 0.0, %v1426
        %v1428 = vpop.f32.mrb[0].mxu0
        %v1429 = vadd.f32 0.0, %v1428
        %1430 = vmatprep.mubr.f32.mxu0 0.0
        %1431 = vmatmul.mubr.f32.gmra.mrb[0].mxu0 %v780
        %v1432 = vpop.f32.mrb[0].mxu0
        %v1433 = vadd.f32 0.0, %v1432
        %v1434 = vpop.f32.mrb[0].mxu0
        %v1435 = vadd.f32 0.0, %v1434
        %1436 = vmatprep.mubr.f32.mxu0 0.0
        %1437 = vmatmul.mubr.f32.gmra.mrb[0].mxu0 %v781
        %v1438 = vpop.f32.mrb[0].mxu0
        %v1439 = vadd.f32 0.0, %v1438
        %v1440 = vpop.f32.mrb[0].mxu0
        %v1441 = vadd.f32 0.0, %v1440
        %1442 = vmatprep.mubr.f32.mxu0 0.0
        %1443 = vmatmul.mubr.f32.gmra.mrb[0].mxu0 %v782
        %v1444 = vpop.f32.mrb[0].mxu0
        %v1445 = vadd.f32 0.0, %v1444
        %v1446 = vpop.f32.mrb[0].mxu0
        %v1447 = vadd.f32 0.0, %v1446
        %1448 = vmatprep.mubr.f32.mxu0 0.0
        %1449 = vmatmul.mubr.f32.gmra.mrb[0].mxu0 %v783
        %v1450 = vpop.f32.mrb[0].mxu0
        %v1451 = vadd.f32 0.0, %v1450
        %v1452 = vpop.f32.mrb[0].mxu0
        %v1453 = vadd.f32 0.0, %v1452
        %1454 = vmatprep.mubr.f32.mxu0 0.0
        %1455 = vmatmul.mubr.f32.gmra.mrb[0].mxu0 %v784
        %v1456 = vpop.f32.mrb[0].mxu0
        %v1457 = vadd.f32 0.0, %v1456
        %v1458 = vpop.f32.mrb[0].mxu0
        %v1459 = vadd.f32 0.0, %v1458
        %1460 = vmatprep.mubr.f32.mxu0 0.0
        %1461 = vmatmul.mubr.f32.gmra.mrb[0].mxu0 %v785
        %v1462 = vpop.f32.mrb[0].mxu0
        %v1463 = vadd.f32 0.0, %v1462
        %v1464 = vpop.f32.mrb[0].mxu0
        %v1465 = vadd.f32 0.0, %v1464
        %1466 = vmatprep.mubr.f32.mxu0 0.0
        %1467 = vmatmul.mubr.f32.gmra.mrb[0].mxu0 %v786
        %v1468 = vpop.f32.mrb[0].mxu0
        %v1469 = vadd.f32 0.0, %v1468
        %v1470 = vpop.f32.mrb[0].mxu0
        %v1471 = vadd.f32 0.0, %v1470
        %1472 = vmatprep.mubr.f32.mxu0 0.0
        %1473 = vmatmul.mubr.f32.gmra.mrb[0].mxu0 %v787
        %v1474 = vpop.f32.mrb[0].mxu0
        %v1475 = vadd.f32 0.0, %v1474
        %v1476 = vpop.f32.mrb[0].mxu0
        %v1477 = vadd.f32 0.0, %v1476
        %1478 = vdwg.mxu0
        %v1479 = vmul.f32 %v1063, %v1063
        %v1480 = vmul.f32 %v1069, %v1069
        %v1481 = vmul.f32 %v1075, %v1075
        %v1482 = vmul.f32 %v1081, %v1081
        %v1483 = vmul.f32 %v1087, %v1087
        %v1484 = vmul.f32 %v1093, %v1093
        %v1485 = vmul.f32 %v1099, %v1099
        %v1486 = vmul.f32 %v1105, %v1105
        %v1487 = vmul.f32 %v1111, %v1111
        %v1488 = vmul.f32 %v1117, %v1117
        %v1489 = vmul.f32 %v1123, %v1123
        %v1490 = vmul.f32 %v1129, %v1129
        %v1491 = vmul.f32 %v1135, %v1135
        %v1492 = vmul.f32 %v1141, %v1141
        %v1493 = vmul.f32 %v1147, %v1147
        %v1494 = vmul.f32 %v1153, %v1153
        %1495 = vadd.xlane.f32.xlu0 %v1479
        %v1496 = vpop.xlane.xlu0 %1495
        %1497 = vadd.xlane.f32.xlu0 %v1480
        %v1498 = vpop.xlane.xlu0 %1497
        %1499 = vadd.xlane.f32.xlu0 %v1481
        %v1500 = vpop.xlane.xlu0 %1499
        %1501 = vadd.xlane.f32.xlu0 %v1482
        %v1502 = vpop.xlane.xlu0 %1501
        %1503 = vadd.xlane.f32.xlu0 %v1483
        %v1504 = vpop.xlane.xlu0 %1503
        %1505 = vadd.xlane.f32.xlu0 %v1484
        %v1506 = vpop.xlane.xlu0 %1505
        %1507 = vadd.xlane.f32.xlu0 %v1485
        %v1508 = vpop.xlane.xlu0 %1507
        %1509 = vadd.xlane.f32.xlu0 %v1486
        %v1510 = vpop.xlane.xlu0 %1509
        %1511 = vadd.xlane.f32.xlu0 %v1487
        %v1512 = vpop.xlane.xlu0 %1511
        %1513 = vadd.xlane.f32.xlu0 %v1488
        %v1514 = vpop.xlane.xlu0 %1513
        %1515 = vadd.xlane.f32.xlu0 %v1489
        %v1516 = vpop.xlane.xlu0 %1515
        %1517 = vadd.xlane.f32.xlu0 %v1490
        %v1518 = vpop.xlane.xlu0 %1517
        %1519 = vadd.xlane.f32.xlu0 %v1491
        %v1520 = vpop.xlane.xlu0 %1519
        %1521 = vadd.xlane.f32.xlu0 %v1492
        %v1522 = vpop.xlane.xlu0 %1521
        %1523 = vadd.xlane.f32.xlu0 %v1493
        %v1524 = vpop.xlane.xlu0 %1523
        %1525 = vadd.xlane.f32.xlu0 %v1494
        %v1526 = vpop.xlane.xlu0 %1525
        %v1527 = vmax.f32 %v1496, 1e-24
        %v1528 = vmax.f32 %v1498, 1e-24
        %v1529 = vmax.f32 %v1500, 1e-24
        %v1530 = vmax.f32 %v1502, 1e-24
        %v1531 = vmax.f32 %v1504, 1e-24
        %v1532 = vmax.f32 %v1506, 1e-24
        %v1533 = vmax.f32 %v1508, 1e-24
        %v1534 = vmax.f32 %v1510, 1e-24
        %v1535 = vmax.f32 %v1512, 1e-24
        %v1536 = vmax.f32 %v1514, 1e-24
        %v1537 = vmax.f32 %v1516, 1e-24
        %v1538 = vmax.f32 %v1518, 1e-24
        %v1539 = vmax.f32 %v1520, 1e-24
        %v1540 = vmax.f32 %v1522, 1e-24
        %v1541 = vmax.f32 %v1524, 1e-24
        %v1542 = vmax.f32 %v1526, 1e-24
        %v1543 = vrsqrt.pop %v1527
        %v1544 = vrsqrt.pop %v1528
        %v1545 = vrsqrt.pop %v1529
        %v1546 = vrsqrt.pop %v1530
        %v1547 = vrsqrt.pop %v1531
        %v1548 = vrsqrt.pop %v1532
        %v1549 = vrsqrt.pop %v1533
        %v1550 = vrsqrt.pop %v1534
        %v1551 = vrsqrt.pop %v1535
        %v1552 = vrsqrt.pop %v1536
        %v1553 = vrsqrt.pop %v1537
        %v1554 = vrsqrt.pop %v1538
        %v1555 = vrsqrt.pop %v1539
        %v1556 = vrsqrt.pop %v1540
        %v1557 = vrsqrt.pop %v1541
        %v1558 = vrsqrt.pop %v1542
        %v1559 = vmul.f32 %v1063, %v1543
        %v1560 = vmul.f32 %v1069, %v1544
        %v1561 = vmul.f32 %v1075, %v1545
        %v1562 = vmul.f32 %v1081, %v1546
        %v1563 = vmul.f32 %v1087, %v1547
        %v1564 = vmul.f32 %v1093, %v1548
        %v1565 = vmul.f32 %v1099, %v1549
        %v1566 = vmul.f32 %v1105, %v1550
        %v1567 = vmul.f32 %v1111, %v1551
        %v1568 = vmul.f32 %v1117, %v1552
        %v1569 = vmul.f32 %v1123, %v1553
        %v1570 = vmul.f32 %v1129, %v1554
        %v1571 = vmul.f32 %v1135, %v1555
        %v1572 = vmul.f32 %v1141, %v1556
        %v1573 = vmul.f32 %v1147, %v1557
        %v1574 = vmul.f32 %v1153, %v1558
        %v1575 = vlaneseq
        %v1576 = vshrl.u32 %v1575, 7
        %v1577 = vsub.s32 0, %v1576
        %v1578 = vrot.slane %v570, %v1577
        %v1579 = vmul.f32 %v1559, %v1578
        %v1580 = vmul.f32 %v1560, %v1578
        %v1581 = vmul.f32 %v1561, %v1578
        %v1582 = vmul.f32 %v1562, %v1578
        %v1583 = vmul.f32 %v1563, %v1578
        %v1584 = vmul.f32 %v1564, %v1578
        %v1585 = vmul.f32 %v1565, %v1578
        %v1586 = vmul.f32 %v1566, %v1578
        %v1587 = vmul.f32 %v1567, %v1578
        %v1588 = vmul.f32 %v1568, %v1578
        %v1589 = vmul.f32 %v1569, %v1578
        %v1590 = vmul.f32 %v1570, %v1578
        %v1591 = vmul.f32 %v1571, %v1578
        %v1592 = vmul.f32 %v1572, %v1578
        %v1593 = vmul.f32 %v1573, %v1578
        %v1594 = vmul.f32 %v1574, %v1578
        %v1595 = vmul.f32 %v1224, %v1224
        %v1596 = vmul.f32 %v1230, %v1230
        %v1597 = vmul.f32 %v1236, %v1236
        %v1598 = vmul.f32 %v1242, %v1242
        %v1599 = vmul.f32 %v1248, %v1248
        %v1600 = vmul.f32 %v1254, %v1254
        %v1601 = vmul.f32 %v1260, %v1260
        %v1602 = vmul.f32 %v1266, %v1266
        %v1603 = vmul.f32 %v1272, %v1272
        %v1604 = vmul.f32 %v1278, %v1278
        %v1605 = vmul.f32 %v1284, %v1284
        %v1606 = vmul.f32 %v1290, %v1290
        %v1607 = vmul.f32 %v1296, %v1296
        %v1608 = vmul.f32 %v1302, %v1302
        %v1609 = vmul.f32 %v1308, %v1308
        %v1610 = vmul.f32 %v1314, %v1314
        %1611 = vadd.xlane.f32.xlu0 %v1595
        %v1612 = vpop.xlane.xlu0 %1611
        %1613 = vadd.xlane.f32.xlu0 %v1596
        %v1614 = vpop.xlane.xlu0 %1613
        %1615 = vadd.xlane.f32.xlu0 %v1597
        %v1616 = vpop.xlane.xlu0 %1615
        %1617 = vadd.xlane.f32.xlu0 %v1598
        %v1618 = vpop.xlane.xlu0 %1617
        %1619 = vadd.xlane.f32.xlu0 %v1599
        %v1620 = vpop.xlane.xlu0 %1619
        %1621 = vadd.xlane.f32.xlu0 %v1600
        %v1622 = vpop.xlane.xlu0 %1621
        %1623 = vadd.xlane.f32.xlu0 %v1601
        %v1624 = vpop.xlane.xlu0 %1623
        %1625 = vadd.xlane.f32.xlu0 %v1602
        %v1626 = vpop.xlane.xlu0 %1625
        %1627 = vadd.xlane.f32.xlu0 %v1603
        %v1628 = vpop.xlane.xlu0 %1627
        %1629 = vadd.xlane.f32.xlu0 %v1604
        %v1630 = vpop.xlane.xlu0 %1629
        %1631 = vadd.xlane.f32.xlu0 %v1605
        %v1632 = vpop.xlane.xlu0 %1631
        %1633 = vadd.xlane.f32.xlu0 %v1606
        %v1634 = vpop.xlane.xlu0 %1633
        %1635 = vadd.xlane.f32.xlu0 %v1607
        %v1636 = vpop.xlane.xlu0 %1635
        %1637 = vadd.xlane.f32.xlu0 %v1608
        %v1638 = vpop.xlane.xlu0 %1637
        %1639 = vadd.xlane.f32.xlu0 %v1609
        %v1640 = vpop.xlane.xlu0 %1639
        %1641 = vadd.xlane.f32.xlu0 %v1610
        %v1642 = vpop.xlane.xlu0 %1641
        %v1643 = vmax.f32 %v1612, 1e-24
        %v1644 = vmax.f32 %v1614, 1e-24
        %v1645 = vmax.f32 %v1616, 1e-24
        %v1646 = vmax.f32 %v1618, 1e-24
        %v1647 = vmax.f32 %v1620, 1e-24
        %v1648 = vmax.f32 %v1622, 1e-24
        %v1649 = vmax.f32 %v1624, 1e-24
        %v1650 = vmax.f32 %v1626, 1e-24
        %v1651 = vmax.f32 %v1628, 1e-24
        %v1652 = vmax.f32 %v1630, 1e-24
        %v1653 = vmax.f32 %v1632, 1e-24
        %v1654 = vmax.f32 %v1634, 1e-24
        %v1655 = vmax.f32 %v1636, 1e-24
        %v1656 = vmax.f32 %v1638, 1e-24
        %v1657 = vmax.f32 %v1640, 1e-24
        %v1658 = vmax.f32 %v1642, 1e-24
        %v1659 = vrsqrt.pop %v1643
        %v1660 = vrsqrt.pop %v1644
        %v1661 = vrsqrt.pop %v1645
        %v1662 = vrsqrt.pop %v1646
        %v1663 = vrsqrt.pop %v1647
        %v1664 = vrsqrt.pop %v1648
        %v1665 = vrsqrt.pop %v1649
        %v1666 = vrsqrt.pop %v1650
        %v1667 = vrsqrt.pop %v1651
        %v1668 = vrsqrt.pop %v1652
        %v1669 = vrsqrt.pop %v1653
        %v1670 = vrsqrt.pop %v1654
        %v1671 = vrsqrt.pop %v1655
        %v1672 = vrsqrt.pop %v1656
        %v1673 = vrsqrt.pop %v1657
        %v1674 = vrsqrt.pop %v1658
        %v1675 = vmul.f32 %v1224, %v1659
        %v1676 = vmul.f32 %v1230, %v1660
        %v1677 = vmul.f32 %v1236, %v1661
        %v1678 = vmul.f32 %v1242, %v1662
        %v1679 = vmul.f32 %v1248, %v1663
        %v1680 = vmul.f32 %v1254, %v1664
        %v1681 = vmul.f32 %v1260, %v1665
        %v1682 = vmul.f32 %v1266, %v1666
        %v1683 = vmul.f32 %v1272, %v1667
        %v1684 = vmul.f32 %v1278, %v1668
        %v1685 = vmul.f32 %v1284, %v1669
        %v1686 = vmul.f32 %v1290, %v1670
        %v1687 = vmul.f32 %v1296, %v1671
        %v1688 = vmul.f32 %v1302, %v1672
        %v1689 = vmul.f32 %v1308, %v1673
        %v1690 = vmul.f32 %v1314, %v1674
        %v1691 = vlaneseq
        %v1692 = vshrl.u32 %v1691, 7
        %v1693 = vsub.s32 1, %v1692
        %v1694 = vrot.slane %v570, %v1693
        %v1695 = vmul.f32 %v1675, %v1694
        %v1696 = vmul.f32 %v1676, %v1694
        %v1697 = vmul.f32 %v1677, %v1694
        %v1698 = vmul.f32 %v1678, %v1694
        %v1699 = vmul.f32 %v1679, %v1694
        %v1700 = vmul.f32 %v1680, %v1694
        %v1701 = vmul.f32 %v1681, %v1694
        %v1702 = vmul.f32 %v1682, %v1694
        %v1703 = vmul.f32 %v1683, %v1694
        %v1704 = vmul.f32 %v1684, %v1694
        %v1705 = vmul.f32 %v1685, %v1694
        %v1706 = vmul.f32 %v1686, %v1694
        %v1707 = vmul.f32 %v1687, %v1694
        %v1708 = vmul.f32 %v1688, %v1694
        %v1709 = vmul.f32 %v1689, %v1694
        %v1710 = vmul.f32 %v1690, %v1694
        %1711 = vmatprep.subr.mxu0 0.0
        %1712 = vmatpush1.xpose.msra.mxu0 %v1695
        %1713 = vmatprep.subr.mxu0 0.0
        %1714 = vmatpush1.xpose.msra.mxu0 %v1696
        %1715 = vmatprep.subr.mxu0 0.0
        %1716 = vmatpush1.xpose.msra.mxu0 %v1697
        %1717 = vmatprep.subr.mxu0 0.0
        %1718 = vmatpush1.xpose.msra.mxu0 %v1698
        %1719 = vmatprep.subr.mxu0 0.0
        %1720 = vmatpush1.xpose.msra.mxu0 %v1699
        %1721 = vmatprep.subr.mxu0 0.0
        %1722 = vmatpush1.xpose.msra.mxu0 %v1700
        %1723 = vmatprep.subr.mxu0 0.0
        %1724 = vmatpush1.xpose.msra.mxu0 %v1701
        %1725 = vmatprep.subr.mxu0 0.0
        %1726 = vmatpush1.xpose.msra.mxu0 %v1702
        %1727 = vmatprep.subr.mxu0 0.0
        %1728 = vmatpush1.xpose.msra.mxu0 0.0
        %1729 = vmatprep.subr.mxu0 0.0
        %1730 = vmatpush1.xpose.msra.mxu0 0.0
        %1731 = vmatprep.subr.mxu0 0.0
        %1732 = vmatpush1.xpose.msra.mxu0 0.0
        %1733 = vmatprep.subr.mxu0 0.0
        %1734 = vmatpush1.xpose.msra.mxu0 0.0
        %1735 = vmatprep.subr.mxu0 0.0
        %1736 = vmatpush1.xpose.msra.mxu0 0.0
        %1737 = vmatprep.subr.mxu0 0.0
        %1738 = vmatpush1.xpose.msra.mxu0 0.0
        %1739 = vmatprep.subr.mxu0 0.0
        %1740 = vmatpush1.xpose.msra.mxu0 0.0
        %1741 = vmatprep.subr.mxu0 0.0
        %1742 = vmatpush1.xpose.msra.mxu0 0.0
        %1743 = vmatprep.subr.mxu0 0.0
        %1744 = vmatpush1.xpose.msra.mxu0 0.0
        %1745 = vmatprep.subr.mxu0 0.0
        %1746 = vmatpush1.xpose.msra.mxu0 0.0
        %1747 = vmatprep.subr.mxu0 0.0
        %1748 = vmatpush1.xpose.msra.mxu0 0.0
        %1749 = vmatprep.subr.mxu0 0.0
        %1750 = vmatpush1.xpose.msra.mxu0 0.0
        %1751 = vmatprep.subr.mxu0 0.0
        %1752 = vmatpush1.xpose.msra.mxu0 0.0
        %1753 = vmatprep.subr.mxu0 0.0
        %1754 = vmatpush1.xpose.msra.mxu0 0.0
        %1755 = vmatprep.subr.mxu0 0.0
        %1756 = vmatpush1.xpose.msra.mxu0 0.0
        %1757 = vmatprep.subr.mxu0 0.0
        %1758 = vmatpush1.xpose.msra.mxu0 0.0
        %1759 = vmatprep.subr.mxu0 0.0
        %1760 = vmatpush1.xpose.msra.mxu0 0.0
        %1761 = vmatprep.subr.mxu0 0.0
        %1762 = vmatpush1.xpose.msra.mxu0 0.0
        %1763 = vmatprep.subr.mxu0 0.0
        %1764 = vmatpush1.xpose.msra.mxu0 0.0
        %1765 = vmatprep.subr.mxu0 0.0
        %1766 = vmatpush1.xpose.msra.mxu0 0.0
        %1767 = vmatprep.subr.mxu0 0.0
        %1768 = vmatpush1.xpose.msra.mxu0 0.0
        %1769 = vmatprep.subr.mxu0 0.0
        %1770 = vmatpush1.xpose.msra.mxu0 0.0
        %1771 = vmatprep.subr.mxu0 0.0
        %1772 = vmatpush1.xpose.msra.mxu0 0.0
        %1773 = vmatprep.subr.mxu0 0.0
        %1774 = vmatpush1.xpose.msra.mxu0 0.0
        %1775 = vmatprep.mubr.f32.mxu0 0.0
        %1776 = vmatmul.mubr.f32.gmra.mrb[0].mxu0 %v1579
        %v1777 = vpop.f32.mrb[0].mxu0
        %v1778 = vadd.f32 0.0, %v1777
        %v1779 = vpop.f32.mrb[0].mxu0
        %1780 = vmatprep.mubr.f32.mxu0 0.0
        %1781 = vmatmul.mubr.f32.gmra.mrb[0].mxu0 %v1580
        %v1782 = vpop.f32.mrb[0].mxu0
        %v1783 = vadd.f32 0.0, %v1782
        %v1784 = vpop.f32.mrb[0].mxu0
        %1785 = vmatprep.mubr.f32.mxu0 0.0
        %1786 = vmatmul.mubr.f32.gmra.mrb[0].mxu0 %v1581
        %v1787 = vpop.f32.mrb[0].mxu0
        %v1788 = vadd.f32 0.0, %v1787
        %v1789 = vpop.f32.mrb[0].mxu0
        %1790 = vmatprep.mubr.f32.mxu0 0.0
        %1791 = vmatmul.mubr.f32.gmra.mrb[0].mxu0 %v1582
        %v1792 = vpop.f32.mrb[0].mxu0
        %v1793 = vadd.f32 0.0, %v1792
        %v1794 = vpop.f32.mrb[0].mxu0
        %1795 = vmatprep.mubr.f32.mxu0 0.0
        %1796 = vmatmul.mubr.f32.gmra.mrb[0].mxu0 %v1583
        %v1797 = vpop.f32.mrb[0].mxu0
        %v1798 = vadd.f32 0.0, %v1797
        %v1799 = vpop.f32.mrb[0].mxu0
        %1800 = vmatprep.mubr.f32.mxu0 0.0
        %1801 = vmatmul.mubr.f32.gmra.mrb[0].mxu0 %v1584
        %v1802 = vpop.f32.mrb[0].mxu0
        %v1803 = vadd.f32 0.0, %v1802
        %v1804 = vpop.f32.mrb[0].mxu0
        %1805 = vmatprep.mubr.f32.mxu0 0.0
        %1806 = vmatmul.mubr.f32.gmra.mrb[0].mxu0 %v1585
        %v1807 = vpop.f32.mrb[0].mxu0
        %v1808 = vadd.f32 0.0, %v1807
        %v1809 = vpop.f32.mrb[0].mxu0
        %1810 = vmatprep.mubr.f32.mxu0 0.0
        %1811 = vmatmul.mubr.f32.gmra.mrb[0].mxu0 %v1586
        %v1812 = vpop.f32.mrb[0].mxu0
        %v1813 = vadd.f32 0.0, %v1812
        %v1814 = vpop.f32.mrb[0].mxu0
        %1815 = vdwg.mxu0
        %1816 = vmatprep.subr.mxu0 0.0
        %1817 = vmatpush1.xpose.msra.mxu0 %v1703
        %1818 = vmatprep.subr.mxu0 0.0
        %1819 = vmatpush1.xpose.msra.mxu0 %v1704
        %1820 = vmatprep.subr.mxu0 0.0
        %1821 = vmatpush1.xpose.msra.mxu0 %v1705
        %1822 = vmatprep.subr.mxu0 0.0
        %1823 = vmatpush1.xpose.msra.mxu0 %v1706
        %1824 = vmatprep.subr.mxu0 0.0
        %1825 = vmatpush1.xpose.msra.mxu0 %v1707
        %1826 = vmatprep.subr.mxu0 0.0
        %1827 = vmatpush1.xpose.msra.mxu0 %v1708
        %1828 = vmatprep.subr.mxu0 0.0
        %1829 = vmatpush1.xpose.msra.mxu0 %v1709
        %1830 = vmatprep.subr.mxu0 0.0
        %1831 = vmatpush1.xpose.msra.mxu0 %v1710
        %1832 = vmatprep.subr.mxu0 0.0
        %1833 = vmatpush1.xpose.msra.mxu0 0.0
        %1834 = vmatprep.subr.mxu0 0.0
        %1835 = vmatpush1.xpose.msra.mxu0 0.0
        %1836 = vmatprep.subr.mxu0 0.0
        %1837 = vmatpush1.xpose.msra.mxu0 0.0
        %1838 = vmatprep.subr.mxu0 0.0
        %1839 = vmatpush1.xpose.msra.mxu0 0.0
        %1840 = vmatprep.subr.mxu0 0.0
        %1841 = vmatpush1.xpose.msra.mxu0 0.0
        %1842 = vmatprep.subr.mxu0 0.0
        %1843 = vmatpush1.xpose.msra.mxu0 0.0
        %1844 = vmatprep.subr.mxu0 0.0
        %1845 = vmatpush1.xpose.msra.mxu0 0.0
        %1846 = vmatprep.subr.mxu0 0.0
        %1847 = vmatpush1.xpose.msra.mxu0 0.0
        %1848 = vmatprep.subr.mxu0 0.0
        %1849 = vmatpush1.xpose.msra.mxu0 0.0
        %1850 = vmatprep.subr.mxu0 0.0
        %1851 = vmatpush1.xpose.msra.mxu0 0.0
        %1852 = vmatprep.subr.mxu0 0.0
        %1853 = vmatpush1.xpose.msra.mxu0 0.0
        %1854 = vmatprep.subr.mxu0 0.0
        %1855 = vmatpush1.xpose.msra.mxu0 0.0
        %1856 = vmatprep.subr.mxu0 0.0
        %1857 = vmatpush1.xpose.msra.mxu0 0.0
        %1858 = vmatprep.subr.mxu0 0.0
        %1859 = vmatpush1.xpose.msra.mxu0 0.0
        %1860 = vmatprep.subr.mxu0 0.0
        %1861 = vmatpush1.xpose.msra.mxu0 0.0
        %1862 = vmatprep.subr.mxu0 0.0
        %1863 = vmatpush1.xpose.msra.mxu0 0.0
        %1864 = vmatprep.subr.mxu0 0.0
        %1865 = vmatpush1.xpose.msra.mxu0 0.0
        %1866 = vmatprep.subr.mxu0 0.0
        %1867 = vmatpush1.xpose.msra.mxu0 0.0
        %1868 = vmatprep.subr.mxu0 0.0
        %1869 = vmatpush1.xpose.msra.mxu0 0.0
        %1870 = vmatprep.subr.mxu0 0.0
        %1871 = vmatpush1.xpose.msra.mxu0 0.0
        %1872 = vmatprep.subr.mxu0 0.0
        %1873 = vmatpush1.xpose.msra.mxu0 0.0
        %1874 = vmatprep.subr.mxu0 0.0
        %1875 = vmatpush1.xpose.msra.mxu0 0.0
        %1876 = vmatprep.subr.mxu0 0.0
        %1877 = vmatpush1.xpose.msra.mxu0 0.0
        %1878 = vmatprep.subr.mxu0 0.0
        %1879 = vmatpush1.xpose.msra.mxu0 0.0
        %1880 = vmatprep.mubr.f32.mxu0 0.0
        %1881 = vmatmul.mubr.f32.gmra.mrb[0].mxu0 %v1587
        %v1882 = vpop.f32.mrb[0].mxu0
        %v1883 = vadd.f32 0.0, %v1882
        %v1884 = vpop.f32.mrb[0].mxu0
        %1885 = vmatprep.mubr.f32.mxu0 0.0
        %1886 = vmatmul.mubr.f32.gmra.mrb[0].mxu0 %v1588
        %v1887 = vpop.f32.mrb[0].mxu0
        %v1888 = vadd.f32 0.0, %v1887
        %v1889 = vpop.f32.mrb[0].mxu0
        %1890 = vmatprep.mubr.f32.mxu0 0.0
        %1891 = vmatmul.mubr.f32.gmra.mrb[0].mxu0 %v1589
        %v1892 = vpop.f32.mrb[0].mxu0
        %v1893 = vadd.f32 0.0, %v1892
        %v1894 = vpop.f32.mrb[0].mxu0
        %1895 = vmatprep.mubr.f32.mxu0 0.0
        %1896 = vmatmul.mubr.f32.gmra.mrb[0].mxu0 %v1590
        %v1897 = vpop.f32.mrb[0].mxu0
        %v1898 = vadd.f32 0.0, %v1897
        %v1899 = vpop.f32.mrb[0].mxu0
        %1900 = vmatprep.mubr.f32.mxu0 0.0
        %1901 = vmatmul.mubr.f32.gmra.mrb[0].mxu0 %v1591
        %v1902 = vpop.f32.mrb[0].mxu0
        %v1903 = vadd.f32 0.0, %v1902
        %v1904 = vpop.f32.mrb[0].mxu0
        %1905 = vmatprep.mubr.f32.mxu0 0.0
        %1906 = vmatmul.mubr.f32.gmra.mrb[0].mxu0 %v1592
        %v1907 = vpop.f32.mrb[0].mxu0
        %v1908 = vadd.f32 0.0, %v1907
        %v1909 = vpop.f32.mrb[0].mxu0
        %1910 = vmatprep.mubr.f32.mxu0 0.0
        %1911 = vmatmul.mubr.f32.gmra.mrb[0].mxu0 %v1593
        %v1912 = vpop.f32.mrb[0].mxu0
        %v1913 = vadd.f32 0.0, %v1912
        %v1914 = vpop.f32.mrb[0].mxu0
        %1915 = vmatprep.mubr.f32.mxu0 0.0
        %1916 = vmatmul.mubr.f32.gmra.mrb[0].mxu0 %v1594
        %v1917 = vpop.f32.mrb[0].mxu0
        %v1918 = vadd.f32 0.0, %v1917
        %v1919 = vpop.f32.mrb[0].mxu0
        %1920 = vdwg.mxu0
        %v1921 = vmul.f32 %v1778, 8.0
        %v1922 = vmul.f32 %v1783, 8.0
        %v1923 = vmul.f32 %v1788, 8.0
        %v1924 = vmul.f32 %v1793, 8.0
        %v1925 = vmul.f32 %v1798, 8.0
        %v1926 = vmul.f32 %v1803, 8.0
        %v1927 = vmul.f32 %v1808, 8.0
        %v1928 = vmul.f32 %v1813, 8.0
        %v1929 = vmul.f32 %v1883, 8.0
        %v1930 = vmul.f32 %v1888, 8.0
        %v1931 = vmul.f32 %v1893, 8.0
        %v1932 = vmul.f32 %v1898, 8.0
        %v1933 = vmul.f32 %v1903, 8.0
        %v1934 = vmul.f32 %v1908, 8.0
        %v1935 = vmul.f32 %v1913, 8.0
        %v1936 = vmul.f32 %v1918, 8.0
        %vm1937 = vcmask 523264
        %v1938 = vsel %vm1937, %v1921, -inf
        %1939 = vmax.xlane.f32.xlu0 %v1938
        %v1940 = vpop.xlane.xlu0 %1939
        %v1941 = vsel %vm1937, %v1922, -inf
        %1942 = vmax.xlane.f32.xlu0 %v1941
        %v1943 = vpop.xlane.xlu0 %1942
        %v1944 = vsel %vm1937, %v1923, -inf
        %1945 = vmax.xlane.f32.xlu0 %v1944
        %v1946 = vpop.xlane.xlu0 %1945
        %v1947 = vsel %vm1937, %v1924, -inf
        %1948 = vmax.xlane.f32.xlu0 %v1947
        %v1949 = vpop.xlane.xlu0 %1948
        %v1950 = vsel %vm1937, %v1925, -inf
        %1951 = vmax.xlane.f32.xlu0 %v1950
        %v1952 = vpop.xlane.xlu0 %1951
        %v1953 = vsel %vm1937, %v1926, -inf
        %1954 = vmax.xlane.f32.xlu0 %v1953
        %v1955 = vpop.xlane.xlu0 %1954
        %v1956 = vsel %vm1937, %v1927, -inf
        %1957 = vmax.xlane.f32.xlu0 %v1956
        %v1958 = vpop.xlane.xlu0 %1957
        %v1959 = vsel %vm1937, %v1928, -inf
        %1960 = vmax.xlane.f32.xlu0 %v1959
        %v1961 = vpop.xlane.xlu0 %1960
        %v1962 = vsel %vm1937, %v1929, -inf
        %1963 = vmax.xlane.f32.xlu0 %v1962
        %v1964 = vpop.xlane.xlu0 %1963
        %v1965 = vsel %vm1937, %v1930, -inf
        %1966 = vmax.xlane.f32.xlu0 %v1965
        %v1967 = vpop.xlane.xlu0 %1966
        %v1968 = vsel %vm1937, %v1931, -inf
        %1969 = vmax.xlane.f32.xlu0 %v1968
        %v1970 = vpop.xlane.xlu0 %1969
        %v1971 = vsel %vm1937, %v1932, -inf
        %1972 = vmax.xlane.f32.xlu0 %v1971
        %v1973 = vpop.xlane.xlu0 %1972
        %v1974 = vsel %vm1937, %v1933, -inf
        %1975 = vmax.xlane.f32.xlu0 %v1974
        %v1976 = vpop.xlane.xlu0 %1975
        %v1977 = vsel %vm1937, %v1934, -inf
        %1978 = vmax.xlane.f32.xlu0 %v1977
        %v1979 = vpop.xlane.xlu0 %1978
        %v1980 = vsel %vm1937, %v1935, -inf
        %1981 = vmax.xlane.f32.xlu0 %v1980
        %v1982 = vpop.xlane.xlu0 %1981
        %v1983 = vsel %vm1937, %v1936, -inf
        %1984 = vmax.xlane.f32.xlu0 %v1983
        %v1985 = vpop.xlane.xlu0 %1984
        %v1986 = vsub.f32 %v1921, %v1940
        %v1987 = vsub.f32 %v1922, %v1943
        %v1988 = vsub.f32 %v1923, %v1946
        %v1989 = vsub.f32 %v1924, %v1949
        %v1990 = vsub.f32 %v1925, %v1952
        %v1991 = vsub.f32 %v1926, %v1955
        %v1992 = vsub.f32 %v1927, %v1958
        %v1993 = vsub.f32 %v1928, %v1961
        %v1994 = vsub.f32 %v1929, %v1964
        %v1995 = vsub.f32 %v1930, %v1967
        %v1996 = vsub.f32 %v1931, %v1970
        %v1997 = vsub.f32 %v1932, %v1973
        %v1998 = vsub.f32 %v1933, %v1976
        %v1999 = vsub.f32 %v1934, %v1979
        %v2000 = vsub.f32 %v1935, %v1982
        %v2001 = vsub.f32 %v1936, %v1985
        %v2002 = vmul.f32 %v1986, 1.442695
        %v2003 = vpow.pop %v2002
        %v2004 = vmul.f32 %v1987, 1.442695
        %v2005 = vpow.pop %v2004
        %v2006 = vmul.f32 %v1988, 1.442695
        %v2007 = vpow.pop %v2006
        %v2008 = vmul.f32 %v1989, 1.442695
        %v2009 = vpow.pop %v2008
        %v2010 = vmul.f32 %v1990, 1.442695
        %v2011 = vpow.pop %v2010
        %v2012 = vmul.f32 %v1991, 1.442695
        %v2013 = vpow.pop %v2012
        %v2014 = vmul.f32 %v1992, 1.442695
        %v2015 = vpow.pop %v2014
        %v2016 = vmul.f32 %v1993, 1.442695
        %v2017 = vpow.pop %v2016
        %v2018 = vmul.f32 %v1994, 1.442695
        %v2019 = vpow.pop %v2018
        %v2020 = vmul.f32 %v1995, 1.442695
        %v2021 = vpow.pop %v2020
        %v2022 = vmul.f32 %v1996, 1.442695
        %v2023 = vpow.pop %v2022
        %v2024 = vmul.f32 %v1997, 1.442695
        %v2025 = vpow.pop %v2024
        %v2026 = vmul.f32 %v1998, 1.442695
        %v2027 = vpow.pop %v2026
        %v2028 = vmul.f32 %v1999, 1.442695
        %v2029 = vpow.pop %v2028
        %v2030 = vmul.f32 %v2000, 1.442695
        %v2031 = vpow.pop %v2030
        %v2032 = vmul.f32 %v2001, 1.442695
        %v2033 = vpow.pop %v2032
        %v2034 = vsel %vm1937, %v2003, 0.0
        %2035 = vadd.xlane.f32.xlu0 %v2034
        %v2036 = vpop.xlane.xlu0 %2035
        %v2037 = vsel %vm1937, %v2005, 0.0
        %2038 = vadd.xlane.f32.xlu0 %v2037
        %v2039 = vpop.xlane.xlu0 %2038
        %v2040 = vsel %vm1937, %v2007, 0.0
        %2041 = vadd.xlane.f32.xlu0 %v2040
        %v2042 = vpop.xlane.xlu0 %2041
        %v2043 = vsel %vm1937, %v2009, 0.0
        %2044 = vadd.xlane.f32.xlu0 %v2043
        %v2045 = vpop.xlane.xlu0 %2044
        %v2046 = vsel %vm1937, %v2011, 0.0
        %2047 = vadd.xlane.f32.xlu0 %v2046
        %v2048 = vpop.xlane.xlu0 %2047
        %v2049 = vsel %vm1937, %v2013, 0.0
        %2050 = vadd.xlane.f32.xlu0 %v2049
        %v2051 = vpop.xlane.xlu0 %2050
        %v2052 = vsel %vm1937, %v2015, 0.0
        %2053 = vadd.xlane.f32.xlu0 %v2052
        %v2054 = vpop.xlane.xlu0 %2053
        %v2055 = vsel %vm1937, %v2017, 0.0
        %2056 = vadd.xlane.f32.xlu0 %v2055
        %v2057 = vpop.xlane.xlu0 %2056
        %v2058 = vsel %vm1937, %v2019, 0.0
        %2059 = vadd.xlane.f32.xlu0 %v2058
        %v2060 = vpop.xlane.xlu0 %2059
        %v2061 = vsel %vm1937, %v2021, 0.0
        %2062 = vadd.xlane.f32.xlu0 %v2061
        %v2063 = vpop.xlane.xlu0 %2062
        %v2064 = vsel %vm1937, %v2023, 0.0
        %2065 = vadd.xlane.f32.xlu0 %v2064
        %v2066 = vpop.xlane.xlu0 %2065
        %v2067 = vsel %vm1937, %v2025, 0.0
        %2068 = vadd.xlane.f32.xlu0 %v2067
        %v2069 = vpop.xlane.xlu0 %2068
        %v2070 = vsel %vm1937, %v2027, 0.0
        %2071 = vadd.xlane.f32.xlu0 %v2070
        %v2072 = vpop.xlane.xlu0 %2071
        %v2073 = vsel %vm1937, %v2029, 0.0
        %2074 = vadd.xlane.f32.xlu0 %v2073
        %v2075 = vpop.xlane.xlu0 %2074
        %v2076 = vsel %vm1937, %v2031, 0.0
        %2077 = vadd.xlane.f32.xlu0 %v2076
        %v2078 = vpop.xlane.xlu0 %2077
        %v2079 = vsel %vm1937, %v2033, 0.0
        %2080 = vadd.xlane.f32.xlu0 %v2079
        %v2081 = vpop.xlane.xlu0 %2080
        %v2082 = vrcp.pop %v2036
        %v2083 = vrcp.pop %v2039
        %v2084 = vrcp.pop %v2042
        %v2085 = vrcp.pop %v2045
        %v2086 = vrcp.pop %v2048
        %v2087 = vrcp.pop %v2051
        %v2088 = vrcp.pop %v2054
        %v2089 = vrcp.pop %v2057
        %v2090 = vrcp.pop %v2060
        %v2091 = vrcp.pop %v2063
        %v2092 = vrcp.pop %v2066
        %v2093 = vrcp.pop %v2069
        %v2094 = vrcp.pop %v2072
        %v2095 = vrcp.pop %v2075
        %v2096 = vrcp.pop %v2078
        %v2097 = vrcp.pop %v2081
        %v2098 = vmul.f32 %v2003, %v2082
        %v2099 = vmul.f32 %v2005, %v2083
        %v2100 = vmul.f32 %v2007, %v2084
        %v2101 = vmul.f32 %v2009, %v2085
        %v2102 = vmul.f32 %v2011, %v2086
        %v2103 = vmul.f32 %v2013, %v2087
        %v2104 = vmul.f32 %v2015, %v2088
        %v2105 = vmul.f32 %v2017, %v2089
        %v2106 = vmul.f32 %v2019, %v2090
        %v2107 = vmul.f32 %v2021, %v2091
        %v2108 = vmul.f32 %v2023, %v2092
        %v2109 = vmul.f32 %v2025, %v2093
        %v2110 = vmul.f32 %v2027, %v2094
        %v2111 = vmul.f32 %v2029, %v2095
        %v2112 = vmul.f32 %v2031, %v2096
        %v2113 = vmul.f32 %v2033, %v2097
        %v2115 = vsel %vm1937, %v2098, 0
        %v2118 = vsel %vm1937, %v2099, 0
        %v2121 = vsel %vm1937, %v2100, 0
        %v2124 = vsel %vm1937, %v2101, 0
        %v2127 = vsel %vm1937, %v2102, 0
        %v2130 = vsel %vm1937, %v2103, 0
        %v2133 = vsel %vm1937, %v2104, 0
        %v2136 = vsel %vm1937, %v2105, 0
        %2138 = vmatprep.subr.mxu0 0.0
        %2139 = vmatpush1.msra.mxu0 %v1385
        %2140 = vmatprep.subr.mxu0 0.0
        %2141 = vmatpush1.msra.mxu0 %v1391
        %2142 = vmatprep.subr.mxu0 0.0
        %2143 = vmatpush1.msra.mxu0 %v1397
        %2144 = vmatprep.subr.mxu0 0.0
        %2145 = vmatpush1.msra.mxu0 %v1403
        %2146 = vmatprep.subr.mxu0 0.0
        %2147 = vmatpush1.msra.mxu0 %v1409
        %2148 = vmatprep.subr.mxu0 0.0
        %2149 = vmatpush1.msra.mxu0 %v1415
        %2150 = vmatprep.subr.mxu0 0.0
        %2151 = vmatpush1.msra.mxu0 %v1421
        %2152 = vmatprep.subr.mxu0 0.0
        %2153 = vmatpush1.msra.mxu0 %v1427
        %2154 = vmatprep.subr.mxu0 0.0
        %2155 = vmatpush1.msra.mxu0 0.0
        %2156 = vmatprep.subr.mxu0 0.0
        %2157 = vmatpush1.msra.mxu0 0.0
        %2158 = vmatprep.subr.mxu0 0.0
        %2159 = vmatpush1.msra.mxu0 0.0
        %2160 = vmatprep.subr.mxu0 0.0
        %2161 = vmatpush1.msra.mxu0 0.0
        %2162 = vmatprep.subr.mxu0 0.0
        %2163 = vmatpush1.msra.mxu0 0.0
        %2164 = vmatprep.subr.mxu0 0.0
        %2165 = vmatpush1.msra.mxu0 0.0
        %2166 = vmatprep.subr.mxu0 0.0
        %2167 = vmatpush1.msra.mxu0 0.0
        %2168 = vmatprep.subr.mxu0 0.0
        %2169 = vmatpush1.msra.mxu0 0.0
        %2170 = vmatprep.subr.mxu0 0.0
        %2171 = vmatpush1.msra.mxu0 0.0
        %2172 = vmatprep.subr.mxu0 0.0
        %2173 = vmatpush1.msra.mxu0 0.0
        %2174 = vmatprep.subr.mxu0 0.0
        %2175 = vmatpush1.msra.mxu0 0.0
        %2176 = vmatprep.subr.mxu0 0.0
        %2177 = vmatpush1.msra.mxu0 0.0
        %2178 = vmatprep.subr.mxu0 0.0
        %2179 = vmatpush1.msra.mxu0 0.0
        %2180 = vmatprep.subr.mxu0 0.0
        %2181 = vmatpush1.msra.mxu0 0.0
        %2182 = vmatprep.subr.mxu0 0.0
        %2183 = vmatpush1.msra.mxu0 0.0
        %2184 = vmatprep.subr.mxu0 0.0
        %2185 = vmatpush1.msra.mxu0 0.0
        %2186 = vmatprep.subr.mxu0 0.0
        %2187 = vmatpush1.msra.mxu0 0.0
        %2188 = vmatprep.subr.mxu0 0.0
        %2189 = vmatpush1.msra.mxu0 0.0
        %2190 = vmatprep.subr.mxu0 0.0
        %2191 = vmatpush1.msra.mxu0 0.0
        %2192 = vmatprep.subr.mxu0 0.0
        %2193 = vmatpush1.msra.mxu0 0.0
        %2194 = vmatprep.subr.mxu0 0.0
        %2195 = vmatpush1.msra.mxu0 0.0
        %2196 = vmatprep.subr.mxu0 0.0
        %2197 = vmatpush1.msra.mxu0 0.0
        %2198 = vmatprep.subr.mxu0 0.0
        %2199 = vmatpush1.msra.mxu0 0.0
        %2200 = vmatprep.subr.mxu0 0.0
        %2201 = vmatpush1.msra.mxu0 0.0
        %2202 = vmatprep.mubr.f32.mxu0 0.0
        %2203 = vmatmul.mubr.f32.gmra.mrb[0].mxu0 %v2115
        %v2204 = vpop.f32.mrb[0].mxu0
        %v2205 = vadd.f32 0.0, %v2204
        %v2206 = vpop.f32.mrb[0].mxu0
        %2207 = vmatprep.mubr.f32.mxu0 0.0
        %2208 = vmatmul.mubr.f32.gmra.mrb[0].mxu0 %v2118
        %v2209 = vpop.f32.mrb[0].mxu0
        %v2210 = vadd.f32 0.0, %v2209
        %v2211 = vpop.f32.mrb[0].mxu0
        %2212 = vmatprep.mubr.f32.mxu0 0.0
        %2213 = vmatmul.mubr.f32.gmra.mrb[0].mxu0 %v2121
        %v2214 = vpop.f32.mrb[0].mxu0
        %v2215 = vadd.f32 0.0, %v2214
        %v2216 = vpop.f32.mrb[0].mxu0
        %2217 = vmatprep.mubr.f32.mxu0 0.0
        %2218 = vmatmul.mubr.f32.gmra.mrb[0].mxu0 %v2124
        %v2219 = vpop.f32.mrb[0].mxu0
        %v2220 = vadd.f32 0.0, %v2219
        %v2221 = vpop.f32.mrb[0].mxu0
        %2222 = vmatprep.mubr.f32.mxu0 0.0
        %2223 = vmatmul.mubr.f32.gmra.mrb[0].mxu0 %v2127
        %v2224 = vpop.f32.mrb[0].mxu0
        %v2225 = vadd.f32 0.0, %v2224
        %v2226 = vpop.f32.mrb[0].mxu0
        %2227 = vmatprep.mubr.f32.mxu0 0.0
        %2228 = vmatmul.mubr.f32.gmra.mrb[0].mxu0 %v2130
        %v2229 = vpop.f32.mrb[0].mxu0
        %v2230 = vadd.f32 0.0, %v2229
        %v2231 = vpop.f32.mrb[0].mxu0
        %2232 = vmatprep.mubr.f32.mxu0 0.0
        %2233 = vmatmul.mubr.f32.gmra.mrb[0].mxu0 %v2133
        %v2234 = vpop.f32.mrb[0].mxu0
        %v2235 = vadd.f32 0.0, %v2234
        %v2236 = vpop.f32.mrb[0].mxu0
        %2237 = vmatprep.mubr.f32.mxu0 0.0
        %2238 = vmatmul.mubr.f32.gmra.mrb[0].mxu0 %v2136
        %v2239 = vpop.f32.mrb[0].mxu0
        %v2240 = vadd.f32 0.0, %v2239
        %v2241 = vpop.f32.mrb[0].mxu0
        %2242 = vdwg.mxu0
        %v2244 = vsel %vm1937, %v2106, 0
        %v2247 = vsel %vm1937, %v2107, 0
        %v2250 = vsel %vm1937, %v2108, 0
        %v2253 = vsel %vm1937, %v2109, 0
        %v2256 = vsel %vm1937, %v2110, 0
        %v2259 = vsel %vm1937, %v2111, 0
        %v2262 = vsel %vm1937, %v2112, 0
        %v2265 = vsel %vm1937, %v2113, 0
        %2267 = vmatprep.subr.mxu0 0.0
        %2268 = vmatpush1.msra.mxu0 %v1433
        %2269 = vmatprep.subr.mxu0 0.0
        %2270 = vmatpush1.msra.mxu0 %v1439
        %2271 = vmatprep.subr.mxu0 0.0
        %2272 = vmatpush1.msra.mxu0 %v1445
        %2273 = vmatprep.subr.mxu0 0.0
        %2274 = vmatpush1.msra.mxu0 %v1451
        %2275 = vmatprep.subr.mxu0 0.0
        %2276 = vmatpush1.msra.mxu0 %v1457
        %2277 = vmatprep.subr.mxu0 0.0
        %2278 = vmatpush1.msra.mxu0 %v1463
        %2279 = vmatprep.subr.mxu0 0.0
        %2280 = vmatpush1.msra.mxu0 %v1469
        %2281 = vmatprep.subr.mxu0 0.0
        %2282 = vmatpush1.msra.mxu0 %v1475
        %2283 = vmatprep.subr.mxu0 0.0
        %2284 = vmatpush1.msra.mxu0 0.0
        %2285 = vmatprep.subr.mxu0 0.0
        %2286 = vmatpush1.msra.mxu0 0.0
        %2287 = vmatprep.subr.mxu0 0.0
        %2288 = vmatpush1.msra.mxu0 0.0
        %2289 = vmatprep.subr.mxu0 0.0
        %2290 = vmatpush1.msra.mxu0 0.0
        %2291 = vmatprep.subr.mxu0 0.0
        %2292 = vmatpush1.msra.mxu0 0.0
        %2293 = vmatprep.subr.mxu0 0.0
        %2294 = vmatpush1.msra.mxu0 0.0
        %2295 = vmatprep.subr.mxu0 0.0
        %2296 = vmatpush1.msra.mxu0 0.0
        %2297 = vmatprep.subr.mxu0 0.0
        %2298 = vmatpush1.msra.mxu0 0.0
        %2299 = vmatprep.subr.mxu0 0.0
        %2300 = vmatpush1.msra.mxu0 0.0
        %2301 = vmatprep.subr.mxu0 0.0
        %2302 = vmatpush1.msra.mxu0 0.0
        %2303 = vmatprep.subr.mxu0 0.0
        %2304 = vmatpush1.msra.mxu0 0.0
        %2305 = vmatprep.subr.mxu0 0.0
        %2306 = vmatpush1.msra.mxu0 0.0
        %2307 = vmatprep.subr.mxu0 0.0
        %2308 = vmatpush1.msra.mxu0 0.0
        %2309 = vmatprep.subr.mxu0 0.0
        %2310 = vmatpush1.msra.mxu0 0.0
        %2311 = vmatprep.subr.mxu0 0.0
        %2312 = vmatpush1.msra.mxu0 0.0
        %2313 = vmatprep.subr.mxu0 0.0
        %2314 = vmatpush1.msra.mxu0 0.0
        %2315 = vmatprep.subr.mxu0 0.0
        %2316 = vmatpush1.msra.mxu0 0.0
        %2317 = vmatprep.subr.mxu0 0.0
        %2318 = vmatpush1.msra.mxu0 0.0
        %2319 = vmatprep.subr.mxu0 0.0
        %2320 = vmatpush1.msra.mxu0 0.0
        %2321 = vmatprep.subr.mxu0 0.0
        %2322 = vmatpush1.msra.mxu0 0.0
        %2323 = vmatprep.subr.mxu0 0.0
        %2324 = vmatpush1.msra.mxu0 0.0
        %2325 = vmatprep.subr.mxu0 0.0
        %2326 = vmatpush1.msra.mxu0 0.0
        %2327 = vmatprep.subr.mxu0 0.0
        %2328 = vmatpush1.msra.mxu0 0.0
        %2329 = vmatprep.subr.mxu0 0.0
        %2330 = vmatpush1.msra.mxu0 0.0
        %2331 = vmatprep.mubr.f32.mxu0 0.0
        %2332 = vmatmul.mubr.f32.gmra.mrb[0].mxu0 %v2244
        %v2333 = vpop.f32.mrb[0].mxu0
        %v2334 = vadd.f32 0.0, %v2333
        %v2335 = vpop.f32.mrb[0].mxu0
        %2336 = vmatprep.mubr.f32.mxu0 0.0
        %2337 = vmatmul.mubr.f32.gmra.mrb[0].mxu0 %v2247
        %v2338 = vpop.f32.mrb[0].mxu0
        %v2339 = vadd.f32 0.0, %v2338
        %v2340 = vpop.f32.mrb[0].mxu0
        %2341 = vmatprep.mubr.f32.mxu0 0.0
        %2342 = vmatmul.mubr.f32.gmra.mrb[0].mxu0 %v2250
        %v2343 = vpop.f32.mrb[0].mxu0
        %v2344 = vadd.f32 0.0, %v2343
        %v2345 = vpop.f32.mrb[0].mxu0
        %2346 = vmatprep.mubr.f32.mxu0 0.0
        %2347 = vmatmul.mubr.f32.gmra.mrb[0].mxu0 %v2253
        %v2348 = vpop.f32.mrb[0].mxu0
        %v2349 = vadd.f32 0.0, %v2348
        %v2350 = vpop.f32.mrb[0].mxu0
        %2351 = vmatprep.mubr.f32.mxu0 0.0
        %2352 = vmatmul.mubr.f32.gmra.mrb[0].mxu0 %v2256
        %v2353 = vpop.f32.mrb[0].mxu0
        %v2354 = vadd.f32 0.0, %v2353
        %v2355 = vpop.f32.mrb[0].mxu0
        %2356 = vmatprep.mubr.f32.mxu0 0.0
        %2357 = vmatmul.mubr.f32.gmra.mrb[0].mxu0 %v2259
        %v2358 = vpop.f32.mrb[0].mxu0
        %v2359 = vadd.f32 0.0, %v2358
        %v2360 = vpop.f32.mrb[0].mxu0
        %2361 = vmatprep.mubr.f32.mxu0 0.0
        %2362 = vmatmul.mubr.f32.gmra.mrb[0].mxu0 %v2262
        %v2363 = vpop.f32.mrb[0].mxu0
        %v2364 = vadd.f32 0.0, %v2363
        %v2365 = vpop.f32.mrb[0].mxu0
        %2366 = vmatprep.mubr.f32.mxu0 0.0
        %2367 = vmatmul.mubr.f32.gmra.mrb[0].mxu0 %v2265
        %v2368 = vpop.f32.mrb[0].mxu0
        %v2369 = vadd.f32 0.0, %v2368
        %v2370 = vpop.f32.mrb[0].mxu0
        %2371 = vdwg.mxu0
        %v2372 = vmul.f32 %v1065, %v1065
        %v2373 = vmul.f32 %v1071, %v1071
        %v2374 = vmul.f32 %v1077, %v1077
        %v2375 = vmul.f32 %v1083, %v1083
        %v2376 = vmul.f32 %v1089, %v1089
        %v2377 = vmul.f32 %v1095, %v1095
        %v2378 = vmul.f32 %v1101, %v1101
        %v2379 = vmul.f32 %v1107, %v1107
        %v2380 = vmul.f32 %v1113, %v1113
        %v2381 = vmul.f32 %v1119, %v1119
        %v2382 = vmul.f32 %v1125, %v1125
        %v2383 = vmul.f32 %v1131, %v1131
        %v2384 = vmul.f32 %v1137, %v1137
        %v2385 = vmul.f32 %v1143, %v1143
        %v2386 = vmul.f32 %v1149, %v1149
        %v2387 = vmul.f32 %v1155, %v1155
        %2388 = vadd.xlane.f32.xlu0 %v2372
        %v2389 = vpop.xlane.xlu0 %2388
        %2390 = vadd.xlane.f32.xlu0 %v2373
        %v2391 = vpop.xlane.xlu0 %2390
        %2392 = vadd.xlane.f32.xlu0 %v2374
        %v2393 = vpop.xlane.xlu0 %2392
        %2394 = vadd.xlane.f32.xlu0 %v2375
        %v2395 = vpop.xlane.xlu0 %2394
        %2396 = vadd.xlane.f32.xlu0 %v2376
        %v2397 = vpop.xlane.xlu0 %2396
        %2398 = vadd.xlane.f32.xlu0 %v2377
        %v2399 = vpop.xlane.xlu0 %2398
        %2400 = vadd.xlane.f32.xlu0 %v2378
        %v2401 = vpop.xlane.xlu0 %2400
        %2402 = vadd.xlane.f32.xlu0 %v2379
        %v2403 = vpop.xlane.xlu0 %2402
        %2404 = vadd.xlane.f32.xlu0 %v2380
        %v2405 = vpop.xlane.xlu0 %2404
        %2406 = vadd.xlane.f32.xlu0 %v2381
        %v2407 = vpop.xlane.xlu0 %2406
        %2408 = vadd.xlane.f32.xlu0 %v2382
        %v2409 = vpop.xlane.xlu0 %2408
        %2410 = vadd.xlane.f32.xlu0 %v2383
        %v2411 = vpop.xlane.xlu0 %2410
        %2412 = vadd.xlane.f32.xlu0 %v2384
        %v2413 = vpop.xlane.xlu0 %2412
        %2414 = vadd.xlane.f32.xlu0 %v2385
        %v2415 = vpop.xlane.xlu0 %2414
        %2416 = vadd.xlane.f32.xlu0 %v2386
        %v2417 = vpop.xlane.xlu0 %2416
        %2418 = vadd.xlane.f32.xlu0 %v2387
        %v2419 = vpop.xlane.xlu0 %2418
        %v2420 = vmax.f32 %v2389, 1e-24
        %v2421 = vmax.f32 %v2391, 1e-24
        %v2422 = vmax.f32 %v2393, 1e-24
        %v2423 = vmax.f32 %v2395, 1e-24
        %v2424 = vmax.f32 %v2397, 1e-24
        %v2425 = vmax.f32 %v2399, 1e-24
        %v2426 = vmax.f32 %v2401, 1e-24
        %v2427 = vmax.f32 %v2403, 1e-24
        %v2428 = vmax.f32 %v2405, 1e-24
        %v2429 = vmax.f32 %v2407, 1e-24
        %v2430 = vmax.f32 %v2409, 1e-24
        %v2431 = vmax.f32 %v2411, 1e-24
        %v2432 = vmax.f32 %v2413, 1e-24
        %v2433 = vmax.f32 %v2415, 1e-24
        %v2434 = vmax.f32 %v2417, 1e-24
        %v2435 = vmax.f32 %v2419, 1e-24
        %v2436 = vrsqrt.pop %v2420
        %v2437 = vrsqrt.pop %v2421
        %v2438 = vrsqrt.pop %v2422
        %v2439 = vrsqrt.pop %v2423
        %v2440 = vrsqrt.pop %v2424
        %v2441 = vrsqrt.pop %v2425
        %v2442 = vrsqrt.pop %v2426
        %v2443 = vrsqrt.pop %v2427
        %v2444 = vrsqrt.pop %v2428
        %v2445 = vrsqrt.pop %v2429
        %v2446 = vrsqrt.pop %v2430
        %v2447 = vrsqrt.pop %v2431
        %v2448 = vrsqrt.pop %v2432
        %v2449 = vrsqrt.pop %v2433
        %v2450 = vrsqrt.pop %v2434
        %v2451 = vrsqrt.pop %v2435
        %v2452 = vmul.f32 %v1065, %v2436
        %v2453 = vmul.f32 %v1071, %v2437
        %v2454 = vmul.f32 %v1077, %v2438
        %v2455 = vmul.f32 %v1083, %v2439
        %v2456 = vmul.f32 %v1089, %v2440
        %v2457 = vmul.f32 %v1095, %v2441
        %v2458 = vmul.f32 %v1101, %v2442
        %v2459 = vmul.f32 %v1107, %v2443
        %v2460 = vmul.f32 %v1113, %v2444
        %v2461 = vmul.f32 %v1119, %v2445
        %v2462 = vmul.f32 %v1125, %v2446
        %v2463 = vmul.f32 %v1131, %v2447
        %v2464 = vmul.f32 %v1137, %v2448
        %v2465 = vmul.f32 %v1143, %v2449
        %v2466 = vmul.f32 %v1149, %v2450
        %v2467 = vmul.f32 %v1155, %v2451
        %v2468 = vmul.f32 %v2452, %v1578
        %v2469 = vmul.f32 %v2453, %v1578
        %v2470 = vmul.f32 %v2454, %v1578
        %v2471 = vmul.f32 %v2455, %v1578
        %v2472 = vmul.f32 %v2456, %v1578
        %v2473 = vmul.f32 %v2457, %v1578
        %v2474 = vmul.f32 %v2458, %v1578
        %v2475 = vmul.f32 %v2459, %v1578
        %v2476 = vmul.f32 %v2460, %v1578
        %v2477 = vmul.f32 %v2461, %v1578
        %v2478 = vmul.f32 %v2462, %v1578
        %v2479 = vmul.f32 %v2463, %v1578
        %v2480 = vmul.f32 %v2464, %v1578
        %v2481 = vmul.f32 %v2465, %v1578
        %v2482 = vmul.f32 %v2466, %v1578
        %v2483 = vmul.f32 %v2467, %v1578
        %v2484 = vmul.f32 %v1226, %v1226
        %v2485 = vmul.f32 %v1232, %v1232
        %v2486 = vmul.f32 %v1238, %v1238
        %v2487 = vmul.f32 %v1244, %v1244
        %v2488 = vmul.f32 %v1250, %v1250
        %v2489 = vmul.f32 %v1256, %v1256
        %v2490 = vmul.f32 %v1262, %v1262
        %v2491 = vmul.f32 %v1268, %v1268
        %v2492 = vmul.f32 %v1274, %v1274
        %v2493 = vmul.f32 %v1280, %v1280
        %v2494 = vmul.f32 %v1286, %v1286
        %v2495 = vmul.f32 %v1292, %v1292
        %v2496 = vmul.f32 %v1298, %v1298
        %v2497 = vmul.f32 %v1304, %v1304
        %v2498 = vmul.f32 %v1310, %v1310
        %v2499 = vmul.f32 %v1316, %v1316
        %2500 = vadd.xlane.f32.xlu0 %v2484
        %v2501 = vpop.xlane.xlu0 %2500
        %2502 = vadd.xlane.f32.xlu0 %v2485
        %v2503 = vpop.xlane.xlu0 %2502
        %2504 = vadd.xlane.f32.xlu0 %v2486
        %v2505 = vpop.xlane.xlu0 %2504
        %2506 = vadd.xlane.f32.xlu0 %v2487
        %v2507 = vpop.xlane.xlu0 %2506
        %2508 = vadd.xlane.f32.xlu0 %v2488
        %v2509 = vpop.xlane.xlu0 %2508
        %2510 = vadd.xlane.f32.xlu0 %v2489
        %v2511 = vpop.xlane.xlu0 %2510
        %2512 = vadd.xlane.f32.xlu0 %v2490
        %v2513 = vpop.xlane.xlu0 %2512
        %2514 = vadd.xlane.f32.xlu0 %v2491
        %v2515 = vpop.xlane.xlu0 %2514
        %2516 = vadd.xlane.f32.xlu0 %v2492
        %v2517 = vpop.xlane.xlu0 %2516
        %2518 = vadd.xlane.f32.xlu0 %v2493
        %v2519 = vpop.xlane.xlu0 %2518
        %2520 = vadd.xlane.f32.xlu0 %v2494
        %v2521 = vpop.xlane.xlu0 %2520
        %2522 = vadd.xlane.f32.xlu0 %v2495
        %v2523 = vpop.xlane.xlu0 %2522
        %2524 = vadd.xlane.f32.xlu0 %v2496
        %v2525 = vpop.xlane.xlu0 %2524
        %2526 = vadd.xlane.f32.xlu0 %v2497
        %v2527 = vpop.xlane.xlu0 %2526
        %2528 = vadd.xlane.f32.xlu0 %v2498
        %v2529 = vpop.xlane.xlu0 %2528
        %2530 = vadd.xlane.f32.xlu0 %v2499
        %v2531 = vpop.xlane.xlu0 %2530
        %v2532 = vmax.f32 %v2501, 1e-24
        %v2533 = vmax.f32 %v2503, 1e-24
        %v2534 = vmax.f32 %v2505, 1e-24
        %v2535 = vmax.f32 %v2507, 1e-24
        %v2536 = vmax.f32 %v2509, 1e-24
        %v2537 = vmax.f32 %v2511, 1e-24
        %v2538 = vmax.f32 %v2513, 1e-24
        %v2539 = vmax.f32 %v2515, 1e-24
        %v2540 = vmax.f32 %v2517, 1e-24
        %v2541 = vmax.f32 %v2519, 1e-24
        %v2542 = vmax.f32 %v2521, 1e-24
        %v2543 = vmax.f32 %v2523, 1e-24
        %v2544 = vmax.f32 %v2525, 1e-24
        %v2545 = vmax.f32 %v2527, 1e-24
        %v2546 = vmax.f32 %v2529, 1e-24
        %v2547 = vmax.f32 %v2531, 1e-24
        %v2548 = vrsqrt.pop %v2532
        %v2549 = vrsqrt.pop %v2533
        %v2550 = vrsqrt.pop %v2534
        %v2551 = vrsqrt.pop %v2535
        %v2552 = vrsqrt.pop %v2536
        %v2553 = vrsqrt.pop %v2537
        %v2554 = vrsqrt.pop %v2538
        %v2555 = vrsqrt.pop %v2539
        %v2556 = vrsqrt.pop %v2540
        %v2557 = vrsqrt.pop %v2541
        %v2558 = vrsqrt.pop %v2542
        %v2559 = vrsqrt.pop %v2543
        %v2560 = vrsqrt.pop %v2544
        %v2561 = vrsqrt.pop %v2545
        %v2562 = vrsqrt.pop %v2546
        %v2563 = vrsqrt.pop %v2547
        %v2564 = vmul.f32 %v1226, %v2548
        %v2565 = vmul.f32 %v1232, %v2549
        %v2566 = vmul.f32 %v1238, %v2550
        %v2567 = vmul.f32 %v1244, %v2551
        %v2568 = vmul.f32 %v1250, %v2552
        %v2569 = vmul.f32 %v1256, %v2553
        %v2570 = vmul.f32 %v1262, %v2554
        %v2571 = vmul.f32 %v1268, %v2555
        %v2572 = vmul.f32 %v1274, %v2556
        %v2573 = vmul.f32 %v1280, %v2557
        %v2574 = vmul.f32 %v1286, %v2558
        %v2575 = vmul.f32 %v1292, %v2559
        %v2576 = vmul.f32 %v1298, %v2560
        %v2577 = vmul.f32 %v1304, %v2561
        %v2578 = vmul.f32 %v1310, %v2562
        %v2579 = vmul.f32 %v1316, %v2563
        %v2580 = vmul.f32 %v2564, %v1694
        %v2581 = vmul.f32 %v2565, %v1694
        %v2582 = vmul.f32 %v2566, %v1694
        %v2583 = vmul.f32 %v2567, %v1694
        %v2584 = vmul.f32 %v2568, %v1694
        %v2585 = vmul.f32 %v2569, %v1694
        %v2586 = vmul.f32 %v2570, %v1694
        %v2587 = vmul.f32 %v2571, %v1694
        %v2588 = vmul.f32 %v2572, %v1694
        %v2589 = vmul.f32 %v2573, %v1694
        %v2590 = vmul.f32 %v2574, %v1694
        %v2591 = vmul.f32 %v2575, %v1694
        %v2592 = vmul.f32 %v2576, %v1694
        %v2593 = vmul.f32 %v2577, %v1694
        %v2594 = vmul.f32 %v2578, %v1694
        %v2595 = vmul.f32 %v2579, %v1694
        %2596 = vmatprep.subr.mxu0 0.0
        %2597 = vmatpush1.xpose.msra.mxu0 %v2580
        %2598 = vmatprep.subr.mxu0 0.0
        %2599 = vmatpush1.xpose.msra.mxu0 %v2581
        %2600 = vmatprep.subr.mxu0 0.0
        %2601 = vmatpush1.xpose.msra.mxu0 %v2582
        %2602 = vmatprep.subr.mxu0 0.0
        %2603 = vmatpush1.xpose.msra.mxu0 %v2583
        %2604 = vmatprep.subr.mxu0 0.0
        %2605 = vmatpush1.xpose.msra.mxu0 %v2584
        %2606 = vmatprep.subr.mxu0 0.0
        %2607 = vmatpush1.xpose.msra.mxu0 %v2585
        %2608 = vmatprep.subr.mxu0 0.0
        %2609 = vmatpush1.xpose.msra.mxu0 %v2586
        %2610 = vmatprep.subr.mxu0 0.0
        %2611 = vmatpush1.xpose.msra.mxu0 %v2587
        %2612 = vmatprep.subr.mxu0 0.0
        %2613 = vmatpush1.xpose.msra.mxu0 0.0
        %2614 = vmatprep.subr.mxu0 0.0
        %2615 = vmatpush1.xpose.msra.mxu0 0.0
        %2616 = vmatprep.subr.mxu0 0.0
        %2617 = vmatpush1.xpose.msra.mxu0 0.0
        %2618 = vmatprep.subr.mxu0 0.0
        %2619 = vmatpush1.xpose.msra.mxu0 0.0
        %2620 = vmatprep.subr.mxu0 0.0
        %2621 = vmatpush1.xpose.msra.mxu0 0.0
        %2622 = vmatprep.subr.mxu0 0.0
        %2623 = vmatpush1.xpose.msra.mxu0 0.0
        %2624 = vmatprep.subr.mxu0 0.0
        %2625 = vmatpush1.xpose.msra.mxu0 0.0
        %2626 = vmatprep.subr.mxu0 0.0
        %2627 = vmatpush1.xpose.msra.mxu0 0.0
        %2628 = vmatprep.subr.mxu0 0.0
        %2629 = vmatpush1.xpose.msra.mxu0 0.0
        %2630 = vmatprep.subr.mxu0 0.0
        %2631 = vmatpush1.xpose.msra.mxu0 0.0
        %2632 = vmatprep.subr.mxu0 0.0
        %2633 = vmatpush1.xpose.msra.mxu0 0.0
        %2634 = vmatprep.subr.mxu0 0.0
        %2635 = vmatpush1.xpose.msra.mxu0 0.0
        %2636 = vmatprep.subr.mxu0 0.0
        %2637 = vmatpush1.xpose.msra.mxu0 0.0
        %2638 = vmatprep.subr.mxu0 0.0
        %2639 = vmatpush1.xpose.msra.mxu0 0.0
        %2640 = vmatprep.subr.mxu0 0.0
        %2641 = vmatpush1.xpose.msra.mxu0 0.0
        %2642 = vmatprep.subr.mxu0 0.0
        %2643 = vmatpush1.xpose.msra.mxu0 0.0
        %2644 = vmatprep.subr.mxu0 0.0
        %2645 = vmatpush1.xpose.msra.mxu0 0.0
        %2646 = vmatprep.subr.mxu0 0.0
        %2647 = vmatpush1.xpose.msra.mxu0 0.0
        %2648 = vmatprep.subr.mxu0 0.0
        %2649 = vmatpush1.xpose.msra.mxu0 0.0
        %2650 = vmatprep.subr.mxu0 0.0
        %2651 = vmatpush1.xpose.msra.mxu0 0.0
        %2652 = vmatprep.subr.mxu0 0.0
        %2653 = vmatpush1.xpose.msra.mxu0 0.0
        %2654 = vmatprep.subr.mxu0 0.0
        %2655 = vmatpush1.xpose.msra.mxu0 0.0
        %2656 = vmatprep.subr.mxu0 0.0
        %2657 = vmatpush1.xpose.msra.mxu0 0.0
        %2658 = vmatprep.subr.mxu0 0.0
        %2659 = vmatpush1.xpose.msra.mxu0 0.0
        %2660 = vmatprep.mubr.f32.mxu0 0.0
        %2661 = vmatmul.mubr.f32.gmra.mrb[0].mxu0 %v2468
        %v2662 = vpop.f32.mrb[0].mxu0
        %v2663 = vadd.f32 0.0, %v2662
        %v2664 = vpop.f32.mrb[0].mxu0
        %2665 = vmatprep.mubr.f32.mxu0 0.0
        %2666 = vmatmul.mubr.f32.gmra.mrb[0].mxu0 %v2469
        %v2667 = vpop.f32.mrb[0].mxu0
        %v2668 = vadd.f32 0.0, %v2667
        %v2669 = vpop.f32.mrb[0].mxu0
        %2670 = vmatprep.mubr.f32.mxu0 0.0
        %2671 = vmatmul.mubr.f32.gmra.mrb[0].mxu0 %v2470
        %v2672 = vpop.f32.mrb[0].mxu0
        %v2673 = vadd.f32 0.0, %v2672
        %v2674 = vpop.f32.mrb[0].mxu0
        %2675 = vmatprep.mubr.f32.mxu0 0.0
        %2676 = vmatmul.mubr.f32.gmra.mrb[0].mxu0 %v2471
        %v2677 = vpop.f32.mrb[0].mxu0
        %v2678 = vadd.f32 0.0, %v2677
        %v2679 = vpop.f32.mrb[0].mxu0
        %2680 = vmatprep.mubr.f32.mxu0 0.0
        %2681 = vmatmul.mubr.f32.gmra.mrb[0].mxu0 %v2472
        %v2682 = vpop.f32.mrb[0].mxu0
        %v2683 = vadd.f32 0.0, %v2682
        %v2684 = vpop.f32.mrb[0].mxu0
        %2685 = vmatprep.mubr.f32.mxu0 0.0
        %2686 = vmatmul.mubr.f32.gmra.mrb[0].mxu0 %v2473
        %v2687 = vpop.f32.mrb[0].mxu0
        %v2688 = vadd.f32 0.0, %v2687
        %v2689 = vpop.f32.mrb[0].mxu0
        %2690 = vmatprep.mubr.f32.mxu0 0.0
        %2691 = vmatmul.mubr.f32.gmra.mrb[0].mxu0 %v2474
        %v2692 = vpop.f32.mrb[0].mxu0
        %v2693 = vadd.f32 0.0, %v2692
        %v2694 = vpop.f32.mrb[0].mxu0
        %2695 = vmatprep.mubr.f32.mxu0 0.0
        %2696 = vmatmul.mubr.f32.gmra.mrb[0].mxu0 %v2475
        %v2697 = vpop.f32.mrb[0].mxu0
        %v2698 = vadd.f32 0.0, %v2697
        %v2699 = vpop.f32.mrb[0].mxu0
        %2700 = vdwg.mxu0
        %2701 = vmatprep.subr.mxu0 0.0
        %2702 = vmatpush1.xpose.msra.mxu0 %v2588
        %2703 = vmatprep.subr.mxu0 0.0
        %2704 = vmatpush1.xpose.msra.mxu0 %v2589
        %2705 = vmatprep.subr.mxu0 0.0
        %2706 = vmatpush1.xpose.msra.mxu0 %v2590
        %2707 = vmatprep.subr.mxu0 0.0
        %2708 = vmatpush1.xpose.msra.mxu0 %v2591
        %2709 = vmatprep.subr.mxu0 0.0
        %2710 = vmatpush1.xpose.msra.mxu0 %v2592
        %2711 = vmatprep.subr.mxu0 0.0
        %2712 = vmatpush1.xpose.msra.mxu0 %v2593
        %2713 = vmatprep.subr.mxu0 0.0
        %2714 = vmatpush1.xpose.msra.mxu0 %v2594
        %2715 = vmatprep.subr.mxu0 0.0
        %2716 = vmatpush1.xpose.msra.mxu0 %v2595
        %2717 = vmatprep.subr.mxu0 0.0
        %2718 = vmatpush1.xpose.msra.mxu0 0.0
        %2719 = vmatprep.subr.mxu0 0.0
        %2720 = vmatpush1.xpose.msra.mxu0 0.0
        %2721 = vmatprep.subr.mxu0 0.0
        %2722 = vmatpush1.xpose.msra.mxu0 0.0
        %2723 = vmatprep.subr.mxu0 0.0
        %2724 = vmatpush1.xpose.msra.mxu0 0.0
        %2725 = vmatprep.subr.mxu0 0.0
        %2726 = vmatpush1.xpose.msra.mxu0 0.0
        %2727 = vmatprep.subr.mxu0 0.0
        %2728 = vmatpush1.xpose.msra.mxu0 0.0
        %2729 = vmatprep.subr.mxu0 0.0
        %2730 = vmatpush1.xpose.msra.mxu0 0.0
        %2731 = vmatprep.subr.mxu0 0.0
        %2732 = vmatpush1.xpose.msra.mxu0 0.0
        %2733 = vmatprep.subr.mxu0 0.0
        %2734 = vmatpush1.xpose.msra.mxu0 0.0
        %2735 = vmatprep.subr.mxu0 0.0
        %2736 = vmatpush1.xpose.msra.mxu0 0.0
        %2737 = vmatprep.subr.mxu0 0.0
        %2738 = vmatpush1.xpose.msra.mxu0 0.0
        %2739 = vmatprep.subr.mxu0 0.0
        %2740 = vmatpush1.xpose.msra.mxu0 0.0
        %2741 = vmatprep.subr.mxu0 0.0
        %2742 = vmatpush1.xpose.msra.mxu0 0.0
        %2743 = vmatprep.subr.mxu0 0.0
        %2744 = vmatpush1.xpose.msra.mxu0 0.0
        %2745 = vmatprep.subr.mxu0 0.0
        %2746 = vmatpush1.xpose.msra.mxu0 0.0
        %2747 = vmatprep.subr.mxu0 0.0
        %2748 = vmatpush1.xpose.msra.mxu0 0.0
        %2749 = vmatprep.subr.mxu0 0.0
        %2750 = vmatpush1.xpose.msra.mxu0 0.0
        %2751 = vmatprep.subr.mxu0 0.0
        %2752 = vmatpush1.xpose.msra.mxu0 0.0
        %2753 = vmatprep.subr.mxu0 0.0
        %2754 = vmatpush1.xpose.msra.mxu0 0.0
        %2755 = vmatprep.subr.mxu0 0.0
        %2756 = vmatpush1.xpose.msra.mxu0 0.0
        %2757 = vmatprep.subr.mxu0 0.0
        %2758 = vmatpush1.xpose.msra.mxu0 0.0
        %2759 = vmatprep.subr.mxu0 0.0
        %2760 = vmatpush1.xpose.msra.mxu0 0.0
        %2761 = vmatprep.subr.mxu0 0.0
        %2762 = vmatpush1.xpose.msra.mxu0 0.0
        %2763 = vmatprep.subr.mxu0 0.0
        %2764 = vmatpush1.xpose.msra.mxu0 0.0
        %2765 = vmatprep.mubr.f32.mxu0 0.0
        %2766 = vmatmul.mubr.f32.gmra.mrb[0].mxu0 %v2476
        %v2767 = vpop.f32.mrb[0].mxu0
        %v2768 = vadd.f32 0.0, %v2767
        %v2769 = vpop.f32.mrb[0].mxu0
        %2770 = vmatprep.mubr.f32.mxu0 0.0
        %2771 = vmatmul.mubr.f32.gmra.mrb[0].mxu0 %v2477
        %v2772 = vpop.f32.mrb[0].mxu0
        %v2773 = vadd.f32 0.0, %v2772
        %v2774 = vpop.f32.mrb[0].mxu0
        %2775 = vmatprep.mubr.f32.mxu0 0.0
        %2776 = vmatmul.mubr.f32.gmra.mrb[0].mxu0 %v2478
        %v2777 = vpop.f32.mrb[0].mxu0
        %v2778 = vadd.f32 0.0, %v2777
        %v2779 = vpop.f32.mrb[0].mxu0
        %2780 = vmatprep.mubr.f32.mxu0 0.0
        %2781 = vmatmul.mubr.f32.gmra.mrb[0].mxu0 %v2479
        %v2782 = vpop.f32.mrb[0].mxu0
        %v2783 = vadd.f32 0.0, %v2782
        %v2784 = vpop.f32.mrb[0].mxu0
        %2785 = vmatprep.mubr.f32.mxu0 0.0
        %2786 = vmatmul.mubr.f32.gmra.mrb[0].mxu0 %v2480
        %v2787 = vpop.f32.mrb[0].mxu0
        %v2788 = vadd.f32 0.0, %v2787
        %v2789 = vpop.f32.mrb[0].mxu0
        %2790 = vmatprep.mubr.f32.mxu0 0.0
        %2791 = vmatmul.mubr.f32.gmra.mrb[0].mxu0 %v2481
        %v2792 = vpop.f32.mrb[0].mxu0
        %v2793 = vadd.f32 0.0, %v2792
        %v2794 = vpop.f32.mrb[0].mxu0
        %2795 = vmatprep.mubr.f32.mxu0 0.0
        %2796 = vmatmul.mubr.f32.gmra.mrb[0].mxu0 %v2482
        %v2797 = vpop.f32.mrb[0].mxu0
        %v2798 = vadd.f32 0.0, %v2797
        %v2799 = vpop.f32.mrb[0].mxu0
        %2800 = vmatprep.mubr.f32.mxu0 0.0
        %2801 = vmatmul.mubr.f32.gmra.mrb[0].mxu0 %v2483
        %v2802 = vpop.f32.mrb[0].mxu0
        %v2803 = vadd.f32 0.0, %v2802
        %v2804 = vpop.f32.mrb[0].mxu0
        %2805 = vdwg.mxu0
        %v2806 = vmul.f32 %v2663, 8.0
        %v2807 = vmul.f32 %v2668, 8.0
        %v2808 = vmul.f32 %v2673, 8.0
        %v2809 = vmul.f32 %v2678, 8.0
        %v2810 = vmul.f32 %v2683, 8.0
        %v2811 = vmul.f32 %v2688, 8.0
        %v2812 = vmul.f32 %v2693, 8.0
        %v2813 = vmul.f32 %v2698, 8.0
        %v2814 = vmul.f32 %v2768, 8.0
        %v2815 = vmul.f32 %v2773, 8.0
        %v2816 = vmul.f32 %v2778, 8.0
        %v2817 = vmul.f32 %v2783, 8.0
        %v2818 = vmul.f32 %v2788, 8.0
        %v2819 = vmul.f32 %v2793, 8.0
        %v2820 = vmul.f32 %v2798, 8.0
        %v2821 = vmul.f32 %v2803, 8.0
        %v2822 = vsel %vm1937, %v2806, -inf
        %2823 = vmax.xlane.f32.xlu0 %v2822
        %v2824 = vpop.xlane.xlu0 %2823
        %v2825 = vsel %vm1937, %v2807, -inf
        %2826 = vmax.xlane.f32.xlu0 %v2825
        %v2827 = vpop.xlane.xlu0 %2826
        %v2828 = vsel %vm1937, %v2808, -inf
        %2829 = vmax.xlane.f32.xlu0 %v2828
        %v2830 = vpop.xlane.xlu0 %2829
        %v2831 = vsel %vm1937, %v2809, -inf
        %2832 = vmax.xlane.f32.xlu0 %v2831
        %v2833 = vpop.xlane.xlu0 %2832
        %v2834 = vsel %vm1937, %v2810, -inf
        %2835 = vmax.xlane.f32.xlu0 %v2834
        %v2836 = vpop.xlane.xlu0 %2835
        %v2837 = vsel %vm1937, %v2811, -inf
        %2838 = vmax.xlane.f32.xlu0 %v2837
        %v2839 = vpop.xlane.xlu0 %2838
        %v2840 = vsel %vm1937, %v2812, -inf
        %2841 = vmax.xlane.f32.xlu0 %v2840
        %v2842 = vpop.xlane.xlu0 %2841
        %v2843 = vsel %vm1937, %v2813, -inf
        %2844 = vmax.xlane.f32.xlu0 %v2843
        %v2845 = vpop.xlane.xlu0 %2844
        %v2846 = vsel %vm1937, %v2814, -inf
        %2847 = vmax.xlane.f32.xlu0 %v2846
        %v2848 = vpop.xlane.xlu0 %2847
        %v2849 = vsel %vm1937, %v2815, -inf
        %2850 = vmax.xlane.f32.xlu0 %v2849
        %v2851 = vpop.xlane.xlu0 %2850
        %v2852 = vsel %vm1937, %v2816, -inf
        %2853 = vmax.xlane.f32.xlu0 %v2852
        %v2854 = vpop.xlane.xlu0 %2853
        %v2855 = vsel %vm1937, %v2817, -inf
        %2856 = vmax.xlane.f32.xlu0 %v2855
        %v2857 = vpop.xlane.xlu0 %2856
        %v2858 = vsel %vm1937, %v2818, -inf
        %2859 = vmax.xlane.f32.xlu0 %v2858
        %v2860 = vpop.xlane.xlu0 %2859
        %v2861 = vsel %vm1937, %v2819, -inf
        %2862 = vmax.xlane.f32.xlu0 %v2861
        %v2863 = vpop.xlane.xlu0 %2862
        %v2864 = vsel %vm1937, %v2820, -inf
        %2865 = vmax.xlane.f32.xlu0 %v2864
        %v2866 = vpop.xlane.xlu0 %2865
        %v2867 = vsel %vm1937, %v2821, -inf
        %2868 = vmax.xlane.f32.xlu0 %v2867
        %v2869 = vpop.xlane.xlu0 %2868
        %v2870 = vsub.f32 %v2806, %v2824
        %v2871 = vsub.f32 %v2807, %v2827
        %v2872 = vsub.f32 %v2808, %v2830
        %v2873 = vsub.f32 %v2809, %v2833
        %v2874 = vsub.f32 %v2810, %v2836
        %v2875 = vsub.f32 %v2811, %v2839
        %v2876 = vsub.f32 %v2812, %v2842
        %v2877 = vsub.f32 %v2813, %v2845
        %v2878 = vsub.f32 %v2814, %v2848
        %v2879 = vsub.f32 %v2815, %v2851
        %v2880 = vsub.f32 %v2816, %v2854
        %v2881 = vsub.f32 %v2817, %v2857
        %v2882 = vsub.f32 %v2818, %v2860
        %v2883 = vsub.f32 %v2819, %v2863
        %v2884 = vsub.f32 %v2820, %v2866
        %v2885 = vsub.f32 %v2821, %v2869
        %v2886 = vmul.f32 %v2870, 1.442695
        %v2887 = vpow.pop %v2886
        %v2888 = vmul.f32 %v2871, 1.442695
        %v2889 = vpow.pop %v2888
        %v2890 = vmul.f32 %v2872, 1.442695
        %v2891 = vpow.pop %v2890
        %v2892 = vmul.f32 %v2873, 1.442695
        %v2893 = vpow.pop %v2892
        %v2894 = vmul.f32 %v2874, 1.442695
        %v2895 = vpow.pop %v2894
        %v2896 = vmul.f32 %v2875, 1.442695
        %v2897 = vpow.pop %v2896
        %v2898 = vmul.f32 %v2876, 1.442695
        %v2899 = vpow.pop %v2898
        %v2900 = vmul.f32 %v2877, 1.442695
        %v2901 = vpow.pop %v2900
        %v2902 = vmul.f32 %v2878, 1.442695
        %v2903 = vpow.pop %v2902
        %v2904 = vmul.f32 %v2879, 1.442695
        %v2905 = vpow.pop %v2904
        %v2906 = vmul.f32 %v2880, 1.442695
        %v2907 = vpow.pop %v2906
        %v2908 = vmul.f32 %v2881, 1.442695
        %v2909 = vpow.pop %v2908
        %v2910 = vmul.f32 %v2882, 1.442695
        %v2911 = vpow.pop %v2910
        %v2912 = vmul.f32 %v2883, 1.442695
        %v2913 = vpow.pop %v2912
        %v2914 = vmul.f32 %v2884, 1.442695
        %v2915 = vpow.pop %v2914
        %v2916 = vmul.f32 %v2885, 1.442695
        %v2917 = vpow.pop %v2916
        %v2918 = vsel %vm1937, %v2887, 0.0
        %2919 = vadd.xlane.f32.xlu0 %v2918
        %v2920 = vpop.xlane.xlu0 %2919
        %v2921 = vsel %vm1937, %v2889, 0.0
        %2922 = vadd.xlane.f32.xlu0 %v2921
        %v2923 = vpop.xlane.xlu0 %2922
        %v2924 = vsel %vm1937, %v2891, 0.0
        %2925 = vadd.xlane.f32.xlu0 %v2924
        %v2926 = vpop.xlane.xlu0 %2925
        %v2927 = vsel %vm1937, %v2893, 0.0
        %2928 = vadd.xlane.f32.xlu0 %v2927
        %v2929 = vpop.xlane.xlu0 %2928
        %v2930 = vsel %vm1937, %v2895, 0.0
        %2931 = vadd.xlane.f32.xlu0 %v2930
        %v2932 = vpop.xlane.xlu0 %2931
        %v2933 = vsel %vm1937, %v2897, 0.0
        %2934 = vadd.xlane.f32.xlu0 %v2933
        %v2935 = vpop.xlane.xlu0 %2934
        %v2936 = vsel %vm1937, %v2899, 0.0
        %2937 = vadd.xlane.f32.xlu0 %v2936
        %v2938 = vpop.xlane.xlu0 %2937
        %v2939 = vsel %vm1937, %v2901, 0.0
        %2940 = vadd.xlane.f32.xlu0 %v2939
        %v2941 = vpop.xlane.xlu0 %2940
        %v2942 = vsel %vm1937, %v2903, 0.0
        %2943 = vadd.xlane.f32.xlu0 %v2942
        %v2944 = vpop.xlane.xlu0 %2943
        %v2945 = vsel %vm1937, %v2905, 0.0
        %2946 = vadd.xlane.f32.xlu0 %v2945
        %v2947 = vpop.xlane.xlu0 %2946
        %v2948 = vsel %vm1937, %v2907, 0.0
        %2949 = vadd.xlane.f32.xlu0 %v2948
        %v2950 = vpop.xlane.xlu0 %2949
        %v2951 = vsel %vm1937, %v2909, 0.0
        %2952 = vadd.xlane.f32.xlu0 %v2951
        %v2953 = vpop.xlane.xlu0 %2952
        %v2954 = vsel %vm1937, %v2911, 0.0
        %2955 = vadd.xlane.f32.xlu0 %v2954
        %v2956 = vpop.xlane.xlu0 %2955
        %v2957 = vsel %vm1937, %v2913, 0.0
        %2958 = vadd.xlane.f32.xlu0 %v2957
        %v2959 = vpop.xlane.xlu0 %2958
        %v2960 = vsel %vm1937, %v2915, 0.0
        %2961 = vadd.xlane.f32.xlu0 %v2960
        %v2962 = vpop.xlane.xlu0 %2961
        %v2963 = vsel %vm1937, %v2917, 0.0
        %2964 = vadd.xlane.f32.xlu0 %v2963
        %v2965 = vpop.xlane.xlu0 %2964
        %v2966 = vrcp.pop %v2920
        %v2967 = vrcp.pop %v2923
        %v2968 = vrcp.pop %v2926
        %v2969 = vrcp.pop %v2929
        %v2970 = vrcp.pop %v2932
        %v2971 = vrcp.pop %v2935
        %v2972 = vrcp.pop %v2938
        %v2973 = vrcp.pop %v2941
        %v2974 = vrcp.pop %v2944
        %v2975 = vrcp.pop %v2947
        %v2976 = vrcp.pop %v2950
        %v2977 = vrcp.pop %v2953
        %v2978 = vrcp.pop %v2956
        %v2979 = vrcp.pop %v2959
        %v2980 = vrcp.pop %v2962
        %v2981 = vrcp.pop %v2965
        %v2982 = vmul.f32 %v2887, %v2966
        %v2983 = vmul.f32 %v2889, %v2967
        %v2984 = vmul.f32 %v2891, %v2968
        %v2985 = vmul.f32 %v2893, %v2969
        %v2986 = vmul.f32 %v2895, %v2970
        %v2987 = vmul.f32 %v2897, %v2971
        %v2988 = vmul.f32 %v2899, %v2972
        %v2989 = vmul.f32 %v2901, %v2973
        %v2990 = vmul.f32 %v2903, %v2974
        %v2991 = vmul.f32 %v2905, %v2975
        %v2992 = vmul.f32 %v2907, %v2976
        %v2993 = vmul.f32 %v2909, %v2977
        %v2994 = vmul.f32 %v2911, %v2978
        %v2995 = vmul.f32 %v2913, %v2979
        %v2996 = vmul.f32 %v2915, %v2980
        %v2997 = vmul.f32 %v2917, %v2981
        %v2999 = vsel %vm1937, %v2982, 0
        %v3002 = vsel %vm1937, %v2983, 0
        %v3005 = vsel %vm1937, %v2984, 0
        %v3008 = vsel %vm1937, %v2985, 0
        %v3011 = vsel %vm1937, %v2986, 0
        %v3014 = vsel %vm1937, %v2987, 0
        %v3017 = vsel %vm1937, %v2988, 0
        %v3020 = vsel %vm1937, %v2989, 0
        %3022 = vmatprep.subr.mxu0 0.0
        %3023 = vmatpush1.msra.mxu0 %v1387
        %3024 = vmatprep.subr.mxu0 0.0
        %3025 = vmatpush1.msra.mxu0 %v1393
        %3026 = vmatprep.subr.mxu0 0.0
        %3027 = vmatpush1.msra.mxu0 %v1399
        %3028 = vmatprep.subr.mxu0 0.0
        %3029 = vmatpush1.msra.mxu0 %v1405
        %3030 = vmatprep.subr.mxu0 0.0
        %3031 = vmatpush1.msra.mxu0 %v1411
        %3032 = vmatprep.subr.mxu0 0.0
        %3033 = vmatpush1.msra.mxu0 %v1417
        %3034 = vmatprep.subr.mxu0 0.0
        %3035 = vmatpush1.msra.mxu0 %v1423
        %3036 = vmatprep.subr.mxu0 0.0
        %3037 = vmatpush1.msra.mxu0 %v1429
        %3038 = vmatprep.subr.mxu0 0.0
        %3039 = vmatpush1.msra.mxu0 0.0
        %3040 = vmatprep.subr.mxu0 0.0
        %3041 = vmatpush1.msra.mxu0 0.0
        %3042 = vmatprep.subr.mxu0 0.0
        %3043 = vmatpush1.msra.mxu0 0.0
        %3044 = vmatprep.subr.mxu0 0.0
        %3045 = vmatpush1.msra.mxu0 0.0
        %3046 = vmatprep.subr.mxu0 0.0
        %3047 = vmatpush1.msra.mxu0 0.0
        %3048 = vmatprep.subr.mxu0 0.0
        %3049 = vmatpush1.msra.mxu0 0.0
        %3050 = vmatprep.subr.mxu0 0.0
        %3051 = vmatpush1.msra.mxu0 0.0
        %3052 = vmatprep.subr.mxu0 0.0
        %3053 = vmatpush1.msra.mxu0 0.0
        %3054 = vmatprep.subr.mxu0 0.0
        %3055 = vmatpush1.msra.mxu0 0.0
        %3056 = vmatprep.subr.mxu0 0.0
        %3057 = vmatpush1.msra.mxu0 0.0
        %3058 = vmatprep.subr.mxu0 0.0
        %3059 = vmatpush1.msra.mxu0 0.0
        %3060 = vmatprep.subr.mxu0 0.0
        %3061 = vmatpush1.msra.mxu0 0.0
        %3062 = vmatprep.subr.mxu0 0.0
        %3063 = vmatpush1.msra.mxu0 0.0
        %3064 = vmatprep.subr.mxu0 0.0
        %3065 = vmatpush1.msra.mxu0 0.0
        %3066 = vmatprep.subr.mxu0 0.0
        %3067 = vmatpush1.msra.mxu0 0.0
        %3068 = vmatprep.subr.mxu0 0.0
        %3069 = vmatpush1.msra.mxu0 0.0
        %3070 = vmatprep.subr.mxu0 0.0
        %3071 = vmatpush1.msra.mxu0 0.0
        %3072 = vmatprep.subr.mxu0 0.0
        %3073 = vmatpush1.msra.mxu0 0.0
        %3074 = vmatprep.subr.mxu0 0.0
        %3075 = vmatpush1.msra.mxu0 0.0
        %3076 = vmatprep.subr.mxu0 0.0
        %3077 = vmatpush1.msra.mxu0 0.0
        %3078 = vmatprep.subr.mxu0 0.0
        %3079 = vmatpush1.msra.mxu0 0.0
        %3080 = vmatprep.subr.mxu0 0.0
        %3081 = vmatpush1.msra.mxu0 0.0
        %3082 = vmatprep.subr.mxu0 0.0
        %3083 = vmatpush1.msra.mxu0 0.0
        %3084 = vmatprep.subr.mxu0 0.0
        %3085 = vmatpush1.msra.mxu0 0.0
        %3086 = vmatprep.mubr.f32.mxu0 0.0
        %3087 = vmatmul.mubr.f32.gmra.mrb[0].mxu0 %v2999
        %v3088 = vpop.f32.mrb[0].mxu0
        %v3089 = vadd.f32 0.0, %v3088
        %v3090 = vpop.f32.mrb[0].mxu0
        %3091 = vmatprep.mubr.f32.mxu0 0.0
        %3092 = vmatmul.mubr.f32.gmra.mrb[0].mxu0 %v3002
        %v3093 = vpop.f32.mrb[0].mxu0
        %v3094 = vadd.f32 0.0, %v3093
        %v3095 = vpop.f32.mrb[0].mxu0
        %3096 = vmatprep.mubr.f32.mxu0 0.0
        %3097 = vmatmul.mubr.f32.gmra.mrb[0].mxu0 %v3005
        %v3098 = vpop.f32.mrb[0].mxu0
        %v3099 = vadd.f32 0.0, %v3098
        %v3100 = vpop.f32.mrb[0].mxu0
        %3101 = vmatprep.mubr.f32.mxu0 0.0
        %3102 = vmatmul.mubr.f32.gmra.mrb[0].mxu0 %v3008
        %v3103 = vpop.f32.mrb[0].mxu0
        %v3104 = vadd.f32 0.0, %v3103
        %v3105 = vpop.f32.mrb[0].mxu0
        %3106 = vmatprep.mubr.f32.mxu0 0.0
        %3107 = vmatmul.mubr.f32.gmra.mrb[0].mxu0 %v3011
        %v3108 = vpop.f32.mrb[0].mxu0
        %v3109 = vadd.f32 0.0, %v3108
        %v3110 = vpop.f32.mrb[0].mxu0
        %3111 = vmatprep.mubr.f32.mxu0 0.0
        %3112 = vmatmul.mubr.f32.gmra.mrb[0].mxu0 %v3014
        %v3113 = vpop.f32.mrb[0].mxu0
        %v3114 = vadd.f32 0.0, %v3113
        %v3115 = vpop.f32.mrb[0].mxu0
        %3116 = vmatprep.mubr.f32.mxu0 0.0
        %3117 = vmatmul.mubr.f32.gmra.mrb[0].mxu0 %v3017
        %v3118 = vpop.f32.mrb[0].mxu0
        %v3119 = vadd.f32 0.0, %v3118
        %v3120 = vpop.f32.mrb[0].mxu0
        %3121 = vmatprep.mubr.f32.mxu0 0.0
        %3122 = vmatmul.mubr.f32.gmra.mrb[0].mxu0 %v3020
        %v3123 = vpop.f32.mrb[0].mxu0
        %v3124 = vadd.f32 0.0, %v3123
        %v3125 = vpop.f32.mrb[0].mxu0
        %3126 = vdwg.mxu0
        %v3128 = vsel %vm1937, %v2990, 0
        %v3131 = vsel %vm1937, %v2991, 0
        %v3134 = vsel %vm1937, %v2992, 0
        %v3137 = vsel %vm1937, %v2993, 0
        %v3140 = vsel %vm1937, %v2994, 0
        %v3143 = vsel %vm1937, %v2995, 0
        %v3146 = vsel %vm1937, %v2996, 0
        %v3149 = vsel %vm1937, %v2997, 0
        %3151 = vmatprep.subr.mxu0 0.0
        %3152 = vmatpush1.msra.mxu0 %v1435
        %3153 = vmatprep.subr.mxu0 0.0
        %3154 = vmatpush1.msra.mxu0 %v1441
        %3155 = vmatprep.subr.mxu0 0.0
        %3156 = vmatpush1.msra.mxu0 %v1447
        %3157 = vmatprep.subr.mxu0 0.0
        %3158 = vmatpush1.msra.mxu0 %v1453
        %3159 = vmatprep.subr.mxu0 0.0
        %3160 = vmatpush1.msra.mxu0 %v1459
        %3161 = vmatprep.subr.mxu0 0.0
        %3162 = vmatpush1.msra.mxu0 %v1465
        %3163 = vmatprep.subr.mxu0 0.0
        %3164 = vmatpush1.msra.mxu0 %v1471
        %3165 = vmatprep.subr.mxu0 0.0
        %3166 = vmatpush1.msra.mxu0 %v1477
        %3167 = vmatprep.subr.mxu0 0.0
        %3168 = vmatpush1.msra.mxu0 0.0
        %3169 = vmatprep.subr.mxu0 0.0
        %3170 = vmatpush1.msra.mxu0 0.0
        %3171 = vmatprep.subr.mxu0 0.0
        %3172 = vmatpush1.msra.mxu0 0.0
        %3173 = vmatprep.subr.mxu0 0.0
        %3174 = vmatpush1.msra.mxu0 0.0
        %3175 = vmatprep.subr.mxu0 0.0
        %3176 = vmatpush1.msra.mxu0 0.0
        %3177 = vmatprep.subr.mxu0 0.0
        %3178 = vmatpush1.msra.mxu0 0.0
        %3179 = vmatprep.subr.mxu0 0.0
        %3180 = vmatpush1.msra.mxu0 0.0
        %3181 = vmatprep.subr.mxu0 0.0
        %3182 = vmatpush1.msra.mxu0 0.0
        %3183 = vmatprep.subr.mxu0 0.0
        %3184 = vmatpush1.msra.mxu0 0.0
        %3185 = vmatprep.subr.mxu0 0.0
        %3186 = vmatpush1.msra.mxu0 0.0
        %3187 = vmatprep.subr.mxu0 0.0
        %3188 = vmatpush1.msra.mxu0 0.0
        %3189 = vmatprep.subr.mxu0 0.0
        %3190 = vmatpush1.msra.mxu0 0.0
        %3191 = vmatprep.subr.mxu0 0.0
        %3192 = vmatpush1.msra.mxu0 0.0
        %3193 = vmatprep.subr.mxu0 0.0
        %3194 = vmatpush1.msra.mxu0 0.0
        %3195 = vmatprep.subr.mxu0 0.0
        %3196 = vmatpush1.msra.mxu0 0.0
        %3197 = vmatprep.subr.mxu0 0.0
        %3198 = vmatpush1.msra.mxu0 0.0
        %3199 = vmatprep.subr.mxu0 0.0
        %3200 = vmatpush1.msra.mxu0 0.0
        %3201 = vmatprep.subr.mxu0 0.0
        %3202 = vmatpush1.msra.mxu0 0.0
        %3203 = vmatprep.subr.mxu0 0.0
        %3204 = vmatpush1.msra.mxu0 0.0
        %3205 = vmatprep.subr.mxu0 0.0
        %3206 = vmatpush1.msra.mxu0 0.0
        %3207 = vmatprep.subr.mxu0 0.0
        %3208 = vmatpush1.msra.mxu0 0.0
        %3209 = vmatprep.subr.mxu0 0.0
        %3210 = vmatpush1.msra.mxu0 0.0
        %3211 = vmatprep.subr.mxu0 0.0
        %3212 = vmatpush1.msra.mxu0 0.0
        %3213 = vmatprep.subr.mxu0 0.0
        %3214 = vmatpush1.msra.mxu0 0.0
        %3215 = vmatprep.mubr.f32.mxu0 0.0
        %3216 = vmatmul.mubr.f32.gmra.mrb[0].mxu0 %v3128
        %v3217 = vpop.f32.mrb[0].mxu0
        %v3218 = vadd.f32 0.0, %v3217
        %v3219 = vpop.f32.mrb[0].mxu0
        %3220 = vmatprep.mubr.f32.mxu0 0.0
        %3221 = vmatmul.mubr.f32.gmra.mrb[0].mxu0 %v3131
        %v3222 = vpop.f32.mrb[0].mxu0
        %v3223 = vadd.f32 0.0, %v3222
        %v3224 = vpop.f32.mrb[0].mxu0
        %3225 = vmatprep.mubr.f32.mxu0 0.0
        %3226 = vmatmul.mubr.f32.gmra.mrb[0].mxu0 %v3134
        %v3227 = vpop.f32.mrb[0].mxu0
        %v3228 = vadd.f32 0.0, %v3227
        %v3229 = vpop.f32.mrb[0].mxu0
        %3230 = vmatprep.mubr.f32.mxu0 0.0
        %3231 = vmatmul.mubr.f32.gmra.mrb[0].mxu0 %v3137
        %v3232 = vpop.f32.mrb[0].mxu0
        %v3233 = vadd.f32 0.0, %v3232
        %v3234 = vpop.f32.mrb[0].mxu0
        %3235 = vmatprep.mubr.f32.mxu0 0.0
        %3236 = vmatmul.mubr.f32.gmra.mrb[0].mxu0 %v3140
        %v3237 = vpop.f32.mrb[0].mxu0
        %v3238 = vadd.f32 0.0, %v3237
        %v3239 = vpop.f32.mrb[0].mxu0
        %3240 = vmatprep.mubr.f32.mxu0 0.0
        %3241 = vmatmul.mubr.f32.gmra.mrb[0].mxu0 %v3143
        %v3242 = vpop.f32.mrb[0].mxu0
        %v3243 = vadd.f32 0.0, %v3242
        %v3244 = vpop.f32.mrb[0].mxu0
        %3245 = vmatprep.mubr.f32.mxu0 0.0
        %3246 = vmatmul.mubr.f32.gmra.mrb[0].mxu0 %v3146
        %v3247 = vpop.f32.mrb[0].mxu0
        %v3248 = vadd.f32 0.0, %v3247
        %v3249 = vpop.f32.mrb[0].mxu0
        %3250 = vmatprep.mubr.f32.mxu0 0.0
        %3251 = vmatmul.mubr.f32.gmra.mrb[0].mxu0 %v3149
        %v3252 = vpop.f32.mrb[0].mxu0
        %v3253 = vadd.f32 0.0, %v3252
        %v3254 = vpop.f32.mrb[0].mxu0
        %3255 = vdwg.mxu0
        %3256 = vmatprep.subr.mxu0 0.0
        %3257 = vmatpush1.msra.mxu0 %v980
        %3258 = vmatprep.subr.mxu0 0.0
        %3259 = vmatpush1.msra.mxu0 %v981
        %3260 = vmatprep.subr.mxu0 0.0
        %3261 = vmatpush1.msra.mxu0 %v982
        %3262 = vmatprep.subr.mxu0 0.0
        %3263 = vmatpush1.msra.mxu0 %v983
        %3264 = vmatprep.subr.mxu0 0.0
        %3265 = vmatpush1.msra.mxu0 %v984
        %3266 = vmatprep.subr.mxu0 0.0
        %3267 = vmatpush1.msra.mxu0 %v985
        %3268 = vmatprep.subr.mxu0 0.0
        %3269 = vmatpush1.msra.mxu0 %v986
        %3270 = vmatprep.subr.mxu0 0.0
        %3271 = vmatpush1.msra.mxu0 %v987
        %3272 = vmatprep.subr.mxu0 0.0
        %3273 = vmatpush1.msra.mxu0 %v988
        %3274 = vmatprep.subr.mxu0 0.0
        %3275 = vmatpush1.msra.mxu0 %v989
        %3276 = vmatprep.subr.mxu0 0.0
        %3277 = vmatpush1.msra.mxu0 %v990
        %3278 = vmatprep.subr.mxu0 0.0
        %3279 = vmatpush1.msra.mxu0 %v991
        %3280 = vmatprep.subr.mxu0 0.0
        %3281 = vmatpush1.msra.mxu0 %v992
        %3282 = vmatprep.subr.mxu0 0.0
        %3283 = vmatpush1.msra.mxu0 %v993
        %3284 = vmatprep.subr.mxu0 0.0
        %3285 = vmatpush1.msra.mxu0 %v994
        %3286 = vmatprep.subr.mxu0 0.0
        %3287 = vmatpush1.msra.mxu0 %v995
        %3288 = vmatprep.subr.mxu0 0.0
        %3289 = vmatpush1.msra.mxu0 0.0
        %3290 = vmatprep.subr.mxu0 0.0
        %3291 = vmatpush1.msra.mxu0 0.0
        %3292 = vmatprep.subr.mxu0 0.0
        %3293 = vmatpush1.msra.mxu0 0.0
        %3294 = vmatprep.subr.mxu0 0.0
        %3295 = vmatpush1.msra.mxu0 0.0
        %3296 = vmatprep.subr.mxu0 0.0
        %3297 = vmatpush1.msra.mxu0 0.0
        %3298 = vmatprep.subr.mxu0 0.0
        %3299 = vmatpush1.msra.mxu0 0.0
        %3300 = vmatprep.subr.mxu0 0.0
        %3301 = vmatpush1.msra.mxu0 0.0
        %3302 = vmatprep.subr.mxu0 0.0
        %3303 = vmatpush1.msra.mxu0 0.0
        %3304 = vmatprep.subr.mxu0 0.0
        %3305 = vmatpush1.msra.mxu0 0.0
        %3306 = vmatprep.subr.mxu0 0.0
        %3307 = vmatpush1.msra.mxu0 0.0
        %3308 = vmatprep.subr.mxu0 0.0
        %3309 = vmatpush1.msra.mxu0 0.0
        %3310 = vmatprep.subr.mxu0 0.0
        %3311 = vmatpush1.msra.mxu0 0.0
        %3312 = vmatprep.subr.mxu0 0.0
        %3313 = vmatpush1.msra.mxu0 0.0
        %3314 = vmatprep.subr.mxu0 0.0
        %3315 = vmatpush1.msra.mxu0 0.0
        %3316 = vmatprep.subr.mxu0 0.0
        %3317 = vmatpush1.msra.mxu0 0.0
        %3318 = vmatprep.subr.mxu0 0.0
        %3319 = vmatpush1.msra.mxu0 0.0
        %3320 = vmatprep.mubr.f32.mxu0 0.0
        %3321 = vmatmul.mubr.f32.gmra.mrb[0].mxu0 %v3089
        %v3322 = vpop.f32.mrb[0].mxu0
        %v3323 = vadd.f32 0.0, %v3322
        %v3324 = vpop.f32.mrb[0].mxu0
        %3325 = vmatprep.mubr.f32.mxu0 0.0
        %3326 = vmatmul.mubr.f32.gmra.mrb[0].mxu0 %v3094
        %v3327 = vpop.f32.mrb[0].mxu0
        %v3328 = vadd.f32 0.0, %v3327
        %v3329 = vpop.f32.mrb[0].mxu0
        %3330 = vmatprep.mubr.f32.mxu0 0.0
        %3331 = vmatmul.mubr.f32.gmra.mrb[0].mxu0 %v3099
        %v3332 = vpop.f32.mrb[0].mxu0
        %v3333 = vadd.f32 0.0, %v3332
        %v3334 = vpop.f32.mrb[0].mxu0
        %3335 = vmatprep.mubr.f32.mxu0 0.0
        %3336 = vmatmul.mubr.f32.gmra.mrb[0].mxu0 %v3104
        %v3337 = vpop.f32.mrb[0].mxu0
        %v3338 = vadd.f32 0.0, %v3337
        %v3339 = vpop.f32.mrb[0].mxu0
        %3340 = vmatprep.mubr.f32.mxu0 0.0
        %3341 = vmatmul.mubr.f32.gmra.mrb[0].mxu0 %v3109
        %v3342 = vpop.f32.mrb[0].mxu0
        %v3343 = vadd.f32 0.0, %v3342
        %v3344 = vpop.f32.mrb[0].mxu0
        %3345 = vmatprep.mubr.f32.mxu0 0.0
        %3346 = vmatmul.mubr.f32.gmra.mrb[0].mxu0 %v3114
        %v3347 = vpop.f32.mrb[0].mxu0
        %v3348 = vadd.f32 0.0, %v3347
        %v3349 = vpop.f32.mrb[0].mxu0
        %3350 = vmatprep.mubr.f32.mxu0 0.0
        %3351 = vmatmul.mubr.f32.gmra.mrb[0].mxu0 %v3119
        %v3352 = vpop.f32.mrb[0].mxu0
        %v3353 = vadd.f32 0.0, %v3352
        %v3354 = vpop.f32.mrb[0].mxu0
        %3355 = vmatprep.mubr.f32.mxu0 0.0
        %3356 = vmatmul.mubr.f32.gmra.mrb[0].mxu0 %v3124
        %v3357 = vpop.f32.mrb[0].mxu0
        %v3358 = vadd.f32 0.0, %v3357
        %v3359 = vpop.f32.mrb[0].mxu0
        %3360 = vmatprep.mubr.f32.mxu0 0.0
        %3361 = vmatmul.mubr.f32.gmra.mrb[0].mxu0 %v3218
        %v3362 = vpop.f32.mrb[0].mxu0
        %v3363 = vadd.f32 0.0, %v3362
        %v3364 = vpop.f32.mrb[0].mxu0
        %3365 = vmatprep.mubr.f32.mxu0 0.0
        %3366 = vmatmul.mubr.f32.gmra.mrb[0].mxu0 %v3223
        %v3367 = vpop.f32.mrb[0].mxu0
        %v3368 = vadd.f32 0.0, %v3367
        %v3369 = vpop.f32.mrb[0].mxu0
        %3370 = vmatprep.mubr.f32.mxu0 0.0
        %3371 = vmatmul.mubr.f32.gmra.mrb[0].mxu0 %v3228
        %v3372 = vpop.f32.mrb[0].mxu0
        %v3373 = vadd.f32 0.0, %v3372
        %v3374 = vpop.f32.mrb[0].mxu0
        %3375 = vmatprep.mubr.f32.mxu0 0.0
        %3376 = vmatmul.mubr.f32.gmra.mrb[0].mxu0 %v3233
        %v3377 = vpop.f32.mrb[0].mxu0
        %v3378 = vadd.f32 0.0, %v3377
        %v3379 = vpop.f32.mrb[0].mxu0
        %3380 = vmatprep.mubr.f32.mxu0 0.0
        %3381 = vmatmul.mubr.f32.gmra.mrb[0].mxu0 %v3238
        %v3382 = vpop.f32.mrb[0].mxu0
        %v3383 = vadd.f32 0.0, %v3382
        %v3384 = vpop.f32.mrb[0].mxu0
        %3385 = vmatprep.mubr.f32.mxu0 0.0
        %3386 = vmatmul.mubr.f32.gmra.mrb[0].mxu0 %v3243
        %v3387 = vpop.f32.mrb[0].mxu0
        %v3388 = vadd.f32 0.0, %v3387
        %v3389 = vpop.f32.mrb[0].mxu0
        %3390 = vmatprep.mubr.f32.mxu0 0.0
        %3391 = vmatmul.mubr.f32.gmra.mrb[0].mxu0 %v3248
        %v3392 = vpop.f32.mrb[0].mxu0
        %v3393 = vadd.f32 0.0, %v3392
        %v3394 = vpop.f32.mrb[0].mxu0
        %3395 = vmatprep.mubr.f32.mxu0 0.0
        %3396 = vmatmul.mubr.f32.gmra.mrb[0].mxu0 %v3253
        %v3397 = vpop.f32.mrb[0].mxu0
        %v3398 = vadd.f32 0.0, %v3397
        %v3399 = vpop.f32.mrb[0].mxu0
        %3400 = vdwg.mxu0
        %3401 = vmatprep.subr.mxu0 0.0
        %3402 = vmatpush1.msra.mxu0 %v964
        %3403 = vmatprep.subr.mxu0 0.0
        %3404 = vmatpush1.msra.mxu0 %v965
        %3405 = vmatprep.subr.mxu0 0.0
        %3406 = vmatpush1.msra.mxu0 %v966
        %3407 = vmatprep.subr.mxu0 0.0
        %3408 = vmatpush1.msra.mxu0 %v967
        %3409 = vmatprep.subr.mxu0 0.0
        %3410 = vmatpush1.msra.mxu0 %v968
        %3411 = vmatprep.subr.mxu0 0.0
        %3412 = vmatpush1.msra.mxu0 %v969
        %3413 = vmatprep.subr.mxu0 0.0
        %3414 = vmatpush1.msra.mxu0 %v970
        %3415 = vmatprep.subr.mxu0 0.0
        %3416 = vmatpush1.msra.mxu0 %v971
        %3417 = vmatprep.subr.mxu0 0.0
        %3418 = vmatpush1.msra.mxu0 %v972
        %3419 = vmatprep.subr.mxu0 0.0
        %3420 = vmatpush1.msra.mxu0 %v973
        %3421 = vmatprep.subr.mxu0 0.0
        %3422 = vmatpush1.msra.mxu0 %v974
        %3423 = vmatprep.subr.mxu0 0.0
        %3424 = vmatpush1.msra.mxu0 %v975
        %3425 = vmatprep.subr.mxu0 0.0
        %3426 = vmatpush1.msra.mxu0 %v976
        %3427 = vmatprep.subr.mxu0 0.0
        %3428 = vmatpush1.msra.mxu0 %v977
        %3429 = vmatprep.subr.mxu0 0.0
        %3430 = vmatpush1.msra.mxu0 %v978
        %3431 = vmatprep.subr.mxu0 0.0
        %3432 = vmatpush1.msra.mxu0 %v979
        %3433 = vmatprep.subr.mxu0 0.0
        %3434 = vmatpush1.msra.mxu0 0.0
        %3435 = vmatprep.subr.mxu0 0.0
        %3436 = vmatpush1.msra.mxu0 0.0
        %3437 = vmatprep.subr.mxu0 0.0
        %3438 = vmatpush1.msra.mxu0 0.0
        %3439 = vmatprep.subr.mxu0 0.0
        %3440 = vmatpush1.msra.mxu0 0.0
        %3441 = vmatprep.subr.mxu0 0.0
        %3442 = vmatpush1.msra.mxu0 0.0
        %3443 = vmatprep.subr.mxu0 0.0
        %3444 = vmatpush1.msra.mxu0 0.0
        %3445 = vmatprep.subr.mxu0 0.0
        %3446 = vmatpush1.msra.mxu0 0.0
        %3447 = vmatprep.subr.mxu0 0.0
        %3448 = vmatpush1.msra.mxu0 0.0
        %3449 = vmatprep.subr.mxu0 0.0
        %3450 = vmatpush1.msra.mxu0 0.0
        %3451 = vmatprep.subr.mxu0 0.0
        %3452 = vmatpush1.msra.mxu0 0.0
        %3453 = vmatprep.subr.mxu0 0.0
        %3454 = vmatpush1.msra.mxu0 0.0
        %3455 = vmatprep.subr.mxu0 0.0
        %3456 = vmatpush1.msra.mxu0 0.0
        %3457 = vmatprep.subr.mxu0 0.0
        %3458 = vmatpush1.msra.mxu0 0.0
        %3459 = vmatprep.subr.mxu0 0.0
        %3460 = vmatpush1.msra.mxu0 0.0
        %3461 = vmatprep.subr.mxu0 0.0
        %3462 = vmatpush1.msra.mxu0 0.0
        %3463 = vmatprep.subr.mxu0 0.0
        %3464 = vmatpush1.msra.mxu0 0.0
        %3465 = vmatprep.mubr.f32.mxu0 0.0
        %3466 = vmatmul.mubr.f32.gmra.mrb[0].mxu0 %v2205
        %v3467 = vpop.f32.mrb[0].mxu0
        %v3468 = vadd.f32 %v3323, %v3467
        %v3469 = vpop.f32.mrb[0].mxu0
        %3470 = vmatprep.mubr.f32.mxu0 0.0
        %3471 = vmatmul.mubr.f32.gmra.mrb[0].mxu0 %v2210
        %v3472 = vpop.f32.mrb[0].mxu0
        %v3473 = vadd.f32 %v3328, %v3472
        %v3474 = vpop.f32.mrb[0].mxu0
        %3475 = vmatprep.mubr.f32.mxu0 0.0
        %3476 = vmatmul.mubr.f32.gmra.mrb[0].mxu0 %v2215
        %v3477 = vpop.f32.mrb[0].mxu0
        %v3478 = vadd.f32 %v3333, %v3477
        %v3479 = vpop.f32.mrb[0].mxu0
        %3480 = vmatprep.mubr.f32.mxu0 0.0
        %3481 = vmatmul.mubr.f32.gmra.mrb[0].mxu0 %v2220
        %v3482 = vpop.f32.mrb[0].mxu0
        %v3483 = vadd.f32 %v3338, %v3482
        %v3484 = vpop.f32.mrb[0].mxu0
        %3485 = vmatprep.mubr.f32.mxu0 0.0
        %3486 = vmatmul.mubr.f32.gmra.mrb[0].mxu0 %v2225
        %v3487 = vpop.f32.mrb[0].mxu0
        %v3488 = vadd.f32 %v3343, %v3487
        %v3489 = vpop.f32.mrb[0].mxu0
        %3490 = vmatprep.mubr.f32.mxu0 0.0
        %3491 = vmatmul.mubr.f32.gmra.mrb[0].mxu0 %v2230
        %v3492 = vpop.f32.mrb[0].mxu0
        %v3493 = vadd.f32 %v3348, %v3492
        %v3494 = vpop.f32.mrb[0].mxu0
        %3495 = vmatprep.mubr.f32.mxu0 0.0
        %3496 = vmatmul.mubr.f32.gmra.mrb[0].mxu0 %v2235
        %v3497 = vpop.f32.mrb[0].mxu0
        %v3498 = vadd.f32 %v3353, %v3497
        %v3499 = vpop.f32.mrb[0].mxu0
        %3500 = vmatprep.mubr.f32.mxu0 0.0
        %3501 = vmatmul.mubr.f32.gmra.mrb[0].mxu0 %v2240
        %v3502 = vpop.f32.mrb[0].mxu0
        %v3503 = vadd.f32 %v3358, %v3502
        %v3504 = vpop.f32.mrb[0].mxu0
        %3505 = vmatprep.mubr.f32.mxu0 0.0
        %3506 = vmatmul.mubr.f32.gmra.mrb[0].mxu0 %v2334
        %v3507 = vpop.f32.mrb[0].mxu0
        %v3508 = vadd.f32 %v3363, %v3507
        %v3509 = vpop.f32.mrb[0].mxu0
        %3510 = vmatprep.mubr.f32.mxu0 0.0
        %3511 = vmatmul.mubr.f32.gmra.mrb[0].mxu0 %v2339
        %v3512 = vpop.f32.mrb[0].mxu0
        %v3513 = vadd.f32 %v3368, %v3512
        %v3514 = vpop.f32.mrb[0].mxu0
        %3515 = vmatprep.mubr.f32.mxu0 0.0
        %3516 = vmatmul.mubr.f32.gmra.mrb[0].mxu0 %v2344
        %v3517 = vpop.f32.mrb[0].mxu0
        %v3518 = vadd.f32 %v3373, %v3517
        %v3519 = vpop.f32.mrb[0].mxu0
        %3520 = vmatprep.mubr.f32.mxu0 0.0
        %3521 = vmatmul.mubr.f32.gmra.mrb[0].mxu0 %v2349
        %v3522 = vpop.f32.mrb[0].mxu0
        %v3523 = vadd.f32 %v3378, %v3522
        %v3524 = vpop.f32.mrb[0].mxu0
        %3525 = vmatprep.mubr.f32.mxu0 0.0
        %3526 = vmatmul.mubr.f32.gmra.mrb[0].mxu0 %v2354
        %v3527 = vpop.f32.mrb[0].mxu0
        %v3528 = vadd.f32 %v3383, %v3527
        %v3529 = vpop.f32.mrb[0].mxu0
        %3530 = vmatprep.mubr.f32.mxu0 0.0
        %3531 = vmatmul.mubr.f32.gmra.mrb[0].mxu0 %v2359
        %v3532 = vpop.f32.mrb[0].mxu0
        %v3533 = vadd.f32 %v3388, %v3532
        %v3534 = vpop.f32.mrb[0].mxu0
        %3535 = vmatprep.mubr.f32.mxu0 0.0
        %3536 = vmatmul.mubr.f32.gmra.mrb[0].mxu0 %v2364
        %v3537 = vpop.f32.mrb[0].mxu0
        %v3538 = vadd.f32 %v3393, %v3537
        %v3539 = vpop.f32.mrb[0].mxu0
        %3540 = vmatprep.mubr.f32.mxu0 0.0
        %3541 = vmatmul.mubr.f32.gmra.mrb[0].mxu0 %v2369
        %v3542 = vpop.f32.mrb[0].mxu0
        %v3543 = vadd.f32 %v3398, %v3542
        %v3544 = vpop.f32.mrb[0].mxu0
        %3545 = vdwg.mxu0
        %3546 = vadd.xlane.f32.xlu0 %v3468
        %v3547 = vpop.xlane.xlu0 %3546
        %3548 = vadd.xlane.f32.xlu0 %v3473
        %v3549 = vpop.xlane.xlu0 %3548
        %3550 = vadd.xlane.f32.xlu0 %v3478
        %v3551 = vpop.xlane.xlu0 %3550
        %3552 = vadd.xlane.f32.xlu0 %v3483
        %v3553 = vpop.xlane.xlu0 %3552
        %3554 = vadd.xlane.f32.xlu0 %v3488
        %v3555 = vpop.xlane.xlu0 %3554
        %3556 = vadd.xlane.f32.xlu0 %v3493
        %v3557 = vpop.xlane.xlu0 %3556
        %3558 = vadd.xlane.f32.xlu0 %v3498
        %v3559 = vpop.xlane.xlu0 %3558
        %3560 = vadd.xlane.f32.xlu0 %v3503
        %v3561 = vpop.xlane.xlu0 %3560
        %3562 = vadd.xlane.f32.xlu0 %v3508
        %v3563 = vpop.xlane.xlu0 %3562
        %3564 = vadd.xlane.f32.xlu0 %v3513
        %v3565 = vpop.xlane.xlu0 %3564
        %3566 = vadd.xlane.f32.xlu0 %v3518
        %v3567 = vpop.xlane.xlu0 %3566
        %3568 = vadd.xlane.f32.xlu0 %v3523
        %v3569 = vpop.xlane.xlu0 %3568
        %3570 = vadd.xlane.f32.xlu0 %v3528
        %v3571 = vpop.xlane.xlu0 %3570
        %3572 = vadd.xlane.f32.xlu0 %v3533
        %v3573 = vpop.xlane.xlu0 %3572
        %3574 = vadd.xlane.f32.xlu0 %v3538
        %v3575 = vpop.xlane.xlu0 %3574
        %3576 = vadd.xlane.f32.xlu0 %v3543
        %v3577 = vpop.xlane.xlu0 %3576
        %v3578 = vmul.f32 %v3547, %v603
        %v3579 = vmul.f32 %v3549, %v603
        %v3580 = vmul.f32 %v3551, %v603
        %v3581 = vmul.f32 %v3553, %v603
        %v3582 = vmul.f32 %v3555, %v603
        %v3583 = vmul.f32 %v3557, %v603
        %v3584 = vmul.f32 %v3559, %v603
        %v3585 = vmul.f32 %v3561, %v603
        %v3586 = vmul.f32 %v3563, %v603
        %v3587 = vmul.f32 %v3565, %v603
        %v3588 = vmul.f32 %v3567, %v603
        %v3589 = vmul.f32 %v3569, %v603
        %v3590 = vmul.f32 %v3571, %v603
        %v3591 = vmul.f32 %v3573, %v603
        %v3592 = vmul.f32 %v3575, %v603
        %v3593 = vmul.f32 %v3577, %v603
        %v3594 = vsub.f32 %v3468, %v3578
        %v3595 = vsub.f32 %v3473, %v3579
        %v3596 = vsub.f32 %v3478, %v3580
        %v3597 = vsub.f32 %v3483, %v3581
        %v3598 = vsub.f32 %v3488, %v3582
        %v3599 = vsub.f32 %v3493, %v3583
        %v3600 = vsub.f32 %v3498, %v3584
        %v3601 = vsub.f32 %v3503, %v3585
        %v3602 = vsub.f32 %v3508, %v3586
        %v3603 = vsub.f32 %v3513, %v3587
        %v3604 = vsub.f32 %v3518, %v3588
        %v3605 = vsub.f32 %v3523, %v3589
        %v3606 = vsub.f32 %v3528, %v3590
        %v3607 = vsub.f32 %v3533, %v3591
        %v3608 = vsub.f32 %v3538, %v3592
        %v3609 = vsub.f32 %v3543, %v3593
        %v3610 = vmul.f32 %v3594, %v3594
        %v3611 = vmul.f32 %v3595, %v3595
        %v3612 = vmul.f32 %v3596, %v3596
        %v3613 = vmul.f32 %v3597, %v3597
        %v3614 = vmul.f32 %v3598, %v3598
        %v3615 = vmul.f32 %v3599, %v3599
        %v3616 = vmul.f32 %v3600, %v3600
        %v3617 = vmul.f32 %v3601, %v3601
        %v3618 = vmul.f32 %v3602, %v3602
        %v3619 = vmul.f32 %v3603, %v3603
        %v3620 = vmul.f32 %v3604, %v3604
        %v3621 = vmul.f32 %v3605, %v3605
        %v3622 = vmul.f32 %v3606, %v3606
        %v3623 = vmul.f32 %v3607, %v3607
        %v3624 = vmul.f32 %v3608, %v3608
        %v3625 = vmul.f32 %v3609, %v3609
        %3626 = vadd.xlane.f32.xlu0 %v3610
        %v3627 = vpop.xlane.xlu0 %3626
        %3628 = vadd.xlane.f32.xlu0 %v3611
        %v3629 = vpop.xlane.xlu0 %3628
        %3630 = vadd.xlane.f32.xlu0 %v3612
        %v3631 = vpop.xlane.xlu0 %3630
        %3632 = vadd.xlane.f32.xlu0 %v3613
        %v3633 = vpop.xlane.xlu0 %3632
        %3634 = vadd.xlane.f32.xlu0 %v3614
        %v3635 = vpop.xlane.xlu0 %3634
        %3636 = vadd.xlane.f32.xlu0 %v3615
        %v3637 = vpop.xlane.xlu0 %3636
        %3638 = vadd.xlane.f32.xlu0 %v3616
        %v3639 = vpop.xlane.xlu0 %3638
        %3640 = vadd.xlane.f32.xlu0 %v3617
        %v3641 = vpop.xlane.xlu0 %3640
        %3642 = vadd.xlane.f32.xlu0 %v3618
        %v3643 = vpop.xlane.xlu0 %3642
        %3644 = vadd.xlane.f32.xlu0 %v3619
        %v3645 = vpop.xlane.xlu0 %3644
        %3646 = vadd.xlane.f32.xlu0 %v3620
        %v3647 = vpop.xlane.xlu0 %3646
        %3648 = vadd.xlane.f32.xlu0 %v3621
        %v3649 = vpop.xlane.xlu0 %3648
        %3650 = vadd.xlane.f32.xlu0 %v3622
        %v3651 = vpop.xlane.xlu0 %3650
        %3652 = vadd.xlane.f32.xlu0 %v3623
        %v3653 = vpop.xlane.xlu0 %3652
        %3654 = vadd.xlane.f32.xlu0 %v3624
        %v3655 = vpop.xlane.xlu0 %3654
        %3656 = vadd.xlane.f32.xlu0 %v3625
        %v3657 = vpop.xlane.xlu0 %3656
        %v3658 = vmul.f32 %v3627, %v603
        %v3659 = vmul.f32 %v3629, %v603
        %v3660 = vmul.f32 %v3631, %v603
        %v3661 = vmul.f32 %v3633, %v603
        %v3662 = vmul.f32 %v3635, %v603
        %v3663 = vmul.f32 %v3637, %v603
        %v3664 = vmul.f32 %v3639, %v603
        %v3665 = vmul.f32 %v3641, %v603
        %v3666 = vmul.f32 %v3643, %v603
        %v3667 = vmul.f32 %v3645, %v603
        %v3668 = vmul.f32 %v3647, %v603
        %v3669 = vmul.f32 %v3649, %v603
        %v3670 = vmul.f32 %v3651, %v603
        %v3671 = vmul.f32 %v3653, %v603
        %v3672 = vmul.f32 %v3655, %v603
        %v3673 = vmul.f32 %v3657, %v603
        %v3674 = vadd.f32 %v3658, 1e-05
        %v3675 = vadd.f32 %v3659, 1e-05
        %v3676 = vadd.f32 %v3660, 1e-05
        %v3677 = vadd.f32 %v3661, 1e-05
        %v3678 = vadd.f32 %v3662, 1e-05
        %v3679 = vadd.f32 %v3663, 1e-05
        %v3680 = vadd.f32 %v3664, 1e-05
        %v3681 = vadd.f32 %v3665, 1e-05
        %v3682 = vadd.f32 %v3666, 1e-05
        %v3683 = vadd.f32 %v3667, 1e-05
        %v3684 = vadd.f32 %v3668, 1e-05
        %v3685 = vadd.f32 %v3669, 1e-05
        %v3686 = vadd.f32 %v3670, 1e-05
        %v3687 = vadd.f32 %v3671, 1e-05
        %v3688 = vadd.f32 %v3672, 1e-05
        %v3689 = vadd.f32 %v3673, 1e-05
        %v3690 = vrsqrt.pop %v3674
        %v3691 = vrsqrt.pop %v3675
        %v3692 = vrsqrt.pop %v3676
        %v3693 = vrsqrt.pop %v3677
        %v3694 = vrsqrt.pop %v3678
        %v3695 = vrsqrt.pop %v3679
        %v3696 = vrsqrt.pop %v3680
        %v3697 = vrsqrt.pop %v3681
        %v3698 = vrsqrt.pop %v3682
        %v3699 = vrsqrt.pop %v3683
        %v3700 = vrsqrt.pop %v3684
        %v3701 = vrsqrt.pop %v3685
        %v3702 = vrsqrt.pop %v3686
        %v3703 = vrsqrt.pop %v3687
        %v3704 = vrsqrt.pop %v3688
        %v3705 = vrsqrt.pop %v3689
        %v3706 = vmul.f32 %v3594, %v3690
        %v3707 = vmul.f32 %v3595, %v3691
        %v3708 = vmul.f32 %v3596, %v3692
        %v3709 = vmul.f32 %v3597, %v3693
        %v3710 = vmul.f32 %v3598, %v3694
        %v3711 = vmul.f32 %v3599, %v3695
        %v3712 = vmul.f32 %v3600, %v3696
        %v3713 = vmul.f32 %v3601, %v3697
        %v3714 = vmul.f32 %v3602, %v3698
        %v3715 = vmul.f32 %v3603, %v3699
        %v3716 = vmul.f32 %v3604, %v3700
        %v3717 = vmul.f32 %v3605, %v3701
        %v3718 = vmul.f32 %v3606, %v3702
        %v3719 = vmul.f32 %v3607, %v3703
        %v3720 = vmul.f32 %v3608, %v3704
        %v3721 = vmul.f32 %v3609, %v3705
        %v3722 = vlaneseq
        %v3723 = vshrl.u32 %v3722, 7
        %v3724 = vsub.s32 2, %v3723
        %v3725 = vrot.slane %v568, %v3724
        %v3726 = vmul.f32 %v3706, %v3725
        %v3727 = vmul.f32 %v3707, %v3725
        %v3728 = vmul.f32 %v3708, %v3725
        %v3729 = vmul.f32 %v3709, %v3725
        %v3730 = vmul.f32 %v3710, %v3725
        %v3731 = vmul.f32 %v3711, %v3725
        %v3732 = vmul.f32 %v3712, %v3725
        %v3733 = vmul.f32 %v3713, %v3725
        %v3734 = vmul.f32 %v3714, %v3725
        %v3735 = vmul.f32 %v3715, %v3725
        %v3736 = vmul.f32 %v3716, %v3725
        %v3737 = vmul.f32 %v3717, %v3725
        %v3738 = vmul.f32 %v3718, %v3725
        %v3739 = vmul.f32 %v3719, %v3725
        %v3740 = vmul.f32 %v3720, %v3725
        %v3741 = vmul.f32 %v3721, %v3725
        %v3742 = vlaneseq
        %v3743 = vshrl.u32 %v3742, 7
        %v3744 = vsub.s32 3, %v3743
        %v3745 = vrot.slane %v568, %v3744
        %v3746 = vadd.f32 %v3726, %v3745
        %v3747 = vadd.f32 %v3727, %v3745
        %v3748 = vadd.f32 %v3728, %v3745
        %v3749 = vadd.f32 %v3729, %v3745
        %v3750 = vadd.f32 %v3730, %v3745
        %v3751 = vadd.f32 %v3731, %v3745
        %v3752 = vadd.f32 %v3732, %v3745
        %v3753 = vadd.f32 %v3733, %v3745
        %v3754 = vadd.f32 %v3734, %v3745
        %v3755 = vadd.f32 %v3735, %v3745
        %v3756 = vadd.f32 %v3736, %v3745
        %v3757 = vadd.f32 %v3737, %v3745
        %v3758 = vadd.f32 %v3738, %v3745
        %v3759 = vadd.f32 %v3739, %v3745
        %v3760 = vadd.f32 %v3740, %v3745
        %v3761 = vadd.f32 %v3741, %v3745
        %v3762 = vadd.f32 %v552, %v3746
        %v3763 = vadd.f32 %v553, %v3747
        %v3764 = vadd.f32 %v554, %v3748
        %v3765 = vadd.f32 %v555, %v3749
        %v3766 = vadd.f32 %v556, %v3750
        %v3767 = vadd.f32 %v557, %v3751
        %v3768 = vadd.f32 %v558, %v3752
        %v3769 = vadd.f32 %v559, %v3753
        %v3770 = vadd.f32 %v560, %v3754
        %v3771 = vadd.f32 %v561, %v3755
        %v3772 = vadd.f32 %v562, %v3756
        %v3773 = vadd.f32 %v563, %v3757
        %v3774 = vadd.f32 %v564, %v3758
        %v3775 = vadd.f32 %v565, %v3759
        %v3776 = vadd.f32 %v566, %v3760
        %v3777 = vadd.f32 %v567, %v3761
        %3778 = vadd.xlane.f32.xlu0 %v3762
        %v3779 = vpop.xlane.xlu0 %3778
        %3780 = vadd.xlane.f32.xlu0 %v3763
        %v3781 = vpop.xlane.xlu0 %3780
        %3782 = vadd.xlane.f32.xlu0 %v3764
        %v3783 = vpop.xlane.xlu0 %3782
        %3784 = vadd.xlane.f32.xlu0 %v3765
        %v3785 = vpop.xlane.xlu0 %3784
        %3786 = vadd.xlane.f32.xlu0 %v3766
        %v3787 = vpop.xlane.xlu0 %3786
        %3788 = vadd.xlane.f32.xlu0 %v3767
        %v3789 = vpop.xlane.xlu0 %3788
        %3790 = vadd.xlane.f32.xlu0 %v3768
        %v3791 = vpop.xlane.xlu0 %3790
        %3792 = vadd.xlane.f32.xlu0 %v3769
        %v3793 = vpop.xlane.xlu0 %3792
        %3794 = vadd.xlane.f32.xlu0 %v3770
        %v3795 = vpop.xlane.xlu0 %3794
        %3796 = vadd.xlane.f32.xlu0 %v3771
        %v3797 = vpop.xlane.xlu0 %3796
        %3798 = vadd.xlane.f32.xlu0 %v3772
        %v3799 = vpop.xlane.xlu0 %3798
        %3800 = vadd.xlane.f32.xlu0 %v3773
        %v3801 = vpop.xlane.xlu0 %3800
        %3802 = vadd.xlane.f32.xlu0 %v3774
        %v3803 = vpop.xlane.xlu0 %3802
        %3804 = vadd.xlane.f32.xlu0 %v3775
        %v3805 = vpop.xlane.xlu0 %3804
        %3806 = vadd.xlane.f32.xlu0 %v3776
        %v3807 = vpop.xlane.xlu0 %3806
        %3808 = vadd.xlane.f32.xlu0 %v3777
        %v3809 = vpop.xlane.xlu0 %3808
        %v3810 = vmul.f32 %v3779, %v603
        %v3811 = vmul.f32 %v3781, %v603
        %v3812 = vmul.f32 %v3783, %v603
        %v3813 = vmul.f32 %v3785, %v603
        %v3814 = vmul.f32 %v3787, %v603
        %v3815 = vmul.f32 %v3789, %v603
        %v3816 = vmul.f32 %v3791, %v603
        %v3817 = vmul.f32 %v3793, %v603
        %v3818 = vmul.f32 %v3795, %v603
        %v3819 = vmul.f32 %v3797, %v603
        %v3820 = vmul.f32 %v3799, %v603
        %v3821 = vmul.f32 %v3801, %v603
        %v3822 = vmul.f32 %v3803, %v603
        %v3823 = vmul.f32 %v3805, %v603
        %v3824 = vmul.f32 %v3807, %v603
        %v3825 = vmul.f32 %v3809, %v603
        %v3826 = vsub.f32 %v3762, %v3810
        %v3827 = vsub.f32 %v3763, %v3811
        %v3828 = vsub.f32 %v3764, %v3812
        %v3829 = vsub.f32 %v3765, %v3813
        %v3830 = vsub.f32 %v3766, %v3814
        %v3831 = vsub.f32 %v3767, %v3815
        %v3832 = vsub.f32 %v3768, %v3816
        %v3833 = vsub.f32 %v3769, %v3817
        %v3834 = vsub.f32 %v3770, %v3818
        %v3835 = vsub.f32 %v3771, %v3819
        %v3836 = vsub.f32 %v3772, %v3820
        %v3837 = vsub.f32 %v3773, %v3821
        %v3838 = vsub.f32 %v3774, %v3822
        %v3839 = vsub.f32 %v3775, %v3823
        %v3840 = vsub.f32 %v3776, %v3824
        %v3841 = vsub.f32 %v3777, %v3825
        %v3842 = vmul.f32 %v3826, %v3826
        %v3843 = vmul.f32 %v3827, %v3827
        %v3844 = vmul.f32 %v3828, %v3828
        %v3845 = vmul.f32 %v3829, %v3829
        %v3846 = vmul.f32 %v3830, %v3830
        %v3847 = vmul.f32 %v3831, %v3831
        %v3848 = vmul.f32 %v3832, %v3832
        %v3849 = vmul.f32 %v3833, %v3833
        %v3850 = vmul.f32 %v3834, %v3834
        %v3851 = vmul.f32 %v3835, %v3835
        %v3852 = vmul.f32 %v3836, %v3836
        %v3853 = vmul.f32 %v3837, %v3837
        %v3854 = vmul.f32 %v3838, %v3838
        %v3855 = vmul.f32 %v3839, %v3839
        %v3856 = vmul.f32 %v3840, %v3840
        %v3857 = vmul.f32 %v3841, %v3841
        %3858 = vadd.xlane.f32.xlu0 %v3842
        %v3859 = vpop.xlane.xlu0 %3858
        %3860 = vadd.xlane.f32.xlu0 %v3843
        %v3861 = vpop.xlane.xlu0 %3860
        %3862 = vadd.xlane.f32.xlu0 %v3844
        %v3863 = vpop.xlane.xlu0 %3862
        %3864 = vadd.xlane.f32.xlu0 %v3845
        %v3865 = vpop.xlane.xlu0 %3864
        %3866 = vadd.xlane.f32.xlu0 %v3846
        %v3867 = vpop.xlane.xlu0 %3866
        %3868 = vadd.xlane.f32.xlu0 %v3847
        %v3869 = vpop.xlane.xlu0 %3868
        %3870 = vadd.xlane.f32.xlu0 %v3848
        %v3871 = vpop.xlane.xlu0 %3870
        %3872 = vadd.xlane.f32.xlu0 %v3849
        %v3873 = vpop.xlane.xlu0 %3872
        %3874 = vadd.xlane.f32.xlu0 %v3850
        %v3875 = vpop.xlane.xlu0 %3874
        %3876 = vadd.xlane.f32.xlu0 %v3851
        %v3877 = vpop.xlane.xlu0 %3876
        %3878 = vadd.xlane.f32.xlu0 %v3852
        %v3879 = vpop.xlane.xlu0 %3878
        %3880 = vadd.xlane.f32.xlu0 %v3853
        %v3881 = vpop.xlane.xlu0 %3880
        %3882 = vadd.xlane.f32.xlu0 %v3854
        %v3883 = vpop.xlane.xlu0 %3882
        %3884 = vadd.xlane.f32.xlu0 %v3855
        %v3885 = vpop.xlane.xlu0 %3884
        %3886 = vadd.xlane.f32.xlu0 %v3856
        %v3887 = vpop.xlane.xlu0 %3886
        %3888 = vadd.xlane.f32.xlu0 %v3857
        %v3889 = vpop.xlane.xlu0 %3888
        %v3890 = vmul.f32 %v3859, %v603
        %v3891 = vmul.f32 %v3861, %v603
        %v3892 = vmul.f32 %v3863, %v603
        %v3893 = vmul.f32 %v3865, %v603
        %v3894 = vmul.f32 %v3867, %v603
        %v3895 = vmul.f32 %v3869, %v603
        %v3896 = vmul.f32 %v3871, %v603
        %v3897 = vmul.f32 %v3873, %v603
        %v3898 = vmul.f32 %v3875, %v603
        %v3899 = vmul.f32 %v3877, %v603
        %v3900 = vmul.f32 %v3879, %v603
        %v3901 = vmul.f32 %v3881, %v603
        %v3902 = vmul.f32 %v3883, %v603
        %v3903 = vmul.f32 %v3885, %v603
        %v3904 = vmul.f32 %v3887, %v603
        %v3905 = vmul.f32 %v3889, %v603
        %v3906 = vadd.f32 %v3890, 1e-05
        %v3907 = vadd.f32 %v3891, 1e-05
        %v3908 = vadd.f32 %v3892, 1e-05
        %v3909 = vadd.f32 %v3893, 1e-05
        %v3910 = vadd.f32 %v3894, 1e-05
        %v3911 = vadd.f32 %v3895, 1e-05
        %v3912 = vadd.f32 %v3896, 1e-05
        %v3913 = vadd.f32 %v3897, 1e-05
        %v3914 = vadd.f32 %v3898, 1e-05
        %v3915 = vadd.f32 %v3899, 1e-05
        %v3916 = vadd.f32 %v3900, 1e-05
        %v3917 = vadd.f32 %v3901, 1e-05
        %v3918 = vadd.f32 %v3902, 1e-05
        %v3919 = vadd.f32 %v3903, 1e-05
        %v3920 = vadd.f32 %v3904, 1e-05
        %v3921 = vadd.f32 %v3905, 1e-05
        %v3922 = vrsqrt.pop %v3906
        %v3923 = vrsqrt.pop %v3907
        %v3924 = vrsqrt.pop %v3908
        %v3925 = vrsqrt.pop %v3909
        %v3926 = vrsqrt.pop %v3910
        %v3927 = vrsqrt.pop %v3911
        %v3928 = vrsqrt.pop %v3912
        %v3929 = vrsqrt.pop %v3913
        %v3930 = vrsqrt.pop %v3914
        %v3931 = vrsqrt.pop %v3915
        %v3932 = vrsqrt.pop %v3916
        %v3933 = vrsqrt.pop %v3917
        %v3934 = vrsqrt.pop %v3918
        %v3935 = vrsqrt.pop %v3919
        %v3936 = vrsqrt.pop %v3920
        %v3937 = vrsqrt.pop %v3921
        %v3938 = vmul.f32 %v3826, %v3922
        %v3939 = vmul.f32 %v3827, %v3923
        %v3940 = vmul.f32 %v3828, %v3924
        %v3941 = vmul.f32 %v3829, %v3925
        %v3942 = vmul.f32 %v3830, %v3926
        %v3943 = vmul.f32 %v3831, %v3927
        %v3944 = vmul.f32 %v3832, %v3928
        %v3945 = vmul.f32 %v3833, %v3929
        %v3946 = vmul.f32 %v3834, %v3930
        %v3947 = vmul.f32 %v3835, %v3931
        %v3948 = vmul.f32 %v3836, %v3932
        %v3949 = vmul.f32 %v3837, %v3933
        %v3950 = vmul.f32 %v3838, %v3934
        %v3951 = vmul.f32 %v3839, %v3935
        %v3952 = vmul.f32 %v3840, %v3936
        %v3953 = vmul.f32 %v3841, %v3937
        %v3954 = vlaneseq
        %v3955 = vshrl.u32 %v3954, 7
        %v3956 = vsub.s32 4, %v3955
        %v3957 = vrot.slane %v568, %v3956
        %v3958 = vmul.f32 %v3938, %v3957
        %v3959 = vmul.f32 %v3939, %v3957
        %v3960 = vmul.f32 %v3940, %v3957
        %v3961 = vmul.f32 %v3941, %v3957
        %v3962 = vmul.f32 %v3942, %v3957
        %v3963 = vmul.f32 %v3943, %v3957
        %v3964 = vmul.f32 %v3944, %v3957
        %v3965 = vmul.f32 %v3945, %v3957
        %v3966 = vmul.f32 %v3946, %v3957
        %v3967 = vmul.f32 %v3947, %v3957
        %v3968 = vmul.f32 %v3948, %v3957
        %v3969 = vmul.f32 %v3949, %v3957
        %v3970 = vmul.f32 %v3950, %v3957
        %v3971 = vmul.f32 %v3951, %v3957
        %v3972 = vmul.f32 %v3952, %v3957
        %v3973 = vmul.f32 %v3953, %v3957
        %v3974 = vlaneseq
        %v3975 = vshrl.u32 %v3974, 7
        %v3976 = vsub.s32 5, %v3975
        %v3977 = vrot.slane %v568, %v3976
        %v3978 = vadd.f32 %v3958, %v3977
        %v3979 = vadd.f32 %v3959, %v3977
        %v3980 = vadd.f32 %v3960, %v3977
        %v3981 = vadd.f32 %v3961, %v3977
        %v3982 = vadd.f32 %v3962, %v3977
        %v3983 = vadd.f32 %v3963, %v3977
        %v3984 = vadd.f32 %v3964, %v3977
        %v3985 = vadd.f32 %v3965, %v3977
        %v3986 = vadd.f32 %v3966, %v3977
        %v3987 = vadd.f32 %v3967, %v3977
        %v3988 = vadd.f32 %v3968, %v3977
        %v3989 = vadd.f32 %v3969, %v3977
        %v3990 = vadd.f32 %v3970, %v3977
        %v3991 = vadd.f32 %v3971, %v3977
        %v3992 = vadd.f32 %v3972, %v3977
        %v3993 = vadd.f32 %v3973, %v3977
        %v3994 = vld [vmem:[%s456] sm:$0xff]
        %v3995 = vld [vmem:[%s456 + $0x8] sm:$0xff]
        %v3996 = vld [vmem:[%s456 + $0x10] sm:$0xff]
        %v3997 = vld [vmem:[%s456 + $0x18] sm:$0xff]
        %v3998 = vld [vmem:[%s456 + $0x20] sm:$0xff]
        %v3999 = vld [vmem:[%s456 + $0x28] sm:$0xff]
        %v4000 = vld [vmem:[%s456 + $0x30] sm:$0xff]
        %v4001 = vld [vmem:[%s456 + $0x38] sm:$0xff]
        %v4002 = vld [vmem:[%s456 + $0x40] sm:$0xff]
        %v4003 = vld [vmem:[%s456 + $0x48] sm:$0xff]
        %v4004 = vld [vmem:[%s456 + $0x50] sm:$0xff]
        %v4005 = vld [vmem:[%s456 + $0x58] sm:$0xff]
        %v4006 = vld [vmem:[%s456 + $0x60] sm:$0xff]
        %v4007 = vld [vmem:[%s456 + $0x68] sm:$0xff]
        %v4008 = vld [vmem:[%s456 + $0x70] sm:$0xff]
        %v4009 = vld [vmem:[%s456 + $0x78] sm:$0xff]
        %v4010 = vunpack.c.l.bf16 %v3994
        %v4011 = vunpack.c.h.bf16 %v3994
        %v4012 = vunpack.c.l.bf16 %v3995
        %v4013 = vunpack.c.h.bf16 %v3995
        %v4014 = vunpack.c.l.bf16 %v3996
        %v4015 = vunpack.c.h.bf16 %v3996
        %v4016 = vunpack.c.l.bf16 %v3997
        %v4017 = vunpack.c.h.bf16 %v3997
        %v4018 = vunpack.c.l.bf16 %v3998
        %v4019 = vunpack.c.h.bf16 %v3998
        %v4020 = vunpack.c.l.bf16 %v3999
        %v4021 = vunpack.c.h.bf16 %v3999
        %v4022 = vunpack.c.l.bf16 %v4000
        %v4023 = vunpack.c.h.bf16 %v4000
        %v4024 = vunpack.c.l.bf16 %v4001
        %v4025 = vunpack.c.h.bf16 %v4001
        %v4026 = vunpack.c.l.bf16 %v4002
        %v4027 = vunpack.c.h.bf16 %v4002
        %v4028 = vunpack.c.l.bf16 %v4003
        %v4029 = vunpack.c.h.bf16 %v4003
        %v4030 = vunpack.c.l.bf16 %v4004
        %v4031 = vunpack.c.h.bf16 %v4004
        %v4032 = vunpack.c.l.bf16 %v4005
        %v4033 = vunpack.c.h.bf16 %v4005
        %v4034 = vunpack.c.l.bf16 %v4006
        %v4035 = vunpack.c.h.bf16 %v4006
        %v4036 = vunpack.c.l.bf16 %v4007
        %v4037 = vunpack.c.h.bf16 %v4007
        %v4038 = vunpack.c.l.bf16 %v4008
        %v4039 = vunpack.c.h.bf16 %v4008
        %v4040 = vunpack.c.l.bf16 %v4009
        %v4041 = vunpack.c.h.bf16 %v4009
        %4042 = vmatprep.subr.mxu0 %v4011
        %4043 = vmatpush1.msra.mxu0 %v4010
        %4044 = vmatprep.subr.mxu0 %v4013
        %4045 = vmatpush1.msra.mxu0 %v4012
        %4046 = vmatprep.subr.mxu0 %v4015
        %4047 = vmatpush1.msra.mxu0 %v4014
        %4048 = vmatprep.subr.mxu0 %v4017
        %4049 = vmatpush1.msra.mxu0 %v4016
        %4050 = vmatprep.subr.mxu0 %v4019
        %4051 = vmatpush1.msra.mxu0 %v4018
        %4052 = vmatprep.subr.mxu0 %v4021
        %4053 = vmatpush1.msra.mxu0 %v4020
        %4054 = vmatprep.subr.mxu0 %v4023
        %4055 = vmatpush1.msra.mxu0 %v4022
        %4056 = vmatprep.subr.mxu0 %v4025
        %4057 = vmatpush1.msra.mxu0 %v4024
        %4058 = vmatprep.subr.mxu0 %v4027
        %4059 = vmatpush1.msra.mxu0 %v4026
        %4060 = vmatprep.subr.mxu0 %v4029
        %4061 = vmatpush1.msra.mxu0 %v4028
        %4062 = vmatprep.subr.mxu0 %v4031
        %4063 = vmatpush1.msra.mxu0 %v4030
        %4064 = vmatprep.subr.mxu0 %v4033
        %4065 = vmatpush1.msra.mxu0 %v4032
        %4066 = vmatprep.subr.mxu0 %v4035
        %4067 = vmatpush1.msra.mxu0 %v4034
        %4068 = vmatprep.subr.mxu0 %v4037
        %4069 = vmatpush1.msra.mxu0 %v4036
        %4070 = vmatprep.subr.mxu0 %v4039
        %4071 = vmatpush1.msra.mxu0 %v4038
        %4072 = vmatprep.subr.mxu0 %v4041
        %4073 = vmatpush1.msra.mxu0 %v4040
        %4074 = vmatprep.subr.mxu0 0.0
        %4075 = vmatpush1.msra.mxu0 0.0
        %4076 = vmatprep.subr.mxu0 0.0
        %4077 = vmatpush1.msra.mxu0 0.0
        %4078 = vmatprep.subr.mxu0 0.0
        %4079 = vmatpush1.msra.mxu0 0.0
        %4080 = vmatprep.subr.mxu0 0.0
        %4081 = vmatpush1.msra.mxu0 0.0
        %4082 = vmatprep.subr.mxu0 0.0
        %4083 = vmatpush1.msra.mxu0 0.0
        %4084 = vmatprep.subr.mxu0 0.0
        %4085 = vmatpush1.msra.mxu0 0.0
        %4086 = vmatprep.subr.mxu0 0.0
        %4087 = vmatpush1.msra.mxu0 0.0
        %4088 = vmatprep.subr.mxu0 0.0
        %4089 = vmatpush1.msra.mxu0 0.0
        %4090 = vmatprep.subr.mxu0 0.0
        %4091 = vmatpush1.msra.mxu0 0.0
        %4092 = vmatprep.subr.mxu0 0.0
        %4093 = vmatpush1.msra.mxu0 0.0
        %4094 = vmatprep.subr.mxu0 0.0
        %4095 = vmatpush1.msra.mxu0 0.0
        %4096 = vmatprep.subr.mxu0 0.0
        %4097 = vmatpush1.msra.mxu0 0.0
        %4098 = vmatprep.subr.mxu0 0.0
        %4099 = vmatpush1.msra.mxu0 0.0
        %4100 = vmatprep.subr.mxu0 0.0
        %4101 = vmatpush1.msra.mxu0 0.0
        %4102 = vmatprep.subr.mxu0 0.0
        %4103 = vmatpush1.msra.mxu0 0.0
        %4104 = vmatprep.subr.mxu0 0.0
        %4105 = vmatpush1.msra.mxu0 0.0
        %4106 = vmatprep.mubr.f32.mxu0 0.0
        %4107 = vmatmul.mubr.f32.gmra.mrb[0].mxu0 %v3978
        %v4108 = vpop.f32.mrb[0].mxu0
        %v4109 = vadd.f32 0.0, %v4108
        %v4110 = vpop.f32.mrb[0].mxu0
        %v4111 = vadd.f32 0.0, %v4110
        %4112 = vmatprep.mubr.f32.mxu0 0.0
        %4113 = vmatmul.mubr.f32.gmra.mrb[0].mxu0 %v3979
        %v4114 = vpop.f32.mrb[0].mxu0
        %v4115 = vadd.f32 0.0, %v4114
        %v4116 = vpop.f32.mrb[0].mxu0
        %v4117 = vadd.f32 0.0, %v4116
        %4118 = vmatprep.mubr.f32.mxu0 0.0
        %4119 = vmatmul.mubr.f32.gmra.mrb[0].mxu0 %v3980
        %v4120 = vpop.f32.mrb[0].mxu0
        %v4121 = vadd.f32 0.0, %v4120
        %v4122 = vpop.f32.mrb[0].mxu0
        %v4123 = vadd.f32 0.0, %v4122
        %4124 = vmatprep.mubr.f32.mxu0 0.0
        %4125 = vmatmul.mubr.f32.gmra.mrb[0].mxu0 %v3981
        %v4126 = vpop.f32.mrb[0].mxu0
        %v4127 = vadd.f32 0.0, %v4126
        %v4128 = vpop.f32.mrb[0].mxu0
        %v4129 = vadd.f32 0.0, %v4128
        %4130 = vmatprep.mubr.f32.mxu0 0.0
        %4131 = vmatmul.mubr.f32.gmra.mrb[0].mxu0 %v3982
        %v4132 = vpop.f32.mrb[0].mxu0
        %v4133 = vadd.f32 0.0, %v4132
        %v4134 = vpop.f32.mrb[0].mxu0
        %v4135 = vadd.f32 0.0, %v4134
        %4136 = vmatprep.mubr.f32.mxu0 0.0
        %4137 = vmatmul.mubr.f32.gmra.mrb[0].mxu0 %v3983
        %v4138 = vpop.f32.mrb[0].mxu0
        %v4139 = vadd.f32 0.0, %v4138
        %v4140 = vpop.f32.mrb[0].mxu0
        %v4141 = vadd.f32 0.0, %v4140
        %4142 = vmatprep.mubr.f32.mxu0 0.0
        %4143 = vmatmul.mubr.f32.gmra.mrb[0].mxu0 %v3984
        %v4144 = vpop.f32.mrb[0].mxu0
        %v4145 = vadd.f32 0.0, %v4144
        %v4146 = vpop.f32.mrb[0].mxu0
        %v4147 = vadd.f32 0.0, %v4146
        %4148 = vmatprep.mubr.f32.mxu0 0.0
        %4149 = vmatmul.mubr.f32.gmra.mrb[0].mxu0 %v3985
        %v4150 = vpop.f32.mrb[0].mxu0
        %v4151 = vadd.f32 0.0, %v4150
        %v4152 = vpop.f32.mrb[0].mxu0
        %v4153 = vadd.f32 0.0, %v4152
        %4154 = vmatprep.mubr.f32.mxu0 0.0
        %4155 = vmatmul.mubr.f32.gmra.mrb[0].mxu0 %v3986
        %v4156 = vpop.f32.mrb[0].mxu0
        %v4157 = vadd.f32 0.0, %v4156
        %v4158 = vpop.f32.mrb[0].mxu0
        %v4159 = vadd.f32 0.0, %v4158
        %4160 = vmatprep.mubr.f32.mxu0 0.0
        %4161 = vmatmul.mubr.f32.gmra.mrb[0].mxu0 %v3987
        %v4162 = vpop.f32.mrb[0].mxu0
        %v4163 = vadd.f32 0.0, %v4162
        %v4164 = vpop.f32.mrb[0].mxu0
        %v4165 = vadd.f32 0.0, %v4164
        %4166 = vmatprep.mubr.f32.mxu0 0.0
        %4167 = vmatmul.mubr.f32.gmra.mrb[0].mxu0 %v3988
        %v4168 = vpop.f32.mrb[0].mxu0
        %v4169 = vadd.f32 0.0, %v4168
        %v4170 = vpop.f32.mrb[0].mxu0
        %v4171 = vadd.f32 0.0, %v4170
        %4172 = vmatprep.mubr.f32.mxu0 0.0
        %4173 = vmatmul.mubr.f32.gmra.mrb[0].mxu0 %v3989
        %v4174 = vpop.f32.mrb[0].mxu0
        %v4175 = vadd.f32 0.0, %v4174
        %v4176 = vpop.f32.mrb[0].mxu0
        %v4177 = vadd.f32 0.0, %v4176
        %4178 = vmatprep.mubr.f32.mxu0 0.0
        %4179 = vmatmul.mubr.f32.gmra.mrb[0].mxu0 %v3990
        %v4180 = vpop.f32.mrb[0].mxu0
        %v4181 = vadd.f32 0.0, %v4180
        %v4182 = vpop.f32.mrb[0].mxu0
        %v4183 = vadd.f32 0.0, %v4182
        %4184 = vmatprep.mubr.f32.mxu0 0.0
        %4185 = vmatmul.mubr.f32.gmra.mrb[0].mxu0 %v3991
        %v4186 = vpop.f32.mrb[0].mxu0
        %v4187 = vadd.f32 0.0, %v4186
        %v4188 = vpop.f32.mrb[0].mxu0
        %v4189 = vadd.f32 0.0, %v4188
        %4190 = vmatprep.mubr.f32.mxu0 0.0
        %4191 = vmatmul.mubr.f32.gmra.mrb[0].mxu0 %v3992
        %v4192 = vpop.f32.mrb[0].mxu0
        %v4193 = vadd.f32 0.0, %v4192
        %v4194 = vpop.f32.mrb[0].mxu0
        %v4195 = vadd.f32 0.0, %v4194
        %4196 = vmatprep.mubr.f32.mxu0 0.0
        %4197 = vmatmul.mubr.f32.gmra.mrb[0].mxu0 %v3993
        %v4198 = vpop.f32.mrb[0].mxu0
        %v4199 = vadd.f32 0.0, %v4198
        %v4200 = vpop.f32.mrb[0].mxu0
        %v4201 = vadd.f32 0.0, %v4200
        %4202 = vdwg.mxu0
        %v4203 = vmul.f32 %v4109, 0.5
        %v4204 = vmul.f32 %v4111, 0.5
        %v4205 = vmul.f32 %v4115, 0.5
        %v4206 = vmul.f32 %v4117, 0.5
        %v4207 = vmul.f32 %v4121, 0.5
        %v4208 = vmul.f32 %v4123, 0.5
        %v4209 = vmul.f32 %v4127, 0.5
        %v4210 = vmul.f32 %v4129, 0.5
        %v4211 = vmul.f32 %v4133, 0.5
        %v4212 = vmul.f32 %v4135, 0.5
        %v4213 = vmul.f32 %v4139, 0.5
        %v4214 = vmul.f32 %v4141, 0.5
        %v4215 = vmul.f32 %v4145, 0.5
        %v4216 = vmul.f32 %v4147, 0.5
        %v4217 = vmul.f32 %v4151, 0.5
        %v4218 = vmul.f32 %v4153, 0.5
        %v4219 = vmul.f32 %v4157, 0.5
        %v4220 = vmul.f32 %v4159, 0.5
        %v4221 = vmul.f32 %v4163, 0.5
        %v4222 = vmul.f32 %v4165, 0.5
        %v4223 = vmul.f32 %v4169, 0.5
        %v4224 = vmul.f32 %v4171, 0.5
        %v4225 = vmul.f32 %v4175, 0.5
        %v4226 = vmul.f32 %v4177, 0.5
        %v4227 = vmul.f32 %v4181, 0.5
        %v4228 = vmul.f32 %v4183, 0.5
        %v4229 = vmul.f32 %v4187, 0.5
        %v4230 = vmul.f32 %v4189, 0.5
        %v4231 = vmul.f32 %v4193, 0.5
        %v4232 = vmul.f32 %v4195, 0.5
        %v4233 = vmul.f32 %v4199, 0.5
        %v4234 = vmul.f32 %v4201, 0.5
        %v4235 = vmul.f32 %v4109, 0.70710677
        %v4236 = vmul.f32 %v4111, 0.70710677
        %v4237 = vmul.f32 %v4115, 0.70710677
        %v4238 = vmul.f32 %v4117, 0.70710677
        %v4239 = vmul.f32 %v4121, 0.70710677
        %v4240 = vmul.f32 %v4123, 0.70710677
        %v4241 = vmul.f32 %v4127, 0.70710677
        %v4242 = vmul.f32 %v4129, 0.70710677
        %v4243 = vmul.f32 %v4133, 0.70710677
        %v4244 = vmul.f32 %v4135, 0.70710677
        %v4245 = vmul.f32 %v4139, 0.70710677
        %v4246 = vmul.f32 %v4141, 0.70710677
        %v4247 = vmul.f32 %v4145, 0.70710677
        %v4248 = vmul.f32 %v4147, 0.70710677
        %v4249 = vmul.f32 %v4151, 0.70710677
        %v4250 = vmul.f32 %v4153, 0.70710677
        %v4251 = vmul.f32 %v4157, 0.70710677
        %v4252 = vmul.f32 %v4159, 0.70710677
        %v4253 = vmul.f32 %v4163, 0.70710677
        %v4254 = vmul.f32 %v4165, 0.70710677
        %v4255 = vmul.f32 %v4169, 0.70710677
        %v4256 = vmul.f32 %v4171, 0.70710677
        %v4257 = vmul.f32 %v4175, 0.70710677
        %v4258 = vmul.f32 %v4177, 0.70710677
        %v4259 = vmul.f32 %v4181, 0.70710677
        %v4260 = vmul.f32 %v4183, 0.70710677
        %v4261 = vmul.f32 %v4187, 0.70710677
        %v4262 = vmul.f32 %v4189, 0.70710677
        %v4263 = vmul.f32 %v4193, 0.70710677
        %v4264 = vmul.f32 %v4195, 0.70710677
        %v4265 = vmul.f32 %v4199, 0.70710677
        %v4266 = vmul.f32 %v4201, 0.70710677
        %v4267 = vand.u32 2147483647, %v4235
        %v4268 = vand.u32 2147483647, %v4236
        %v4269 = vand.u32 2147483647, %v4237
        %v4270 = vand.u32 2147483647, %v4238
        %v4271 = vand.u32 2147483647, %v4239
        %v4272 = vand.u32 2147483647, %v4240
        %v4273 = vand.u32 2147483647, %v4241
        %v4274 = vand.u32 2147483647, %v4242
        %v4275 = vand.u32 2147483647, %v4243
        %v4276 = vand.u32 2147483647, %v4244
        %v4277 = vand.u32 2147483647, %v4245
        %v4278 = vand.u32 2147483647, %v4246
        %v4279 = vand.u32 2147483647, %v4247
        %v4280 = vand.u32 2147483647, %v4248
        %v4281 = vand.u32 2147483647, %v4249
        %v4282 = vand.u32 2147483647, %v4250
        %v4283 = vand.u32 2147483647, %v4251
        %v4284 = vand.u32 2147483647, %v4252
        %v4285 = vand.u32 2147483647, %v4253
        %v4286 = vand.u32 2147483647, %v4254
        %v4287 = vand.u32 2147483647, %v4255
        %v4288 = vand.u32 2147483647, %v4256
        %v4289 = vand.u32 2147483647, %v4257
        %v4290 = vand.u32 2147483647, %v4258
        %v4291 = vand.u32 2147483647, %v4259
        %v4292 = vand.u32 2147483647, %v4260
        %v4293 = vand.u32 2147483647, %v4261
        %v4294 = vand.u32 2147483647, %v4262
        %v4295 = vand.u32 2147483647, %v4263
        %v4296 = vand.u32 2147483647, %v4264
        %v4297 = vand.u32 2147483647, %v4265
        %v4298 = vand.u32 2147483647, %v4266
        %v4299 = vmul.f32 %v4267, 0.3275911
        %v4300 = vmul.f32 %v4268, 0.3275911
        %v4301 = vmul.f32 %v4269, 0.3275911
        %v4302 = vmul.f32 %v4270, 0.3275911
        %v4303 = vmul.f32 %v4271, 0.3275911
        %v4304 = vmul.f32 %v4272, 0.3275911
        %v4305 = vmul.f32 %v4273, 0.3275911
        %v4306 = vmul.f32 %v4274, 0.3275911
        %v4307 = vmul.f32 %v4275, 0.3275911
        %v4308 = vmul.f32 %v4276, 0.3275911
        %v4309 = vmul.f32 %v4277, 0.3275911
        %v4310 = vmul.f32 %v4278, 0.3275911
        %v4311 = vmul.f32 %v4279, 0.3275911
        %v4312 = vmul.f32 %v4280, 0.3275911
        %v4313 = vmul.f32 %v4281, 0.3275911
        %v4314 = vmul.f32 %v4282, 0.3275911
        %v4315 = vmul.f32 %v4283, 0.3275911
        %v4316 = vmul.f32 %v4284, 0.3275911
        %v4317 = vmul.f32 %v4285, 0.3275911
        %v4318 = vmul.f32 %v4286, 0.3275911
        %v4319 = vmul.f32 %v4287, 0.3275911
        %v4320 = vmul.f32 %v4288, 0.3275911
        %v4321 = vmul.f32 %v4289, 0.3275911
        %v4322 = vmul.f32 %v4290, 0.3275911
        %v4323 = vmul.f32 %v4291, 0.3275911
        %v4324 = vmul.f32 %v4292, 0.3275911
        %v4325 = vmul.f32 %v4293, 0.3275911
        %v4326 = vmul.f32 %v4294, 0.3275911
        %v4327 = vmul.f32 %v4295, 0.3275911
        %v4328 = vmul.f32 %v4296, 0.3275911
        %v4329 = vmul.f32 %v4297, 0.3275911
        %v4330 = vmul.f32 %v4298, 0.3275911
        %v4331 = vadd.f32 %v4299, 1.0
        %v4332 = vadd.f32 %v4300, 1.0
        %v4333 = vadd.f32 %v4301, 1.0
        %v4334 = vadd.f32 %v4302, 1.0
        %v4335 = vadd.f32 %v4303, 1.0
        %v4336 = vadd.f32 %v4304, 1.0
        %v4337 = vadd.f32 %v4305, 1.0
        %v4338 = vadd.f32 %v4306, 1.0
        %v4339 = vadd.f32 %v4307, 1.0
        %v4340 = vadd.f32 %v4308, 1.0
        %v4341 = vadd.f32 %v4309, 1.0
        %v4342 = vadd.f32 %v4310, 1.0
        %v4343 = vadd.f32 %v4311, 1.0
        %v4344 = vadd.f32 %v4312, 1.0
        %v4345 = vadd.f32 %v4313, 1.0
        %v4346 = vadd.f32 %v4314, 1.0
        %v4347 = vadd.f32 %v4315, 1.0
        %v4348 = vadd.f32 %v4316, 1.0
        %v4349 = vadd.f32 %v4317, 1.0
        %v4350 = vadd.f32 %v4318, 1.0
        %v4351 = vadd.f32 %v4319, 1.0
        %v4352 = vadd.f32 %v4320, 1.0
        %v4353 = vadd.f32 %v4321, 1.0
        %v4354 = vadd.f32 %v4322, 1.0
        %v4355 = vadd.f32 %v4323, 1.0
        %v4356 = vadd.f32 %v4324, 1.0
        %v4357 = vadd.f32 %v4325, 1.0
        %v4358 = vadd.f32 %v4326, 1.0
        %v4359 = vadd.f32 %v4327, 1.0
        %v4360 = vadd.f32 %v4328, 1.0
        %v4361 = vadd.f32 %v4329, 1.0
        %v4362 = vadd.f32 %v4330, 1.0
        %v4363 = vrcp.pop %v4331
        %v4364 = vmul.f32 1.0, %v4363
        %v4365 = vrcp.pop %v4332
        %v4366 = vmul.f32 1.0, %v4365
        %v4367 = vrcp.pop %v4333
        %v4368 = vmul.f32 1.0, %v4367
        %v4369 = vrcp.pop %v4334
        %v4370 = vmul.f32 1.0, %v4369
        %v4371 = vrcp.pop %v4335
        %v4372 = vmul.f32 1.0, %v4371
        %v4373 = vrcp.pop %v4336
        %v4374 = vmul.f32 1.0, %v4373
        %v4375 = vrcp.pop %v4337
        %v4376 = vmul.f32 1.0, %v4375
        %v4377 = vrcp.pop %v4338
        %v4378 = vmul.f32 1.0, %v4377
        %v4379 = vrcp.pop %v4339
        %v4380 = vmul.f32 1.0, %v4379
        %v4381 = vrcp.pop %v4340
        %v4382 = vmul.f32 1.0, %v4381
        %v4383 = vrcp.pop %v4341
        %v4384 = vmul.f32 1.0, %v4383
        %v4385 = vrcp.pop %v4342
        %v4386 = vmul.f32 1.0, %v4385
        %v4387 = vrcp.pop %v4343
        %v4388 = vmul.f32 1.0, %v4387
        %v4389 = vrcp.pop %v4344
        %v4390 = vmul.f32 1.0, %v4389
        %v4391 = vrcp.pop %v4345
        %v4392 = vmul.f32 1.0, %v4391
        %v4393 = vrcp.pop %v4346
        %v4394 = vmul.f32 1.0, %v4393
        %v4395 = vrcp.pop %v4347
        %v4396 = vmul.f32 1.0, %v4395
        %v4397 = vrcp.pop %v4348
        %v4398 = vmul.f32 1.0, %v4397
        %v4399 = vrcp.pop %v4349
        %v4400 = vmul.f32 1.0, %v4399
        %v4401 = vrcp.pop %v4350
        %v4402 = vmul.f32 1.0, %v4401
        %v4403 = vrcp.pop %v4351
        %v4404 = vmul.f32 1.0, %v4403
        %v4405 = vrcp.pop %v4352
        %v4406 = vmul.f32 1.0, %v4405
        %v4407 = vrcp.pop %v4353
        %v4408 = vmul.f32 1.0, %v4407
        %v4409 = vrcp.pop %v4354
        %v4410 = vmul.f32 1.0, %v4409
        %v4411 = vrcp.pop %v4355
        %v4412 = vmul.f32 1.0, %v4411
        %v4413 = vrcp.pop %v4356
        %v4414 = vmul.f32 1.0, %v4413
        %v4415 = vrcp.pop %v4357
        %v4416 = vmul.f32 1.0, %v4415
        %v4417 = vrcp.pop %v4358
        %v4418 = vmul.f32 1.0, %v4417
        %v4419 = vrcp.pop %v4359
        %v4420 = vmul.f32 1.0, %v4419
        %v4421 = vrcp.pop %v4360
        %v4422 = vmul.f32 1.0, %v4421
        %v4423 = vrcp.pop %v4361
        %v4424 = vmul.f32 1.0, %v4423
        %v4425 = vrcp.pop %v4362
        %v4426 = vmul.f32 1.0, %v4425
        %v4427 = vmul.f32 %v4364, 1.0614054
        %v4428 = vmul.f32 %v4366, 1.0614054
        %v4429 = vmul.f32 %v4368, 1.0614054
        %v4430 = vmul.f32 %v4370, 1.0614054
        %v4431 = vmul.f32 %v4372, 1.0614054
        %v4432 = vmul.f32 %v4374, 1.0614054
        %v4433 = vmul.f32 %v4376, 1.0614054
        %v4434 = vmul.f32 %v4378, 1.0614054
        %v4435 = vmul.f32 %v4380, 1.0614054
        %v4436 = vmul.f32 %v4382, 1.0614054
        %v4437 = vmul.f32 %v4384, 1.0614054
        %v4438 = vmul.f32 %v4386, 1.0614054
        %v4439 = vmul.f32 %v4388, 1.0614054
        %v4440 = vmul.f32 %v4390, 1.0614054
        %v4441 = vmul.f32 %v4392, 1.0614054
        %v4442 = vmul.f32 %v4394, 1.0614054
        %v4443 = vmul.f32 %v4396, 1.0614054
        %v4444 = vmul.f32 %v4398, 1.0614054
        %v4445 = vmul.f32 %v4400, 1.0614054
        %v4446 = vmul.f32 %v4402, 1.0614054
        %v4447 = vmul.f32 %v4404, 1.0614054
        %v4448 = vmul.f32 %v4406, 1.0614054
        %v4449 = vmul.f32 %v4408, 1.0614054
        %v4450 = vmul.f32 %v4410, 1.0614054
        %v4451 = vmul.f32 %v4412, 1.0614054
        %v4452 = vmul.f32 %v4414, 1.0614054
        %v4453 = vmul.f32 %v4416, 1.0614054
        %v4454 = vmul.f32 %v4418, 1.0614054
        %v4455 = vmul.f32 %v4420, 1.0614054
        %v4456 = vmul.f32 %v4422, 1.0614054
        %v4457 = vmul.f32 %v4424, 1.0614054
        %v4458 = vmul.f32 %v4426, 1.0614054
        %v4459 = vadd.f32 %v4427, -1.4531521
        %v4460 = vadd.f32 %v4428, -1.4531521
        %v4461 = vadd.f32 %v4429, -1.4531521
        %v4462 = vadd.f32 %v4430, -1.4531521
        %v4463 = vadd.f32 %v4431, -1.4531521
        %v4464 = vadd.f32 %v4432, -1.4531521
        %v4465 = vadd.f32 %v4433, -1.4531521
        %v4466 = vadd.f32 %v4434, -1.4531521
        %v4467 = vadd.f32 %v4435, -1.4531521
        %v4468 = vadd.f32 %v4436, -1.4531521
        %v4469 = vadd.f32 %v4437, -1.4531521
        %v4470 = vadd.f32 %v4438, -1.4531521
        %v4471 = vadd.f32 %v4439, -1.4531521
        %v4472 = vadd.f32 %v4440, -1.4531521
        %v4473 = vadd.f32 %v4441, -1.4531521
        %v4474 = vadd.f32 %v4442, -1.4531521
        %v4475 = vadd.f32 %v4443, -1.4531521
        %v4476 = vadd.f32 %v4444, -1.4531521
        %v4477 = vadd.f32 %v4445, -1.4531521
        %v4478 = vadd.f32 %v4446, -1.4531521
        %v4479 = vadd.f32 %v4447, -1.4531521
        %v4480 = vadd.f32 %v4448, -1.4531521
        %v4481 = vadd.f32 %v4449, -1.4531521
        %v4482 = vadd.f32 %v4450, -1.4531521
        %v4483 = vadd.f32 %v4451, -1.4531521
        %v4484 = vadd.f32 %v4452, -1.4531521
        %v4485 = vadd.f32 %v4453, -1.4531521
        %v4486 = vadd.f32 %v4454, -1.4531521
        %v4487 = vadd.f32 %v4455, -1.4531521
        %v4488 = vadd.f32 %v4456, -1.4531521
        %v4489 = vadd.f32 %v4457, -1.4531521
        %v4490 = vadd.f32 %v4458, -1.4531521
        %v4491 = vmul.f32 %v4459, %v4364
        %v4492 = vmul.f32 %v4460, %v4366
        %v4493 = vmul.f32 %v4461, %v4368
        %v4494 = vmul.f32 %v4462, %v4370
        %v4495 = vmul.f32 %v4463, %v4372
        %v4496 = vmul.f32 %v4464, %v4374
        %v4497 = vmul.f32 %v4465, %v4376
        %v4498 = vmul.f32 %v4466, %v4378
        %v4499 = vmul.f32 %v4467, %v4380
        %v4500 = vmul.f32 %v4468, %v4382
        %v4501 = vmul.f32 %v4469, %v4384
        %v4502 = vmul.f32 %v4470, %v4386
        %v4503 = vmul.f32 %v4471, %v4388
        %v4504 = vmul.f32 %v4472, %v4390
        %v4505 = vmul.f32 %v4473, %v4392
        %v4506 = vmul.f32 %v4474, %v4394
        %v4507 = vmul.f32 %v4475, %v4396
        %v4508 = vmul.f32 %v4476, %v4398
        %v4509 = vmul.f32 %v4477, %v4400
        %v4510 = vmul.f32 %v4478, %v4402
        %v4511 = vmul.f32 %v4479, %v4404
        %v4512 = vmul.f32 %v4480, %v4406
        %v4513 = vmul.f32 %v4481, %v4408
        %v4514 = vmul.f32 %v4482, %v4410
        %v4515 = vmul.f32 %v4483, %v4412
        %v4516 = vmul.f32 %v4484, %v4414
        %v4517 = vmul.f32 %v4485, %v4416
        %v4518 = vmul.f32 %v4486, %v4418
        %v4519 = vmul.f32 %v4487, %v4420
        %v4520 = vmul.f32 %v4488, %v4422
        %v4521 = vmul.f32 %v4489, %v4424
        %v4522 = vmul.f32 %v4490, %v4426
        %v4523 = vadd.f32 %v4491, 1.4214138
        %v4524 = vadd.f32 %v4492, 1.4214138
        %v4525 = vadd.f32 %v4493, 1.4214138
        %v4526 = vadd.f32 %v4494, 1.4214138
        %v4527 = vadd.f32 %v4495, 1.4214138
        %v4528 = vadd.f32 %v4496, 1.4214138
        %v4529 = vadd.f32 %v4497, 1.4214138
        %v4530 = vadd.f32 %v4498, 1.4214138
        %v4531 = vadd.f32 %v4499, 1.4214138
        %v4532 = vadd.f32 %v4500, 1.4214138
        %v4533 = vadd.f32 %v4501, 1.4214138
        %v4534 = vadd.f32 %v4502, 1.4214138
        %v4535 = vadd.f32 %v4503, 1.4214138
        %v4536 = vadd.f32 %v4504, 1.4214138
        %v4537 = vadd.f32 %v4505, 1.4214138
        %v4538 = vadd.f32 %v4506, 1.4214138
        %v4539 = vadd.f32 %v4507, 1.4214138
        %v4540 = vadd.f32 %v4508, 1.4214138
        %v4541 = vadd.f32 %v4509, 1.4214138
        %v4542 = vadd.f32 %v4510, 1.4214138
        %v4543 = vadd.f32 %v4511, 1.4214138
        %v4544 = vadd.f32 %v4512, 1.4214138
        %v4545 = vadd.f32 %v4513, 1.4214138
        %v4546 = vadd.f32 %v4514, 1.4214138
        %v4547 = vadd.f32 %v4515, 1.4214138
        %v4548 = vadd.f32 %v4516, 1.4214138
        %v4549 = vadd.f32 %v4517, 1.4214138
        %v4550 = vadd.f32 %v4518, 1.4214138
        %v4551 = vadd.f32 %v4519, 1.4214138
        %v4552 = vadd.f32 %v4520, 1.4214138
        %v4553 = vadd.f32 %v4521, 1.4214138
        %v4554 = vadd.f32 %v4522, 1.4214138
        %v4555 = vmul.f32 %v4523, %v4364
        %v4556 = vmul.f32 %v4524, %v4366
        %v4557 = vmul.f32 %v4525, %v4368
        %v4558 = vmul.f32 %v4526, %v4370
        %v4559 = vmul.f32 %v4527, %v4372
        %v4560 = vmul.f32 %v4528, %v4374
        %v4561 = vmul.f32 %v4529, %v4376
        %v4562 = vmul.f32 %v4530, %v4378
        %v4563 = vmul.f32 %v4531, %v4380
        %v4564 = vmul.f32 %v4532, %v4382
        %v4565 = vmul.f32 %v4533, %v4384
        %v4566 = vmul.f32 %v4534, %v4386
        %v4567 = vmul.f32 %v4535, %v4388
        %v4568 = vmul.f32 %v4536, %v4390
        %v4569 = vmul.f32 %v4537, %v4392
        %v4570 = vmul.f32 %v4538, %v4394
        %v4571 = vmul.f32 %v4539, %v4396
        %v4572 = vmul.f32 %v4540, %v4398
        %v4573 = vmul.f32 %v4541, %v4400
        %v4574 = vmul.f32 %v4542, %v4402
        %v4575 = vmul.f32 %v4543, %v4404
        %v4576 = vmul.f32 %v4544, %v4406
        %v4577 = vmul.f32 %v4545, %v4408
        %v4578 = vmul.f32 %v4546, %v4410
        %v4579 = vmul.f32 %v4547, %v4412
        %v4580 = vmul.f32 %v4548, %v4414
        %v4581 = vmul.f32 %v4549, %v4416
        %v4582 = vmul.f32 %v4550, %v4418
        %v4583 = vmul.f32 %v4551, %v4420
        %v4584 = vmul.f32 %v4552, %v4422
        %v4585 = vmul.f32 %v4553, %v4424
        %v4586 = vmul.f32 %v4554, %v4426
        %v4587 = vadd.f32 %v4555, -0.28449672
        %v4588 = vadd.f32 %v4556, -0.28449672
        %v4589 = vadd.f32 %v4557, -0.28449672
        %v4590 = vadd.f32 %v4558, -0.28449672
        %v4591 = vadd.f32 %v4559, -0.28449672
        %v4592 = vadd.f32 %v4560, -0.28449672
        %v4593 = vadd.f32 %v4561, -0.28449672
        %v4594 = vadd.f32 %v4562, -0.28449672
        %v4595 = vadd.f32 %v4563, -0.28449672
        %v4596 = vadd.f32 %v4564, -0.28449672
        %v4597 = vadd.f32 %v4565, -0.28449672
        %v4598 = vadd.f32 %v4566, -0.28449672
        %v4599 = vadd.f32 %v4567, -0.28449672
        %v4600 = vadd.f32 %v4568, -0.28449672
        %v4601 = vadd.f32 %v4569, -0.28449672
        %v4602 = vadd.f32 %v4570, -0.28449672
        %v4603 = vadd.f32 %v4571, -0.28449672
        %v4604 = vadd.f32 %v4572, -0.28449672
        %v4605 = vadd.f32 %v4573, -0.28449672
        %v4606 = vadd.f32 %v4574, -0.28449672
        %v4607 = vadd.f32 %v4575, -0.28449672
        %v4608 = vadd.f32 %v4576, -0.28449672
        %v4609 = vadd.f32 %v4577, -0.28449672
        %v4610 = vadd.f32 %v4578, -0.28449672
        %v4611 = vadd.f32 %v4579, -0.28449672
        %v4612 = vadd.f32 %v4580, -0.28449672
        %v4613 = vadd.f32 %v4581, -0.28449672
        %v4614 = vadd.f32 %v4582, -0.28449672
        %v4615 = vadd.f32 %v4583, -0.28449672
        %v4616 = vadd.f32 %v4584, -0.28449672
        %v4617 = vadd.f32 %v4585, -0.28449672
        %v4618 = vadd.f32 %v4586, -0.28449672
        %v4619 = vmul.f32 %v4587, %v4364
        %v4620 = vmul.f32 %v4588, %v4366
        %v4621 = vmul.f32 %v4589, %v4368
        %v4622 = vmul.f32 %v4590, %v4370
        %v4623 = vmul.f32 %v4591, %v4372
        %v4624 = vmul.f32 %v4592, %v4374
        %v4625 = vmul.f32 %v4593, %v4376
        %v4626 = vmul.f32 %v4594, %v4378
        %v4627 = vmul.f32 %v4595, %v4380
        %v4628 = vmul.f32 %v4596, %v4382
        %v4629 = vmul.f32 %v4597, %v4384
        %v4630 = vmul.f32 %v4598, %v4386
        %v4631 = vmul.f32 %v4599, %v4388
        %v4632 = vmul.f32 %v4600, %v4390
        %v4633 = vmul.f32 %v4601, %v4392
        %v4634 = vmul.f32 %v4602, %v4394
        %v4635 = vmul.f32 %v4603, %v4396
        %v4636 = vmul.f32 %v4604, %v4398
        %v4637 = vmul.f32 %v4605, %v4400
        %v4638 = vmul.f32 %v4606, %v4402
        %v4639 = vmul.f32 %v4607, %v4404
        %v4640 = vmul.f32 %v4608, %v4406
        %v4641 = vmul.f32 %v4609, %v4408
        %v4642 = vmul.f32 %v4610, %v4410
        %v4643 = vmul.f32 %v4611, %v4412
        %v4644 = vmul.f32 %v4612, %v4414
        %v4645 = vmul.f32 %v4613, %v4416
        %v4646 = vmul.f32 %v4614, %v4418
        %v4647 = vmul.f32 %v4615, %v4420
        %v4648 = vmul.f32 %v4616, %v4422
        %v4649 = vmul.f32 %v4617, %v4424
        %v4650 = vmul.f32 %v4618, %v4426
        %v4651 = vadd.f32 %v4619, 0.2548296
        %v4652 = vadd.f32 %v4620, 0.2548296
        %v4653 = vadd.f32 %v4621, 0.2548296
        %v4654 = vadd.f32 %v4622, 0.2548296
        %v4655 = vadd.f32 %v4623, 0.2548296
        %v4656 = vadd.f32 %v4624, 0.2548296
        %v4657 = vadd.f32 %v4625, 0.2548296
        %v4658 = vadd.f32 %v4626, 0.2548296
        %v4659 = vadd.f32 %v4627, 0.2548296
        %v4660 = vadd.f32 %v4628, 0.2548296
        %v4661 = vadd.f32 %v4629, 0.2548296
        %v4662 = vadd.f32 %v4630, 0.2548296
        %v4663 = vadd.f32 %v4631, 0.2548296
        %v4664 = vadd.f32 %v4632, 0.2548296
        %v4665 = vadd.f32 %v4633, 0.2548296
        %v4666 = vadd.f32 %v4634, 0.2548296
        %v4667 = vadd.f32 %v4635, 0.2548296
        %v4668 = vadd.f32 %v4636, 0.2548296
        %v4669 = vadd.f32 %v4637, 0.2548296
        %v4670 = vadd.f32 %v4638, 0.2548296
        %v4671 = vadd.f32 %v4639, 0.2548296
        %v4672 = vadd.f32 %v4640, 0.2548296
        %v4673 = vadd.f32 %v4641, 0.2548296
        %v4674 = vadd.f32 %v4642, 0.2548296
        %v4675 = vadd.f32 %v4643, 0.2548296
        %v4676 = vadd.f32 %v4644, 0.2548296
        %v4677 = vadd.f32 %v4645, 0.2548296
        %v4678 = vadd.f32 %v4646, 0.2548296
        %v4679 = vadd.f32 %v4647, 0.2548296
        %v4680 = vadd.f32 %v4648, 0.2548296
        %v4681 = vadd.f32 %v4649, 0.2548296
        %v4682 = vadd.f32 %v4650, 0.2548296
        %v4683 = vmul.f32 %v4651, %v4364
        %v4684 = vmul.f32 %v4652, %v4366
        %v4685 = vmul.f32 %v4653, %v4368
        %v4686 = vmul.f32 %v4654, %v4370
        %v4687 = vmul.f32 %v4655, %v4372
        %v4688 = vmul.f32 %v4656, %v4374
        %v4689 = vmul.f32 %v4657, %v4376
        %v4690 = vmul.f32 %v4658, %v4378
        %v4691 = vmul.f32 %v4659, %v4380
        %v4692 = vmul.f32 %v4660, %v4382
        %v4693 = vmul.f32 %v4661, %v4384
        %v4694 = vmul.f32 %v4662, %v4386
        %v4695 = vmul.f32 %v4663, %v4388
        %v4696 = vmul.f32 %v4664, %v4390
        %v4697 = vmul.f32 %v4665, %v4392
        %v4698 = vmul.f32 %v4666, %v4394
        %v4699 = vmul.f32 %v4667, %v4396
        %v4700 = vmul.f32 %v4668, %v4398
        %v4701 = vmul.f32 %v4669, %v4400
        %v4702 = vmul.f32 %v4670, %v4402
        %v4703 = vmul.f32 %v4671, %v4404
        %v4704 = vmul.f32 %v4672, %v4406
        %v4705 = vmul.f32 %v4673, %v4408
        %v4706 = vmul.f32 %v4674, %v4410
        %v4707 = vmul.f32 %v4675, %v4412
        %v4708 = vmul.f32 %v4676, %v4414
        %v4709 = vmul.f32 %v4677, %v4416
        %v4710 = vmul.f32 %v4678, %v4418
        %v4711 = vmul.f32 %v4679, %v4420
        %v4712 = vmul.f32 %v4680, %v4422
        %v4713 = vmul.f32 %v4681, %v4424
        %v4714 = vmul.f32 %v4682, %v4426
        %v4715 = vsub.f32 0.0, %v4267
        %v4716 = vsub.f32 0.0, %v4268
        %v4717 = vsub.f32 0.0, %v4269
        %v4718 = vsub.f32 0.0, %v4270
        %v4719 = vsub.f32 0.0, %v4271
        %v4720 = vsub.f32 0.0, %v4272
        %v4721 = vsub.f32 0.0, %v4273
        %v4722 = vsub.f32 0.0, %v4274
        %v4723 = vsub.f32 0.0, %v4275
        %v4724 = vsub.f32 0.0, %v4276
        %v4725 = vsub.f32 0.0, %v4277
        %v4726 = vsub.f32 0.0, %v4278
        %v4727 = vsub.f32 0.0, %v4279
        %v4728 = vsub.f32 0.0, %v4280
        %v4729 = vsub.f32 0.0, %v4281
        %v4730 = vsub.f32 0.0, %v4282
        %v4731 = vsub.f32 0.0, %v4283
        %v4732 = vsub.f32 0.0, %v4284
        %v4733 = vsub.f32 0.0, %v4285
        %v4734 = vsub.f32 0.0, %v4286
        %v4735 = vsub.f32 0.0, %v4287
        %v4736 = vsub.f32 0.0, %v4288
        %v4737 = vsub.f32 0.0, %v4289
        %v4738 = vsub.f32 0.0, %v4290
        %v4739 = vsub.f32 0.0, %v4291
        %v4740 = vsub.f32 0.0, %v4292
        %v4741 = vsub.f32 0.0, %v4293
        %v4742 = vsub.f32 0.0, %v4294
        %v4743 = vsub.f32 0.0, %v4295
        %v4744 = vsub.f32 0.0, %v4296
        %v4745 = vsub.f32 0.0, %v4297
        %v4746 = vsub.f32 0.0, %v4298
        %v4747 = vmul.f32 %v4715, %v4267
        %v4748 = vmul.f32 %v4716, %v4268
        %v4749 = vmul.f32 %v4717, %v4269
        %v4750 = vmul.f32 %v4718, %v4270
        %v4751 = vmul.f32 %v4719, %v4271
        %v4752 = vmul.f32 %v4720, %v4272
        %v4753 = vmul.f32 %v4721, %v4273
        %v4754 = vmul.f32 %v4722, %v4274
        %v4755 = vmul.f32 %v4723, %v4275
        %v4756 = vmul.f32 %v4724, %v4276
        %v4757 = vmul.f32 %v4725, %v4277
        %v4758 = vmul.f32 %v4726, %v4278
        %v4759 = vmul.f32 %v4727, %v4279
        %v4760 = vmul.f32 %v4728, %v4280
        %v4761 = vmul.f32 %v4729, %v4281
        %v4762 = vmul.f32 %v4730, %v4282
        %v4763 = vmul.f32 %v4731, %v4283
        %v4764 = vmul.f32 %v4732, %v4284
        %v4765 = vmul.f32 %v4733, %v4285
        %v4766 = vmul.f32 %v4734, %v4286
        %v4767 = vmul.f32 %v4735, %v4287
        %v4768 = vmul.f32 %v4736, %v4288
        %v4769 = vmul.f32 %v4737, %v4289
        %v4770 = vmul.f32 %v4738, %v4290
        %v4771 = vmul.f32 %v4739, %v4291
        %v4772 = vmul.f32 %v4740, %v4292
        %v4773 = vmul.f32 %v4741, %v4293
        %v4774 = vmul.f32 %v4742, %v4294
        %v4775 = vmul.f32 %v4743, %v4295
        %v4776 = vmul.f32 %v4744, %v4296
        %v4777 = vmul.f32 %v4745, %v4297
        %v4778 = vmul.f32 %v4746, %v4298
        %v4779 = vmul.f32 %v4747, 1.442695
        %v4780 = vpow.pop %v4779
        %v4781 = vmul.f32 %v4748, 1.442695
        %v4782 = vpow.pop %v4781
        %v4783 = vmul.f32 %v4749, 1.442695
        %v4784 = vpow.pop %v4783
        %v4785 = vmul.f32 %v4750, 1.442695
        %v4786 = vpow.pop %v4785
        %v4787 = vmul.f32 %v4751, 1.442695
        %v4788 = vpow.pop %v4787
        %v4789 = vmul.f32 %v4752, 1.442695
        %v4790 = vpow.pop %v4789
        %v4791 = vmul.f32 %v4753, 1.442695
        %v4792 = vpow.pop %v4791
        %v4793 = vmul.f32 %v4754, 1.442695
        %v4794 = vpow.pop %v4793
        %v4795 = vmul.f32 %v4755, 1.442695
        %v4796 = vpow.pop %v4795
        %v4797 = vmul.f32 %v4756, 1.442695
        %v4798 = vpow.pop %v4797
        %v4799 = vmul.f32 %v4757, 1.442695
        %v4800 = vpow.pop %v4799
        %v4801 = vmul.f32 %v4758, 1.442695
        %v4802 = vpow.pop %v4801
        %v4803 = vmul.f32 %v4759, 1.442695
        %v4804 = vpow.pop %v4803
        %v4805 = vmul.f32 %v4760, 1.442695
        %v4806 = vpow.pop %v4805
        %v4807 = vmul.f32 %v4761, 1.442695
        %v4808 = vpow.pop %v4807
        %v4809 = vmul.f32 %v4762, 1.442695
        %v4810 = vpow.pop %v4809
        %v4811 = vmul.f32 %v4763, 1.442695
        %v4812 = vpow.pop %v4811
        %v4813 = vmul.f32 %v4764, 1.442695
        %v4814 = vpow.pop %v4813
        %v4815 = vmul.f32 %v4765, 1.442695
        %v4816 = vpow.pop %v4815
        %v4817 = vmul.f32 %v4766, 1.442695
        %v4818 = vpow.pop %v4817
        %v4819 = vmul.f32 %v4767, 1.442695
        %v4820 = vpow.pop %v4819
        %v4821 = vmul.f32 %v4768, 1.442695
        %v4822 = vpow.pop %v4821
        %v4823 = vmul.f32 %v4769, 1.442695
        %v4824 = vpow.pop %v4823
        %v4825 = vmul.f32 %v4770, 1.442695
        %v4826 = vpow.pop %v4825
        %v4827 = vmul.f32 %v4771, 1.442695
        %v4828 = vpow.pop %v4827
        %v4829 = vmul.f32 %v4772, 1.442695
        %v4830 = vpow.pop %v4829
        %v4831 = vmul.f32 %v4773, 1.442695
        %v4832 = vpow.pop %v4831
        %v4833 = vmul.f32 %v4774, 1.442695
        %v4834 = vpow.pop %v4833
        %v4835 = vmul.f32 %v4775, 1.442695
        %v4836 = vpow.pop %v4835
        %v4837 = vmul.f32 %v4776, 1.442695
        %v4838 = vpow.pop %v4837
        %v4839 = vmul.f32 %v4777, 1.442695
        %v4840 = vpow.pop %v4839
        %v4841 = vmul.f32 %v4778, 1.442695
        %v4842 = vpow.pop %v4841
        %v4843 = vmul.f32 %v4683, %v4780
        %v4844 = vmul.f32 %v4684, %v4782
        %v4845 = vmul.f32 %v4685, %v4784
        %v4846 = vmul.f32 %v4686, %v4786
        %v4847 = vmul.f32 %v4687, %v4788
        %v4848 = vmul.f32 %v4688, %v4790
        %v4849 = vmul.f32 %v4689, %v4792
        %v4850 = vmul.f32 %v4690, %v4794
        %v4851 = vmul.f32 %v4691, %v4796
        %v4852 = vmul.f32 %v4692, %v4798
        %v4853 = vmul.f32 %v4693, %v4800
        %v4854 = vmul.f32 %v4694, %v4802
        %v4855 = vmul.f32 %v4695, %v4804
        %v4856 = vmul.f32 %v4696, %v4806
        %v4857 = vmul.f32 %v4697, %v4808
        %v4858 = vmul.f32 %v4698, %v4810
        %v4859 = vmul.f32 %v4699, %v4812
        %v4860 = vmul.f32 %v4700, %v4814
        %v4861 = vmul.f32 %v4701, %v4816
        %v4862 = vmul.f32 %v4702, %v4818
        %v4863 = vmul.f32 %v4703, %v4820
        %v4864 = vmul.f32 %v4704, %v4822
        %v4865 = vmul.f32 %v4705, %v4824
        %v4866 = vmul.f32 %v4706, %v4826
        %v4867 = vmul.f32 %v4707, %v4828
        %v4868 = vmul.f32 %v4708, %v4830
        %v4869 = vmul.f32 %v4709, %v4832
        %v4870 = vmul.f32 %v4710, %v4834
        %v4871 = vmul.f32 %v4711, %v4836
        %v4872 = vmul.f32 %v4712, %v4838
        %v4873 = vmul.f32 %v4713, %v4840
        %v4874 = vmul.f32 %v4714, %v4842
        %v4875 = vsub.f32 1.0, %v4843
        %v4876 = vsub.f32 1.0, %v4844
        %v4877 = vsub.f32 1.0, %v4845
        %v4878 = vsub.f32 1.0, %v4846
        %v4879 = vsub.f32 1.0, %v4847
        %v4880 = vsub.f32 1.0, %v4848
        %v4881 = vsub.f32 1.0, %v4849
        %v4882 = vsub.f32 1.0, %v4850
        %v4883 = vsub.f32 1.0, %v4851
        %v4884 = vsub.f32 1.0, %v4852
        %v4885 = vsub.f32 1.0, %v4853
        %v4886 = vsub.f32 1.0, %v4854
        %v4887 = vsub.f32 1.0, %v4855
        %v4888 = vsub.f32 1.0, %v4856
        %v4889 = vsub.f32 1.0, %v4857
        %v4890 = vsub.f32 1.0, %v4858
        %v4891 = vsub.f32 1.0, %v4859
        %v4892 = vsub.f32 1.0, %v4860
        %v4893 = vsub.f32 1.0, %v4861
        %v4894 = vsub.f32 1.0, %v4862
        %v4895 = vsub.f32 1.0, %v4863
        %v4896 = vsub.f32 1.0, %v4864
        %v4897 = vsub.f32 1.0, %v4865
        %v4898 = vsub.f32 1.0, %v4866
        %v4899 = vsub.f32 1.0, %v4867
        %v4900 = vsub.f32 1.0, %v4868
        %v4901 = vsub.f32 1.0, %v4869
        %v4902 = vsub.f32 1.0, %v4870
        %v4903 = vsub.f32 1.0, %v4871
        %v4904 = vsub.f32 1.0, %v4872
        %v4905 = vsub.f32 1.0, %v4873
        %v4906 = vsub.f32 1.0, %v4874
        %vm4907 = vcmp.lt.f32.partialorder %v4235, 0.0
        %vm4908 = vcmp.lt.f32.partialorder %v4236, 0.0
        %vm4909 = vcmp.lt.f32.partialorder %v4237, 0.0
        %vm4910 = vcmp.lt.f32.partialorder %v4238, 0.0
        %vm4911 = vcmp.lt.f32.partialorder %v4239, 0.0
        %vm4912 = vcmp.lt.f32.partialorder %v4240, 0.0
        %vm4913 = vcmp.lt.f32.partialorder %v4241, 0.0
        %vm4914 = vcmp.lt.f32.partialorder %v4242, 0.0
        %vm4915 = vcmp.lt.f32.partialorder %v4243, 0.0
        %vm4916 = vcmp.lt.f32.partialorder %v4244, 0.0
        %vm4917 = vcmp.lt.f32.partialorder %v4245, 0.0
        %vm4918 = vcmp.lt.f32.partialorder %v4246, 0.0
        %vm4919 = vcmp.lt.f32.partialorder %v4247, 0.0
        %vm4920 = vcmp.lt.f32.partialorder %v4248, 0.0
        %vm4921 = vcmp.lt.f32.partialorder %v4249, 0.0
        %vm4922 = vcmp.lt.f32.partialorder %v4250, 0.0
        %vm4923 = vcmp.lt.f32.partialorder %v4251, 0.0
        %vm4924 = vcmp.lt.f32.partialorder %v4252, 0.0
        %vm4925 = vcmp.lt.f32.partialorder %v4253, 0.0
        %vm4926 = vcmp.lt.f32.partialorder %v4254, 0.0
        %vm4927 = vcmp.lt.f32.partialorder %v4255, 0.0
        %vm4928 = vcmp.lt.f32.partialorder %v4256, 0.0
        %vm4929 = vcmp.lt.f32.partialorder %v4257, 0.0
        %vm4930 = vcmp.lt.f32.partialorder %v4258, 0.0
        %vm4931 = vcmp.lt.f32.partialorder %v4259, 0.0
        %vm4932 = vcmp.lt.f32.partialorder %v4260, 0.0
        %vm4933 = vcmp.lt.f32.partialorder %v4261, 0.0
        %vm4934 = vcmp.lt.f32.partialorder %v4262, 0.0
        %vm4935 = vcmp.lt.f32.partialorder %v4263, 0.0
        %vm4936 = vcmp.lt.f32.partialorder %v4264, 0.0
        %vm4937 = vcmp.lt.f32.partialorder %v4265, 0.0
        %vm4938 = vcmp.lt.f32.partialorder %v4266, 0.0
        %v4939 = vsub.f32 0.0, %v4875
        %v4940 = vsub.f32 0.0, %v4876
        %v4941 = vsub.f32 0.0, %v4877
        %v4942 = vsub.f32 0.0, %v4878
        %v4943 = vsub.f32 0.0, %v4879
        %v4944 = vsub.f32 0.0, %v4880
        %v4945 = vsub.f32 0.0, %v4881
        %v4946 = vsub.f32 0.0, %v4882
        %v4947 = vsub.f32 0.0, %v4883
        %v4948 = vsub.f32 0.0, %v4884
        %v4949 = vsub.f32 0.0, %v4885
        %v4950 = vsub.f32 0.0, %v4886
        %v4951 = vsub.f32 0.0, %v4887
        %v4952 = vsub.f32 0.0, %v4888
        %v4953 = vsub.f32 0.0, %v4889
        %v4954 = vsub.f32 0.0, %v4890
        %v4955 = vsub.f32 0.0, %v4891
        %v4956 = vsub.f32 0.0, %v4892
        %v4957 = vsub.f32 0.0, %v4893
        %v4958 = vsub.f32 0.0, %v4894
        %v4959 = vsub.f32 0.0, %v4895
        %v4960 = vsub.f32 0.0, %v4896
        %v4961 = vsub.f32 0.0, %v4897
        %v4962 = vsub.f32 0.0, %v4898
        %v4963 = vsub.f32 0.0, %v4899
        %v4964 = vsub.f32 0.0, %v4900
        %v4965 = vsub.f32 0.0, %v4901
        %v4966 = vsub.f32 0.0, %v4902
        %v4967 = vsub.f32 0.0, %v4903
        %v4968 = vsub.f32 0.0, %v4904
        %v4969 = vsub.f32 0.0, %v4905
        %v4970 = vsub.f32 0.0, %v4906
        %v4971 = vsel %vm4907, %v4939, %v4875
        %v4972 = vsel %vm4908, %v4940, %v4876
        %v4973 = vsel %vm4909, %v4941, %v4877
        %v4974 = vsel %vm4910, %v4942, %v4878
        %v4975 = vsel %vm4911, %v4943, %v4879
        %v4976 = vsel %vm4912, %v4944, %v4880
        %v4977 = vsel %vm4913, %v4945, %v4881
        %v4978 = vsel %vm4914, %v4946, %v4882
        %v4979 = vsel %vm4915, %v4947, %v4883
        %v4980 = vsel %vm4916, %v4948, %v4884
        %v4981 = vsel %vm4917, %v4949, %v4885
        %v4982 = vsel %vm4918, %v4950, %v4886
        %v4983 = vsel %vm4919, %v4951, %v4887
        %v4984 = vsel %vm4920, %v4952, %v4888
        %v4985 = vsel %vm4921, %v4953, %v4889
        %v4986 = vsel %vm4922, %v4954, %v4890
        %v4987 = vsel %vm4923, %v4955, %v4891
        %v4988 = vsel %vm4924, %v4956, %v4892
        %v4989 = vsel %vm4925, %v4957, %v4893
        %v4990 = vsel %vm4926, %v4958, %v4894
        %v4991 = vsel %vm4927, %v4959, %v4895
        %v4992 = vsel %vm4928, %v4960, %v4896
        %v4993 = vsel %vm4929, %v4961, %v4897
        %v4994 = vsel %vm4930, %v4962, %v4898
        %v4995 = vsel %vm4931, %v4963, %v4899
        %v4996 = vsel %vm4932, %v4964, %v4900
        %v4997 = vsel %vm4933, %v4965, %v4901
        %v4998 = vsel %vm4934, %v4966, %v4902
        %v4999 = vsel %vm4935, %v4967, %v4903
        %v5000 = vsel %vm4936, %v4968, %v4904
        %v5001 = vsel %vm4937, %v4969, %v4905
        %v5002 = vsel %vm4938, %v4970, %v4906
        %v5003 = vadd.f32 %v4971, 1.0
        %v5004 = vadd.f32 %v4972, 1.0
        %v5005 = vadd.f32 %v4973, 1.0
        %v5006 = vadd.f32 %v4974, 1.0
        %v5007 = vadd.f32 %v4975, 1.0
        %v5008 = vadd.f32 %v4976, 1.0
        %v5009 = vadd.f32 %v4977, 1.0
        %v5010 = vadd.f32 %v4978, 1.0
        %v5011 = vadd.f32 %v4979, 1.0
        %v5012 = vadd.f32 %v4980, 1.0
        %v5013 = vadd.f32 %v4981, 1.0
        %v5014 = vadd.f32 %v4982, 1.0
        %v5015 = vadd.f32 %v4983, 1.0
        %v5016 = vadd.f32 %v4984, 1.0
        %v5017 = vadd.f32 %v4985, 1.0
        %v5018 = vadd.f32 %v4986, 1.0
        %v5019 = vadd.f32 %v4987, 1.0
        %v5020 = vadd.f32 %v4988, 1.0
        %v5021 = vadd.f32 %v4989, 1.0
        %v5022 = vadd.f32 %v4990, 1.0
        %v5023 = vadd.f32 %v4991, 1.0
        %v5024 = vadd.f32 %v4992, 1.0
        %v5025 = vadd.f32 %v4993, 1.0
        %v5026 = vadd.f32 %v4994, 1.0
        %v5027 = vadd.f32 %v4995, 1.0
        %v5028 = vadd.f32 %v4996, 1.0
        %v5029 = vadd.f32 %v4997, 1.0
        %v5030 = vadd.f32 %v4998, 1.0
        %v5031 = vadd.f32 %v4999, 1.0
        %v5032 = vadd.f32 %v5000, 1.0
        %v5033 = vadd.f32 %v5001, 1.0
        %v5034 = vadd.f32 %v5002, 1.0
        %v5035 = vmul.f32 %v4203, %v5003
        %v5036 = vmul.f32 %v4204, %v5004
        %v5037 = vmul.f32 %v4205, %v5005
        %v5038 = vmul.f32 %v4206, %v5006
        %v5039 = vmul.f32 %v4207, %v5007
        %v5040 = vmul.f32 %v4208, %v5008
        %v5041 = vmul.f32 %v4209, %v5009
        %v5042 = vmul.f32 %v4210, %v5010
        %v5043 = vmul.f32 %v4211, %v5011
        %v5044 = vmul.f32 %v4212, %v5012
        %v5045 = vmul.f32 %v4213, %v5013
        %v5046 = vmul.f32 %v4214, %v5014
        %v5047 = vmul.f32 %v4215, %v5015
        %v5048 = vmul.f32 %v4216, %v5016
        %v5049 = vmul.f32 %v4217, %v5017
        %v5050 = vmul.f32 %v4218, %v5018
        %v5051 = vmul.f32 %v4219, %v5019
        %v5052 = vmul.f32 %v4220, %v5020
        %v5053 = vmul.f32 %v4221, %v5021
        %v5054 = vmul.f32 %v4222, %v5022
        %v5055 = vmul.f32 %v4223, %v5023
        %v5056 = vmul.f32 %v4224, %v5024
        %v5057 = vmul.f32 %v4225, %v5025
        %v5058 = vmul.f32 %v4226, %v5026
        %v5059 = vmul.f32 %v4227, %v5027
        %v5060 = vmul.f32 %v4228, %v5028
        %v5061 = vmul.f32 %v4229, %v5029
        %v5062 = vmul.f32 %v4230, %v5030
        %v5063 = vmul.f32 %v4231, %v5031
        %v5064 = vmul.f32 %v4232, %v5032
        %v5065 = vmul.f32 %v4233, %v5033
        %v5066 = vmul.f32 %v4234, %v5034
        %v5067 = vadd.f32 %v5035, %v5036
        %5068 = vadd.xlane.f32.xlu0 %v5067
        %v5069 = vpop.xlane.xlu0 %5068
        %v5070 = vadd.f32 %v5037, %v5038
        %5071 = vadd.xlane.f32.xlu0 %v5070
        %v5072 = vpop.xlane.xlu0 %5071
        %v5073 = vadd.f32 %v5039, %v5040
        %5074 = vadd.xlane.f32.xlu0 %v5073
        %v5075 = vpop.xlane.xlu0 %5074
        %v5076 = vadd.f32 %v5041, %v5042
        %5077 = vadd.xlane.f32.xlu0 %v5076
        %v5078 = vpop.xlane.xlu0 %5077
        %v5079 = vadd.f32 %v5043, %v5044
        %5080 = vadd.xlane.f32.xlu0 %v5079
        %v5081 = vpop.xlane.xlu0 %5080
        %v5082 = vadd.f32 %v5045, %v5046
        %5083 = vadd.xlane.f32.xlu0 %v5082
        %v5084 = vpop.xlane.xlu0 %5083
        %v5085 = vadd.f32 %v5047, %v5048
        %5086 = vadd.xlane.f32.xlu0 %v5085
        %v5087 = vpop.xlane.xlu0 %5086
        %v5088 = vadd.f32 %v5049, %v5050
        %5089 = vadd.xlane.f32.xlu0 %v5088
        %v5090 = vpop.xlane.xlu0 %5089
        %v5091 = vadd.f32 %v5051, %v5052
        %5092 = vadd.xlane.f32.xlu0 %v5091
        %v5093 = vpop.xlane.xlu0 %5092
        %v5094 = vadd.f32 %v5053, %v5054
        %5095 = vadd.xlane.f32.xlu0 %v5094
        %v5096 = vpop.xlane.xlu0 %5095
        %v5097 = vadd.f32 %v5055, %v5056
        %5098 = vadd.xlane.f32.xlu0 %v5097
        %v5099 = vpop.xlane.xlu0 %5098
        %v5100 = vadd.f32 %v5057, %v5058
        %5101 = vadd.xlane.f32.xlu0 %v5100
        %v5102 = vpop.xlane.xlu0 %5101
        %v5103 = vadd.f32 %v5059, %v5060
        %5104 = vadd.xlane.f32.xlu0 %v5103
        %v5105 = vpop.xlane.xlu0 %5104
        %v5106 = vadd.f32 %v5061, %v5062
        %5107 = vadd.xlane.f32.xlu0 %v5106
        %v5108 = vpop.xlane.xlu0 %5107
        %v5109 = vadd.f32 %v5063, %v5064
        %5110 = vadd.xlane.f32.xlu0 %v5109
        %v5111 = vpop.xlane.xlu0 %5110
        %v5112 = vadd.f32 %v5065, %v5066
        %5113 = vadd.xlane.f32.xlu0 %v5112
        %v5114 = vpop.xlane.xlu0 %5113
        %v5115 = vrcp.pop 256.0
        %v5116 = vmul.f32 %v5069, %v5115
        %v5117 = vmul.f32 %v5072, %v5115
        %v5118 = vmul.f32 %v5075, %v5115
        %v5119 = vmul.f32 %v5078, %v5115
        %v5120 = vmul.f32 %v5081, %v5115
        %v5121 = vmul.f32 %v5084, %v5115
        %v5122 = vmul.f32 %v5087, %v5115
        %v5123 = vmul.f32 %v5090, %v5115
        %v5124 = vmul.f32 %v5093, %v5115
        %v5125 = vmul.f32 %v5096, %v5115
        %v5126 = vmul.f32 %v5099, %v5115
        %v5127 = vmul.f32 %v5102, %v5115
        %v5128 = vmul.f32 %v5105, %v5115
        %v5129 = vmul.f32 %v5108, %v5115
        %v5130 = vmul.f32 %v5111, %v5115
        %v5131 = vmul.f32 %v5114, %v5115
        %v5132 = vsub.f32 %v5035, %v5116
        %v5133 = vsub.f32 %v5036, %v5116
        %v5134 = vsub.f32 %v5037, %v5117
        %v5135 = vsub.f32 %v5038, %v5117
        %v5136 = vsub.f32 %v5039, %v5118
        %v5137 = vsub.f32 %v5040, %v5118
        %v5138 = vsub.f32 %v5041, %v5119
        %v5139 = vsub.f32 %v5042, %v5119
        %v5140 = vsub.f32 %v5043, %v5120
        %v5141 = vsub.f32 %v5044, %v5120
        %v5142 = vsub.f32 %v5045, %v5121
        %v5143 = vsub.f32 %v5046, %v5121
        %v5144 = vsub.f32 %v5047, %v5122
        %v5145 = vsub.f32 %v5048, %v5122
        %v5146 = vsub.f32 %v5049, %v5123
        %v5147 = vsub.f32 %v5050, %v5123
        %v5148 = vsub.f32 %v5051, %v5124
        %v5149 = vsub.f32 %v5052, %v5124
        %v5150 = vsub.f32 %v5053, %v5125
        %v5151 = vsub.f32 %v5054, %v5125
        %v5152 = vsub.f32 %v5055, %v5126
        %v5153 = vsub.f32 %v5056, %v5126
        %v5154 = vsub.f32 %v5057, %v5127
        %v5155 = vsub.f32 %v5058, %v5127
        %v5156 = vsub.f32 %v5059, %v5128
        %v5157 = vsub.f32 %v5060, %v5128
        %v5158 = vsub.f32 %v5061, %v5129
        %v5159 = vsub.f32 %v5062, %v5129
        %v5160 = vsub.f32 %v5063, %v5130
        %v5161 = vsub.f32 %v5064, %v5130
        %v5162 = vsub.f32 %v5065, %v5131
        %v5163 = vsub.f32 %v5066, %v5131
        %v5164 = vmul.f32 %v5132, %v5132
        %v5165 = vmul.f32 %v5133, %v5133
        %v5166 = vmul.f32 %v5134, %v5134
        %v5167 = vmul.f32 %v5135, %v5135
        %v5168 = vmul.f32 %v5136, %v5136
        %v5169 = vmul.f32 %v5137, %v5137
        %v5170 = vmul.f32 %v5138, %v5138
        %v5171 = vmul.f32 %v5139, %v5139
        %v5172 = vmul.f32 %v5140, %v5140
        %v5173 = vmul.f32 %v5141, %v5141
        %v5174 = vmul.f32 %v5142, %v5142
        %v5175 = vmul.f32 %v5143, %v5143
        %v5176 = vmul.f32 %v5144, %v5144
        %v5177 = vmul.f32 %v5145, %v5145
        %v5178 = vmul.f32 %v5146, %v5146
        %v5179 = vmul.f32 %v5147, %v5147
        %v5180 = vmul.f32 %v5148, %v5148
        %v5181 = vmul.f32 %v5149, %v5149
        %v5182 = vmul.f32 %v5150, %v5150
        %v5183 = vmul.f32 %v5151, %v5151
        %v5184 = vmul.f32 %v5152, %v5152
        %v5185 = vmul.f32 %v5153, %v5153
        %v5186 = vmul.f32 %v5154, %v5154
        %v5187 = vmul.f32 %v5155, %v5155
        %v5188 = vmul.f32 %v5156, %v5156
        %v5189 = vmul.f32 %v5157, %v5157
        %v5190 = vmul.f32 %v5158, %v5158
        %v5191 = vmul.f32 %v5159, %v5159
        %v5192 = vmul.f32 %v5160, %v5160
        %v5193 = vmul.f32 %v5161, %v5161
        %v5194 = vmul.f32 %v5162, %v5162
        %v5195 = vmul.f32 %v5163, %v5163
        %v5196 = vadd.f32 %v5164, %v5165
        %5197 = vadd.xlane.f32.xlu0 %v5196
        %v5198 = vpop.xlane.xlu0 %5197
        %v5199 = vadd.f32 %v5166, %v5167
        %5200 = vadd.xlane.f32.xlu0 %v5199
        %v5201 = vpop.xlane.xlu0 %5200
        %v5202 = vadd.f32 %v5168, %v5169
        %5203 = vadd.xlane.f32.xlu0 %v5202
        %v5204 = vpop.xlane.xlu0 %5203
        %v5205 = vadd.f32 %v5170, %v5171
        %5206 = vadd.xlane.f32.xlu0 %v5205
        %v5207 = vpop.xlane.xlu0 %5206
        %v5208 = vadd.f32 %v5172, %v5173
        %5209 = vadd.xlane.f32.xlu0 %v5208
        %v5210 = vpop.xlane.xlu0 %5209
        %v5211 = vadd.f32 %v5174, %v5175
        %5212 = vadd.xlane.f32.xlu0 %v5211
        %v5213 = vpop.xlane.xlu0 %5212
        %v5214 = vadd.f32 %v5176, %v5177
        %5215 = vadd.xlane.f32.xlu0 %v5214
        %v5216 = vpop.xlane.xlu0 %5215
        %v5217 = vadd.f32 %v5178, %v5179
        %5218 = vadd.xlane.f32.xlu0 %v5217
        %v5219 = vpop.xlane.xlu0 %5218
        %v5220 = vadd.f32 %v5180, %v5181
        %5221 = vadd.xlane.f32.xlu0 %v5220
        %v5222 = vpop.xlane.xlu0 %5221
        %v5223 = vadd.f32 %v5182, %v5183
        %5224 = vadd.xlane.f32.xlu0 %v5223
        %v5225 = vpop.xlane.xlu0 %5224
        %v5226 = vadd.f32 %v5184, %v5185
        %5227 = vadd.xlane.f32.xlu0 %v5226
        %v5228 = vpop.xlane.xlu0 %5227
        %v5229 = vadd.f32 %v5186, %v5187
        %5230 = vadd.xlane.f32.xlu0 %v5229
        %v5231 = vpop.xlane.xlu0 %5230
        %v5232 = vadd.f32 %v5188, %v5189
        %5233 = vadd.xlane.f32.xlu0 %v5232
        %v5234 = vpop.xlane.xlu0 %5233
        %v5235 = vadd.f32 %v5190, %v5191
        %5236 = vadd.xlane.f32.xlu0 %v5235
        %v5237 = vpop.xlane.xlu0 %5236
        %v5238 = vadd.f32 %v5192, %v5193
        %5239 = vadd.xlane.f32.xlu0 %v5238
        %v5240 = vpop.xlane.xlu0 %5239
        %v5241 = vadd.f32 %v5194, %v5195
        %5242 = vadd.xlane.f32.xlu0 %v5241
        %v5243 = vpop.xlane.xlu0 %5242
        %v5244 = vmul.f32 %v5198, %v5115
        %v5245 = vmul.f32 %v5201, %v5115
        %v5246 = vmul.f32 %v5204, %v5115
        %v5247 = vmul.f32 %v5207, %v5115
        %v5248 = vmul.f32 %v5210, %v5115
        %v5249 = vmul.f32 %v5213, %v5115
        %v5250 = vmul.f32 %v5216, %v5115
        %v5251 = vmul.f32 %v5219, %v5115
        %v5252 = vmul.f32 %v5222, %v5115
        %v5253 = vmul.f32 %v5225, %v5115
        %v5254 = vmul.f32 %v5228, %v5115
        %v5255 = vmul.f32 %v5231, %v5115
        %v5256 = vmul.f32 %v5234, %v5115
        %v5257 = vmul.f32 %v5237, %v5115
        %v5258 = vmul.f32 %v5240, %v5115
        %v5259 = vmul.f32 %v5243, %v5115
        %v5260 = vadd.f32 %v5244, 1e-05
        %v5261 = vadd.f32 %v5245, 1e-05
        %v5262 = vadd.f32 %v5246, 1e-05
        %v5263 = vadd.f32 %v5247, 1e-05
        %v5264 = vadd.f32 %v5248, 1e-05
        %v5265 = vadd.f32 %v5249, 1e-05
        %v5266 = vadd.f32 %v5250, 1e-05
        %v5267 = vadd.f32 %v5251, 1e-05
        %v5268 = vadd.f32 %v5252, 1e-05
        %v5269 = vadd.f32 %v5253, 1e-05
        %v5270 = vadd.f32 %v5254, 1e-05
        %v5271 = vadd.f32 %v5255, 1e-05
        %v5272 = vadd.f32 %v5256, 1e-05
        %v5273 = vadd.f32 %v5257, 1e-05
        %v5274 = vadd.f32 %v5258, 1e-05
        %v5275 = vadd.f32 %v5259, 1e-05
        %v5276 = vrsqrt.pop %v5260
        %v5277 = vrsqrt.pop %v5261
        %v5278 = vrsqrt.pop %v5262
        %v5279 = vrsqrt.pop %v5263
        %v5280 = vrsqrt.pop %v5264
        %v5281 = vrsqrt.pop %v5265
        %v5282 = vrsqrt.pop %v5266
        %v5283 = vrsqrt.pop %v5267
        %v5284 = vrsqrt.pop %v5268
        %v5285 = vrsqrt.pop %v5269
        %v5286 = vrsqrt.pop %v5270
        %v5287 = vrsqrt.pop %v5271
        %v5288 = vrsqrt.pop %v5272
        %v5289 = vrsqrt.pop %v5273
        %v5290 = vrsqrt.pop %v5274
        %v5291 = vrsqrt.pop %v5275
        %v5292 = vmul.f32 %v5132, %v5276
        %v5293 = vmul.f32 %v5133, %v5276
        %v5294 = vmul.f32 %v5134, %v5277
        %v5295 = vmul.f32 %v5135, %v5277
        %v5296 = vmul.f32 %v5136, %v5278
        %v5297 = vmul.f32 %v5137, %v5278
        %v5298 = vmul.f32 %v5138, %v5279
        %v5299 = vmul.f32 %v5139, %v5279
        %v5300 = vmul.f32 %v5140, %v5280
        %v5301 = vmul.f32 %v5141, %v5280
        %v5302 = vmul.f32 %v5142, %v5281
        %v5303 = vmul.f32 %v5143, %v5281
        %v5304 = vmul.f32 %v5144, %v5282
        %v5305 = vmul.f32 %v5145, %v5282
        %v5306 = vmul.f32 %v5146, %v5283
        %v5307 = vmul.f32 %v5147, %v5283
        %v5308 = vmul.f32 %v5148, %v5284
        %v5309 = vmul.f32 %v5149, %v5284
        %v5310 = vmul.f32 %v5150, %v5285
        %v5311 = vmul.f32 %v5151, %v5285
        %v5312 = vmul.f32 %v5152, %v5286
        %v5313 = vmul.f32 %v5153, %v5286
        %v5314 = vmul.f32 %v5154, %v5287
        %v5315 = vmul.f32 %v5155, %v5287
        %v5316 = vmul.f32 %v5156, %v5288
        %v5317 = vmul.f32 %v5157, %v5288
        %v5318 = vmul.f32 %v5158, %v5289
        %v5319 = vmul.f32 %v5159, %v5289
        %v5320 = vmul.f32 %v5160, %v5290
        %v5321 = vmul.f32 %v5161, %v5290
        %v5322 = vmul.f32 %v5162, %v5291
        %v5323 = vmul.f32 %v5163, %v5291
        %v5324 = vlaneseq
        %v5325 = vshrl.u32 %v5324, 7
        %v5326 = vsub.s32 6, %v5325
        %v5327 = vrot.slane %v568, %v5326
        %v5328 = vlaneseq
        %v5329 = vshrl.u32 %v5328, 7
        %v5330 = vsub.s32 6, %v5329
        %v5331 = vrot.slane %v569, %v5330
        %v5332 = vmul.f32 %v5292, %v5327
        %v5333 = vmul.f32 %v5293, %v5331
        %v5334 = vmul.f32 %v5294, %v5327
        %v5335 = vmul.f32 %v5295, %v5331
        %v5336 = vmul.f32 %v5296, %v5327
        %v5337 = vmul.f32 %v5297, %v5331
        %v5338 = vmul.f32 %v5298, %v5327
        %v5339 = vmul.f32 %v5299, %v5331
        %v5340 = vmul.f32 %v5300, %v5327
        %v5341 = vmul.f32 %v5301, %v5331
        %v5342 = vmul.f32 %v5302, %v5327
        %v5343 = vmul.f32 %v5303, %v5331
        %v5344 = vmul.f32 %v5304, %v5327
        %v5345 = vmul.f32 %v5305, %v5331
        %v5346 = vmul.f32 %v5306, %v5327
        %v5347 = vmul.f32 %v5307, %v5331
        %v5348 = vmul.f32 %v5308, %v5327
        %v5349 = vmul.f32 %v5309, %v5331
        %v5350 = vmul.f32 %v5310, %v5327
        %v5351 = vmul.f32 %v5311, %v5331
        %v5352 = vmul.f32 %v5312, %v5327
        %v5353 = vmul.f32 %v5313, %v5331
        %v5354 = vmul.f32 %v5314, %v5327
        %v5355 = vmul.f32 %v5315, %v5331
        %v5356 = vmul.f32 %v5316, %v5327
        %v5357 = vmul.f32 %v5317, %v5331
        %v5358 = vmul.f32 %v5318, %v5327
        %v5359 = vmul.f32 %v5319, %v5331
        %v5360 = vmul.f32 %v5320, %v5327
        %v5361 = vmul.f32 %v5321, %v5331
        %v5362 = vmul.f32 %v5322, %v5327
        %v5363 = vmul.f32 %v5323, %v5331
        %v5364 = vlaneseq
        %v5365 = vshrl.u32 %v5364, 7
        %v5366 = vsub.s32 7, %v5365
        %v5367 = vrot.slane %v568, %v5366
        %v5368 = vlaneseq
        %v5369 = vshrl.u32 %v5368, 7
        %v5370 = vsub.s32 7, %v5369
        %v5371 = vrot.slane %v569, %v5370
        %v5372 = vadd.f32 %v5332, %v5367
        %v5373 = vadd.f32 %v5333, %v5371
        %v5374 = vadd.f32 %v5334, %v5367
        %v5375 = vadd.f32 %v5335, %v5371
        %v5376 = vadd.f32 %v5336, %v5367
        %v5377 = vadd.f32 %v5337, %v5371
        %v5378 = vadd.f32 %v5338, %v5367
        %v5379 = vadd.f32 %v5339, %v5371
        %v5380 = vadd.f32 %v5340, %v5367
        %v5381 = vadd.f32 %v5341, %v5371
        %v5382 = vadd.f32 %v5342, %v5367
        %v5383 = vadd.f32 %v5343, %v5371
        %v5384 = vadd.f32 %v5344, %v5367
        %v5385 = vadd.f32 %v5345, %v5371
        %v5386 = vadd.f32 %v5346, %v5367
        %v5387 = vadd.f32 %v5347, %v5371
        %v5388 = vadd.f32 %v5348, %v5367
        %v5389 = vadd.f32 %v5349, %v5371
        %v5390 = vadd.f32 %v5350, %v5367
        %v5391 = vadd.f32 %v5351, %v5371
        %v5392 = vadd.f32 %v5352, %v5367
        %v5393 = vadd.f32 %v5353, %v5371
        %v5394 = vadd.f32 %v5354, %v5367
        %v5395 = vadd.f32 %v5355, %v5371
        %v5396 = vadd.f32 %v5356, %v5367
        %v5397 = vadd.f32 %v5357, %v5371
        %v5398 = vadd.f32 %v5358, %v5367
        %v5399 = vadd.f32 %v5359, %v5371
        %v5400 = vadd.f32 %v5360, %v5367
        %v5401 = vadd.f32 %v5361, %v5371
        %v5402 = vadd.f32 %v5362, %v5367
        %v5403 = vadd.f32 %v5363, %v5371
        %v5404 = vld [vmem:[%s465] sm:$0xf]
        %v5405 = vld [vmem:[%s465 + $0x4] sm:$0xf]
        %v5406 = vld [vmem:[%s465 + $0x8] sm:$0xf]
        %v5407 = vld [vmem:[%s465 + $0xc] sm:$0xf]
        %v5408 = vld [vmem:[%s465 + $0x10] sm:$0xf]
        %v5409 = vld [vmem:[%s465 + $0x14] sm:$0xf]
        %v5410 = vld [vmem:[%s465 + $0x18] sm:$0xf]
        %v5411 = vld [vmem:[%s465 + $0x1c] sm:$0xf]
        %v5412 = vld [vmem:[%s465 + $0x20] sm:$0xf]
        %v5413 = vld [vmem:[%s465 + $0x24] sm:$0xf]
        %v5414 = vld [vmem:[%s465 + $0x28] sm:$0xf]
        %v5415 = vld [vmem:[%s465 + $0x2c] sm:$0xf]
        %v5416 = vld [vmem:[%s465 + $0x30] sm:$0xf]
        %v5417 = vld [vmem:[%s465 + $0x34] sm:$0xf]
        %v5418 = vld [vmem:[%s465 + $0x38] sm:$0xf]
        %v5419 = vld [vmem:[%s465 + $0x3c] sm:$0xf]
        %v5420 = vld [vmem:[%s465 + $0x40] sm:$0xf]
        %v5421 = vld [vmem:[%s465 + $0x44] sm:$0xf]
        %v5422 = vld [vmem:[%s465 + $0x48] sm:$0xf]
        %v5423 = vld [vmem:[%s465 + $0x4c] sm:$0xf]
        %v5424 = vld [vmem:[%s465 + $0x50] sm:$0xf]
        %v5425 = vld [vmem:[%s465 + $0x54] sm:$0xf]
        %v5426 = vld [vmem:[%s465 + $0x58] sm:$0xf]
        %v5427 = vld [vmem:[%s465 + $0x5c] sm:$0xf]
        %v5428 = vld [vmem:[%s465 + $0x60] sm:$0xf]
        %v5429 = vld [vmem:[%s465 + $0x64] sm:$0xf]
        %v5430 = vld [vmem:[%s465 + $0x68] sm:$0xf]
        %v5431 = vld [vmem:[%s465 + $0x6c] sm:$0xf]
        %v5432 = vld [vmem:[%s465 + $0x70] sm:$0xf]
        %v5433 = vld [vmem:[%s465 + $0x74] sm:$0xf]
        %v5434 = vld [vmem:[%s465 + $0x78] sm:$0xf]
        %v5435 = vld [vmem:[%s465 + $0x7c] sm:$0xf]
        %v5436 = vunpack.c.l.bf16 %v5404
        %v5437 = vunpack.c.l.bf16 %v5405
        %v5438 = vunpack.c.l.bf16 %v5406
        %v5439 = vunpack.c.l.bf16 %v5407
        %v5440 = vunpack.c.l.bf16 %v5408
        %v5441 = vunpack.c.l.bf16 %v5409
        %v5442 = vunpack.c.l.bf16 %v5410
        %v5443 = vunpack.c.l.bf16 %v5411
        %v5444 = vunpack.c.l.bf16 %v5412
        %v5445 = vunpack.c.l.bf16 %v5413
        %v5446 = vunpack.c.l.bf16 %v5414
        %v5447 = vunpack.c.l.bf16 %v5415
        %v5448 = vunpack.c.l.bf16 %v5416
        %v5449 = vunpack.c.l.bf16 %v5417
        %v5450 = vunpack.c.l.bf16 %v5418
        %v5451 = vunpack.c.l.bf16 %v5419
        %v5452 = vunpack.c.l.bf16 %v5420
        %v5453 = vunpack.c.l.bf16 %v5421
        %v5454 = vunpack.c.l.bf16 %v5422
        %v5455 = vunpack.c.l.bf16 %v5423
        %v5456 = vunpack.c.l.bf16 %v5424
        %v5457 = vunpack.c.l.bf16 %v5425
        %v5458 = vunpack.c.l.bf16 %v5426
        %v5459 = vunpack.c.l.bf16 %v5427
        %v5460 = vunpack.c.l.bf16 %v5428
        %v5461 = vunpack.c.l.bf16 %v5429
        %v5462 = vunpack.c.l.bf16 %v5430
        %v5463 = vunpack.c.l.bf16 %v5431
        %v5464 = vunpack.c.l.bf16 %v5432
        %v5465 = vunpack.c.l.bf16 %v5433
        %v5466 = vunpack.c.l.bf16 %v5434
        %v5467 = vunpack.c.l.bf16 %v5435
        %5468 = vmatprep.subr.mxu0 0.0
        %5469 = vmatpush1.msra.mxu0 %v5436
        %5470 = vmatprep.subr.mxu0 0.0
        %5471 = vmatpush1.msra.mxu0 %v5437
        %5472 = vmatprep.subr.mxu0 0.0
        %5473 = vmatpush1.msra.mxu0 %v5438
        %5474 = vmatprep.subr.mxu0 0.0
        %5475 = vmatpush1.msra.mxu0 %v5439
        %5476 = vmatprep.subr.mxu0 0.0
        %5477 = vmatpush1.msra.mxu0 %v5440
        %5478 = vmatprep.subr.mxu0 0.0
        %5479 = vmatpush1.msra.mxu0 %v5441
        %5480 = vmatprep.subr.mxu0 0.0
        %5481 = vmatpush1.msra.mxu0 %v5442
        %5482 = vmatprep.subr.mxu0 0.0
        %5483 = vmatpush1.msra.mxu0 %v5443
        %5484 = vmatprep.subr.mxu0 0.0
        %5485 = vmatpush1.msra.mxu0 %v5444
        %5486 = vmatprep.subr.mxu0 0.0
        %5487 = vmatpush1.msra.mxu0 %v5445
        %5488 = vmatprep.subr.mxu0 0.0
        %5489 = vmatpush1.msra.mxu0 %v5446
        %5490 = vmatprep.subr.mxu0 0.0
        %5491 = vmatpush1.msra.mxu0 %v5447
        %5492 = vmatprep.subr.mxu0 0.0
        %5493 = vmatpush1.msra.mxu0 %v5448
        %5494 = vmatprep.subr.mxu0 0.0
        %5495 = vmatpush1.msra.mxu0 %v5449
        %5496 = vmatprep.subr.mxu0 0.0
        %5497 = vmatpush1.msra.mxu0 %v5450
        %5498 = vmatprep.subr.mxu0 0.0
        %5499 = vmatpush1.msra.mxu0 %v5451
        %5500 = vmatprep.subr.mxu0 0.0
        %5501 = vmatpush1.msra.mxu0 %v5452
        %5502 = vmatprep.subr.mxu0 0.0
        %5503 = vmatpush1.msra.mxu0 %v5453
        %5504 = vmatprep.subr.mxu0 0.0
        %5505 = vmatpush1.msra.mxu0 %v5454
        %5506 = vmatprep.subr.mxu0 0.0
        %5507 = vmatpush1.msra.mxu0 %v5455
        %5508 = vmatprep.subr.mxu0 0.0
        %5509 = vmatpush1.msra.mxu0 %v5456
        %5510 = vmatprep.subr.mxu0 0.0
        %5511 = vmatpush1.msra.mxu0 %v5457
        %5512 = vmatprep.subr.mxu0 0.0
        %5513 = vmatpush1.msra.mxu0 %v5458
        %5514 = vmatprep.subr.mxu0 0.0
        %5515 = vmatpush1.msra.mxu0 %v5459
        %5516 = vmatprep.subr.mxu0 0.0
        %5517 = vmatpush1.msra.mxu0 %v5460
        %5518 = vmatprep.subr.mxu0 0.0
        %5519 = vmatpush1.msra.mxu0 %v5461
        %5520 = vmatprep.subr.mxu0 0.0
        %5521 = vmatpush1.msra.mxu0 %v5462
        %5522 = vmatprep.subr.mxu0 0.0
        %5523 = vmatpush1.msra.mxu0 %v5463
        %5524 = vmatprep.subr.mxu0 0.0
        %5525 = vmatpush1.msra.mxu0 %v5464
        %5526 = vmatprep.subr.mxu0 0.0
        %5527 = vmatpush1.msra.mxu0 %v5465
        %5528 = vmatprep.subr.mxu0 0.0
        %5529 = vmatpush1.msra.mxu0 %v5466
        %5530 = vmatprep.subr.mxu0 0.0
        %5531 = vmatpush1.msra.mxu0 %v5467
        %5532 = vmatprep.mubr.f32.mxu0 %v5373
        %5533 = vmatmul.mubr.f32.gmra.mrb[0].mxu0 %v5372
        %v5534 = vpop.f32.mrb[0].mxu0
        %v5535 = vadd.f32 0.0, %v5534
        %v5536 = vpop.f32.mrb[0].mxu0
        %5537 = vmatprep.mubr.f32.mxu0 %v5375
        %5538 = vmatmul.mubr.f32.gmra.mrb[0].mxu0 %v5374
        %v5539 = vpop.f32.mrb[0].mxu0
        %v5540 = vadd.f32 0.0, %v5539
        %v5541 = vpop.f32.mrb[0].mxu0
        %5542 = vmatprep.mubr.f32.mxu0 %v5377
        %5543 = vmatmul.mubr.f32.gmra.mrb[0].mxu0 %v5376
        %v5544 = vpop.f32.mrb[0].mxu0
        %v5545 = vadd.f32 0.0, %v5544
        %v5546 = vpop.f32.mrb[0].mxu0
        %5547 = vmatprep.mubr.f32.mxu0 %v5379
        %5548 = vmatmul.mubr.f32.gmra.mrb[0].mxu0 %v5378
        %v5549 = vpop.f32.mrb[0].mxu0
        %v5550 = vadd.f32 0.0, %v5549
        %v5551 = vpop.f32.mrb[0].mxu0
        %5552 = vmatprep.mubr.f32.mxu0 %v5381
        %5553 = vmatmul.mubr.f32.gmra.mrb[0].mxu0 %v5380
        %v5554 = vpop.f32.mrb[0].mxu0
        %v5555 = vadd.f32 0.0, %v5554
        %v5556 = vpop.f32.mrb[0].mxu0
        %5557 = vmatprep.mubr.f32.mxu0 %v5383
        %5558 = vmatmul.mubr.f32.gmra.mrb[0].mxu0 %v5382
        %v5559 = vpop.f32.mrb[0].mxu0
        %v5560 = vadd.f32 0.0, %v5559
        %v5561 = vpop.f32.mrb[0].mxu0
        %5562 = vmatprep.mubr.f32.mxu0 %v5385
        %5563 = vmatmul.mubr.f32.gmra.mrb[0].mxu0 %v5384
        %v5564 = vpop.f32.mrb[0].mxu0
        %v5565 = vadd.f32 0.0, %v5564
        %v5566 = vpop.f32.mrb[0].mxu0
        %5567 = vmatprep.mubr.f32.mxu0 %v5387
        %5568 = vmatmul.mubr.f32.gmra.mrb[0].mxu0 %v5386
        %v5569 = vpop.f32.mrb[0].mxu0
        %v5570 = vadd.f32 0.0, %v5569
        %v5571 = vpop.f32.mrb[0].mxu0
        %5572 = vmatprep.mubr.f32.mxu0 %v5389
        %5573 = vmatmul.mubr.f32.gmra.mrb[0].mxu0 %v5388
        %v5574 = vpop.f32.mrb[0].mxu0
        %v5575 = vadd.f32 0.0, %v5574
        %v5576 = vpop.f32.mrb[0].mxu0
        %5577 = vmatprep.mubr.f32.mxu0 %v5391
        %5578 = vmatmul.mubr.f32.gmra.mrb[0].mxu0 %v5390
        %v5579 = vpop.f32.mrb[0].mxu0
        %v5580 = vadd.f32 0.0, %v5579
        %v5581 = vpop.f32.mrb[0].mxu0
        %5582 = vmatprep.mubr.f32.mxu0 %v5393
        %5583 = vmatmul.mubr.f32.gmra.mrb[0].mxu0 %v5392
        %v5584 = vpop.f32.mrb[0].mxu0
        %v5585 = vadd.f32 0.0, %v5584
        %v5586 = vpop.f32.mrb[0].mxu0
        %5587 = vmatprep.mubr.f32.mxu0 %v5395
        %5588 = vmatmul.mubr.f32.gmra.mrb[0].mxu0 %v5394
        %v5589 = vpop.f32.mrb[0].mxu0
        %v5590 = vadd.f32 0.0, %v5589
        %v5591 = vpop.f32.mrb[0].mxu0
        %5592 = vmatprep.mubr.f32.mxu0 %v5397
        %5593 = vmatmul.mubr.f32.gmra.mrb[0].mxu0 %v5396
        %v5594 = vpop.f32.mrb[0].mxu0
        %v5595 = vadd.f32 0.0, %v5594
        %v5596 = vpop.f32.mrb[0].mxu0
        %5597 = vmatprep.mubr.f32.mxu0 %v5399
        %5598 = vmatmul.mubr.f32.gmra.mrb[0].mxu0 %v5398
        %v5599 = vpop.f32.mrb[0].mxu0
        %v5600 = vadd.f32 0.0, %v5599
        %v5601 = vpop.f32.mrb[0].mxu0
        %5602 = vmatprep.mubr.f32.mxu0 %v5401
        %5603 = vmatmul.mubr.f32.gmra.mrb[0].mxu0 %v5400
        %v5604 = vpop.f32.mrb[0].mxu0
        %v5605 = vadd.f32 0.0, %v5604
        %v5606 = vpop.f32.mrb[0].mxu0
        %5607 = vmatprep.mubr.f32.mxu0 %v5403
        %5608 = vmatmul.mubr.f32.gmra.mrb[0].mxu0 %v5402
        %v5609 = vpop.f32.mrb[0].mxu0
        %v5610 = vadd.f32 0.0, %v5609
        %v5611 = vpop.f32.mrb[0].mxu0
        %5612 = vdwg.mxu0
        %v5613 = vadd.f32 %v3762, %v5535
        %v5614 = vadd.f32 %v3763, %v5540
        %v5615 = vadd.f32 %v3764, %v5545
        %v5616 = vadd.f32 %v3765, %v5550
        %v5617 = vadd.f32 %v3766, %v5555
        %v5618 = vadd.f32 %v3767, %v5560
        %v5619 = vadd.f32 %v3768, %v5565
        %v5620 = vadd.f32 %v3769, %v5570
        %v5621 = vadd.f32 %v3770, %v5575
        %v5622 = vadd.f32 %v3771, %v5580
        %v5623 = vadd.f32 %v3772, %v5585
        %v5624 = vadd.f32 %v3773, %v5590
        %v5625 = vadd.f32 %v3774, %v5595
        %v5626 = vadd.f32 %v3775, %v5600
        %v5627 = vadd.f32 %v3776, %v5605
        %v5628 = vadd.f32 %v3777, %v5610
        %5629 = vst [vmem:[#allocation14] sm:$0xff] %v5613
        %5630 = vst [vmem:[#allocation14 + $0x8] sm:$0xff] %v5614
        %5631 = vst [vmem:[#allocation14 + $0x10] sm:$0xff] %v5615
        %5632 = vst [vmem:[#allocation14 + $0x18] sm:$0xff] %v5616
        %5633 = vst [vmem:[#allocation14 + $0x20] sm:$0xff] %v5617
        %5634 = vst [vmem:[#allocation14 + $0x28] sm:$0xff] %v5618
        %5635 = vst [vmem:[#allocation14 + $0x30] sm:$0xff] %v5619
        %5636 = vst [vmem:[#allocation14 + $0x38] sm:$0xff] %v5620
        %5637 = vst [vmem:[#allocation14 + $0x40] sm:$0xff] %v5621
        %5638 = vst [vmem:[#allocation14 + $0x48] sm:$0xff] %v5622
        %5639 = vst [vmem:[#allocation14 + $0x50] sm:$0xff] %v5623
        %5640 = vst [vmem:[#allocation14 + $0x58] sm:$0xff] %v5624
        %5641 = vst [vmem:[#allocation14 + $0x60] sm:$0xff] %v5625
        %5642 = vst [vmem:[#allocation14 + $0x68] sm:$0xff] %v5626
        %5643 = vst [vmem:[#allocation14 + $0x70] sm:$0xff] %v5627
        %5644 = vst [vmem:[#allocation14 + $0x78] sm:$0xff] %v5628
        // Predicated region
        $region81: #{tpu_custom_call.1} parent=47 // pred_check
          %p5645 = pneg %p241
        $region82: #{tpu_custom_call.1} parent=47 // pred_check_branch
          %5647 = sbr.rel (%p5645) target = $region84
        $region83: #{tpu_custom_call.1} parent=47 // pred_region
          %s5649 = ssub.s32 2048, 2048
          %5650 = vsyncadd [#allocation4], %s5649
          %s5651 = smul.addr %s33, 16
          %s5652 = smul.addr %s5651, 128
          %s5653 = scalar_lea.hbm %s7, %s5652
          %s5654 = sshll.u32 [#allocation14], 4
          %s5655 = int_to_ptr.vmem [resolvable:$true] %s5654
          %5660 = dma.vmem_to_hbm [thread:$0]  %s5655, 2048, %s5653, [#allocation4], 128, 128, 8
        $region84: #{tpu_custom_call.1} parent=47 // pred_fallthru
          _
        // Predicated region
        $region85: #{tpu_custom_call.1} parent=47 // pred_check
          %p5661 = pneg %p241
        $region86: #{tpu_custom_call.1} parent=47 // pred_check_branch
          %5663 = sbr.rel (%p5661) target = $region88
        $region87: #{tpu_custom_call.1} parent=47 // pred_region
          %5664 = dma.done [#allocation4], 2048
        $region88: #{tpu_custom_call.1} parent=47 // pred_fallthru
          _
      $region48: #{tpu_custom_call.1} parent=5 // pred_fallthru
        _
      %p5665 = scmp.le.s32.totalorder 2, %s24
      // Predicated region
      $region89: #{tpu_custom_call.1} parent=5 // pred_check
        %p5666 = pneg %p5665
      $region90: #{tpu_custom_call.1} parent=5 // pred_check_branch
        %5668 = sbr.rel (%p5666) target = $region92
      $region91: #{tpu_custom_call.1} parent=5 // pred_region
        %s5669 = ssub.s32 %s24, 2
      $region92: #{tpu_custom_call.1} parent=5 // pred_fallthru
        _
    $region6: #{tpu_custom_call.1} parent=1 // loop_footer
      %s28 = sadd.s32 1, %s24
    $region7: #{tpu_custom_call.1} parent=1 // loop_footer_branch
      %23 = sbr.rel target = $region3
    $region8: #{tpu_custom_call.1} parent=1 // loop_exit
      _
    %5670 = vsyncpa [#allocation3], 1
    %s5671 = scalar_lea.sflag [#allocation3], 1
    %5672 = vsyncpa %s5671, 1
    %5673 = vsyncpa [#allocation6], 1
    %s5674 = scalar_lea.sflag [#allocation6], 1
    %5675 = vsyncpa %s5674, 1
    %5676 = vsyncpa [#allocation9], 1
    %s5677 = scalar_lea.sflag [#allocation9], 1
    %5678 = vsyncpa %s5677, 1
    %5679 = vsyncpa [#allocation12], 1
    %s5680 = scalar_lea.sflag [#allocation12], 1
    %5681 = vsyncpa %s5680, 1
    %5682 = vsyncpa [#allocation4], 1
    %s5683 = scalar_lea.sflag [#allocation4], 1
    %5684 = vsyncpa %s5683, 1

</llo_original>
